<compile_context>
chip_gen: v6e
topology: v6e:2x2x1
jax: 0.10.0
libtpu: 0.0.40
codegen_flags: <defaults>
</compile_context>

<pallas_src>
import functools

import jax
import jax.numpy as jnp
from jax.experimental import pallas as pl
from jax.experimental.pallas import tpu as pltpu


LANE = 128


def _round_up(x, m):
    return ((x + m - 1) // m) * m


def _model_kernel(num_layers, use_l2, l2_scale, *refs):
    # refs layout:
    #   x_ref,
    #   (w_i, b_i) for i in range(num_layers),    feature MLP (w bf16, b f32)
    #   if use_l2:  vis_w (bf16, lane-padded), vis_b (f32, lane-padded),
    #               cls_w (bf16, lane-padded both ways)
    #   else:       w_tail (bf16, 784 x N_pad), b_tail (f32, 1 x N_pad)
    #   out_ref
    x_ref = refs[0]
    idx = 1

    # Single cast at entry; hidden activation stays bf16 between layers.
    h = x_ref[...].astype(jnp.bfloat16)

    # ---- feature MLP: Linear + ReLU, unrolled at trace time ----
    for _ in range(num_layers):
        w_ref, b_ref = refs[idx], refs[idx + 1]
        idx += 2
        acc = jnp.dot(h, w_ref[...], preferred_element_type=jnp.float32)
        h = jnp.maximum(acc + b_ref[...], 0.0).astype(jnp.bfloat16)

    if use_l2:
        vis_w_ref = refs[idx]
        vis_b_ref = refs[idx + 1]
        cls_w_ref = refs[idx + 2]
        out_ref = refs[idx + 3]

        # visualized_linear: 784 -> 2 (lane-padded to 128, padded cols == 0)
        vis = jnp.dot(h, vis_w_ref[...], preferred_element_type=jnp.float32)
        vis = vis + vis_b_ref[...]

        # L2 renorm; tiny eps guards an all-zero row (padded cols are exactly
        # zero, so the norm matches the unpadded 2-vector norm).
        sumsq = jnp.sum(vis * vis, axis=1, keepdims=True)
        inv = jax.lax.rsqrt(jnp.maximum(sumsq, 1e-24))
        vis = (vis * (inv * l2_scale)).astype(jnp.bfloat16)

        # classifier: 2 -> num_class (lane-padded), no bias, bf16 MXU push
        out = jnp.dot(vis, cls_w_ref[...], preferred_element_type=jnp.float32)
    else:
        # Fused tail: (visualized_linear @ classifier) as one 784 -> N_pad
        # matmul plus fused bias (built once in prepare_params).
        w_tail_ref = refs[idx]
        b_tail_ref = refs[idx + 1]
        out_ref = refs[idx + 2]
        out = jnp.dot(h, w_tail_ref[...], preferred_element_type=jnp.float32)
        out = out + b_tail_ref[...]

    out_ref[...] = out.astype(out_ref.dtype)


def prepare_params(params, *, num_layers, num_class, use_l2):
    """One-time weight preparation (bf16 cast, lane padding, tail fusion).

    Hoisted out of model_forward so the per-call graph only streams x.
    """
    prepared = {"layers": [], "num_class": num_class}
    for li in range(num_layers):
        w = params[f"feat_w{li}"].astype(jnp.bfloat16)            # (in, out)
        b = params[f"feat_b{li}"].astype(jnp.float32)[None, :]    # (1, out)
        prepared["layers"].append((w, b))

    hidden = params["vis_w"].shape[0]                              # 28*28
    N_pad = _round_up(max(num_class, 1), LANE)
    prepared["N_pad"] = N_pad
    prepared["hidden"] = hidden
    prepared["use_l2"] = use_l2

    if use_l2:
        vis_w = jnp.zeros((hidden, LANE), jnp.bfloat16)
        vis_w = vis_w.at[:, :2].set(params["vis_w"].astype(jnp.bfloat16))
        vis_b = jnp.zeros((1, LANE), jnp.float32)
        vis_b = vis_b.at[0, :2].set(params["vis_b"].astype(jnp.float32))
        cls_w = jnp.zeros((LANE, N_pad), jnp.bfloat16)
        cls_w = cls_w.at[:2, :num_class].set(
            params["cls_w"].astype(jnp.bfloat16))
        prepared["tail"] = (vis_w, vis_b, cls_w)
    else:
        # Fold vis + classifier: y = (h @ vis_w + vis_b) @ cls_w
        #                          = h @ (vis_w @ cls_w) + (vis_b @ cls_w)
        w_tail = (params["vis_w"].astype(jnp.float32)
                  @ params["cls_w"].astype(jnp.float32))           # (784, C)
        b_tail = (params["vis_b"].astype(jnp.float32)
                  @ params["cls_w"].astype(jnp.float32))           # (C,)
        wt = jnp.zeros((hidden, N_pad), jnp.bfloat16)
        wt = wt.at[:, :num_class].set(w_tail.astype(jnp.bfloat16))
        bt = jnp.zeros((1, N_pad), jnp.float32)
        bt = bt.at[0, :num_class].set(b_tail)
        prepared["tail"] = (wt, bt)
    return prepared


def model_forward(x, prepared, *, num_layers, use_l2, l2_scale, tile_b=512):
    """x: (B, input_size) f32 or bf16. prepared: output of prepare_params."""
    B, D_in = x.shape
    num_class = prepared["num_class"]
    N_pad = prepared["N_pad"]
    hidden = prepared["hidden"]

    # ---- batch tiling ----
    MIN_TILE = 8
    b_rounded = _round_up(B, MIN_TILE)
    TILE_B = min(tile_b, b_rounded)
    # v7x has 2 TensorCores; make sure the "parallel" batch axis has >= 2 grid
    # steps when each half still keeps >= 256 rows (near-roofline tile size).
    if b_rounded <= TILE_B and b_rounded >= 2 * 256:
        TILE_B = _round_up((b_rounded + 1) // 2, MIN_TILE)
    B_pad = _round_up(B, TILE_B)
    if B_pad != B:
        x = jnp.pad(x, ((0, B_pad - B), (0, 0)))

    const_map = lambda i: (0, 0)
    tile_map = lambda i: (i, 0)

    args = [x]
    in_specs = [pl.BlockSpec((TILE_B, D_in), tile_map)]
    for (w, b) in prepared["layers"]:
        args += [w, b]
        in_specs += [pl.BlockSpec(w.shape, const_map),
                     pl.BlockSpec(b.shape, const_map)]
    for t in prepared["tail"]:
        args.append(t)
        in_specs.append(pl.BlockSpec(t.shape, const_map))

    # ---- VMEM budget: resident weights + double-buffered activation tiles ----
    weight_bytes = sum(int(a.size) * a.dtype.itemsize for a in args[1:])
    act_bytes = (2 * TILE_B * D_in * x.dtype.itemsize   # double-buffered x
                 + 2 * TILE_B * N_pad * 4               # double-buffered out
                 + 4 * TILE_B * hidden * 4)             # in-kernel live acts
    try:
        vmem_cap = int(pltpu.get_tpu_info().vmem_capacity_bytes)
    except Exception:
        vmem_cap = 64 << 20                             # conservative (v7x)
    vmem_limit = int(min(max(2 * (weight_bytes + act_bytes), 32 << 20),
                         (vmem_cap * 3) // 4))

    kernel = functools.partial(_model_kernel, num_layers, use_l2,
                               float(l2_scale))
    out_pad = pl.pallas_call(
        kernel,
        out_shape=jax.ShapeDtypeStruct((B_pad, N_pad), jnp.float32),
        grid=(B_pad // TILE_B,),
        in_specs=in_specs,
        out_specs=pl.BlockSpec((TILE_B, N_pad), tile_map),
        compiler_params=pltpu.CompilerParams(
            dimension_semantics=("parallel",),
            vmem_limit_bytes=vmem_limit,
        ),
    )(*args)
    return out_pad[:B, :num_class]


def init_params(key, num_layers, input_size, num_class, hidden=28 * 28):
    """Deterministic synthetic parameter init (weights stored as (in, out))."""
    params = {}
    d_in = input_size
    for i in range(num_layers):
        key, k1, k2 = jax.random.split(key, 3)
        params[f"feat_w{i}"] = (
            jax.random.normal(k1, (d_in, hidden), jnp.float32) * 0.02
        )
        params[f"feat_b{i}"] = jax.random.normal(k2, (hidden,), jnp.float32) * 0.01
        d_in = hidden
    key, k1, k2, k3 = jax.random.split(key, 4)
    params["vis_w"] = jax.random.normal(k1, (hidden, 2), jnp.float32) * 0.02
    params["vis_b"] = jax.random.normal(k2, (2,), jnp.float32) * 0.01
    params["cls_w"] = jax.random.normal(k3, (2, num_class), jnp.float32) * 0.1
    return params


def reference_forward(x, params, *, num_layers, use_l2, l2_scale):
    h = x
    for i in range(num_layers):
        h = jnp.maximum(h @ params[f"feat_w{i}"] + params[f"feat_b{i}"], 0.0)
    vis = h @ params["vis_w"] + params["vis_b"]
    if use_l2:
        vis = vis / jnp.sqrt(jnp.sum(vis**2, axis=1, keepdims=True)) * l2_scale
    return vis @ params["cls_w"]


if __name__ == "__main__":
    num_layers = 2
    input_size = 28 * 28
    num_class = 10
    l2_scale = 25.0
    B = 8

    key = jax.random.PRNGKey(0)
    key, kx = jax.random.split(key)
    x = jax.random.normal(kx, (B, input_size), jnp.float32)
    params = init_params(key, num_layers, input_size, num_class)

    ok = True
    for use_l2 in (True, False):
        prepared = prepare_params(
            params, num_layers=num_layers, num_class=num_class, use_l2=use_l2
        )
        out = model_forward(
            x, prepared,
            num_layers=num_layers, use_l2=use_l2, l2_scale=l2_scale,
        )
        out = jax.block_until_ready(out)
        ref = reference_forward(
            x, params, num_layers=num_layers, use_l2=use_l2, l2_scale=l2_scale
        )
        assert out.shape == (B, num_class)
        # bf16 matmul inputs (f32 accumulation) -> loosened tolerance vs f32 ref.
        ok &= bool(jnp.allclose(out, ref, atol=5e-2, rtol=5e-2))

    assert ok
    print("KERNEL_OK")
</pallas_src>

<mosaic_0001>
module attributes {stable_mosaic.version = 11 : i64} {
  func.func @_model_kernel(%arg0: i32, %arg1: memref<8x784xf32, #tpu.memory_space<vmem>>, %arg2: memref<784x784xbf16, #tpu.memory_space<vmem>>, %arg3: memref<1x784xf32, #tpu.memory_space<vmem>>, %arg4: memref<784x784xbf16, #tpu.memory_space<vmem>>, %arg5: memref<1x784xf32, #tpu.memory_space<vmem>>, %arg6: memref<784x128xbf16, #tpu.memory_space<vmem>>, %arg7: memref<1x128xf32, #tpu.memory_space<vmem>>, %arg8: memref<128x128xbf16, #tpu.memory_space<vmem>>, %arg9: memref<8x128xf32, #tpu.memory_space<vmem>>) attributes {dimension_semantics = [#tpu.dimension_semantics<parallel>], iteration_bounds = array<i64: 1>, scalar_prefetch = 0 : i64, scratch_operands = 0 : i64, tpu.core_type = #tpu.core_type<tc>, window_params = [{transform_indices = @transform_0, window_bounds = array<i64: 8, 784>}, {pipeline_mode = #tpu.pipeline_mode<synchronous>, transform_indices = @transform_1, window_bounds = array<i64: 784, 784>}, {pipeline_mode = #tpu.pipeline_mode<synchronous>, transform_indices = @transform_2, window_bounds = array<i64: 1, 784>}, {pipeline_mode = #tpu.pipeline_mode<synchronous>, transform_indices = @transform_3, window_bounds = array<i64: 784, 784>}, {pipeline_mode = #tpu.pipeline_mode<synchronous>, transform_indices = @transform_4, window_bounds = array<i64: 1, 784>}, {pipeline_mode = #tpu.pipeline_mode<synchronous>, transform_indices = @transform_5, window_bounds = array<i64: 784, 128>}, {pipeline_mode = #tpu.pipeline_mode<synchronous>, transform_indices = @transform_6, window_bounds = array<i64: 1, 128>}, {pipeline_mode = #tpu.pipeline_mode<synchronous>, transform_indices = @transform_7, window_bounds = array<i64: 128, 128>}, {transform_indices = @transform_8, window_bounds = array<i64: 8, 128>}]} {
    %c0 = arith.constant 0 : index
    %c0_0 = arith.constant 0 : index
    %0 = vector.load %arg1[%c0, %c0_0] : memref<8x784xf32, #tpu.memory_space<vmem>>, vector<8x784xf32>
    %1 = arith.truncf %0 : vector<8x784xf32> to vector<8x784xbf16>
    %c0_1 = arith.constant 0 : index
    %c0_2 = arith.constant 0 : index
    %2 = vector.load %arg2[%c0_1, %c0_2] : memref<784x784xbf16, #tpu.memory_space<vmem>>, vector<784x784xbf16>
    %cst = arith.constant dense<0.000000e+00> : vector<8x784xf32>
    %3 = tpu.matmul %1, %2, %cst {dimension_numbers = #tpu.dot_dimension_numbers<[1], [0], [0], [1], [0, 0, 1, 1], [], []>} : vector<8x784xbf16>, vector<784x784xbf16>, vector<8x784xf32> -> vector<8x784xf32>
    %c0_3 = arith.constant 0 : index
    %c0_4 = arith.constant 0 : index
    %4 = vector.load %arg3[%c0_3, %c0_4] : memref<1x784xf32, #tpu.memory_space<vmem>>, vector<1x784xf32>
    %5 = vector.broadcast %4 : vector<1x784xf32> to vector<8x784xf32>
    %6 = arith.addf %3, %5 : vector<8x784xf32>
    %cst_5 = arith.constant 0.000000e+00 : f32
    %7 = vector.broadcast %cst_5 : f32 to vector<8x784xf32>
    %8 = arith.maximumf %6, %7 : vector<8x784xf32>
    %9 = arith.truncf %8 : vector<8x784xf32> to vector<8x784xbf16>
    %c0_6 = arith.constant 0 : index
    %c0_7 = arith.constant 0 : index
    %10 = vector.load %arg4[%c0_6, %c0_7] : memref<784x784xbf16, #tpu.memory_space<vmem>>, vector<784x784xbf16>
    %cst_8 = arith.constant dense<0.000000e+00> : vector<8x784xf32>
    %11 = tpu.matmul %9, %10, %cst_8 {dimension_numbers = #tpu.dot_dimension_numbers<[1], [0], [0], [1], [0, 0, 1, 1], [], []>} : vector<8x784xbf16>, vector<784x784xbf16>, vector<8x784xf32> -> vector<8x784xf32>
    %c0_9 = arith.constant 0 : index
    %c0_10 = arith.constant 0 : index
    %12 = vector.load %arg5[%c0_9, %c0_10] : memref<1x784xf32, #tpu.memory_space<vmem>>, vector<1x784xf32>
    %13 = vector.broadcast %12 : vector<1x784xf32> to vector<8x784xf32>
    %14 = arith.addf %11, %13 : vector<8x784xf32>
    %cst_11 = arith.constant 0.000000e+00 : f32
    %15 = vector.broadcast %cst_11 : f32 to vector<8x784xf32>
    %16 = arith.maximumf %14, %15 : vector<8x784xf32>
    %17 = arith.truncf %16 : vector<8x784xf32> to vector<8x784xbf16>
    %c0_12 = arith.constant 0 : index
    %c0_13 = arith.constant 0 : index
    %18 = vector.load %arg6[%c0_12, %c0_13] : memref<784x128xbf16, #tpu.memory_space<vmem>>, vector<784x128xbf16>
    %cst_14 = arith.constant dense<0.000000e+00> : vector<8x128xf32>
    %19 = tpu.matmul %17, %18, %cst_14 {dimension_numbers = #tpu.dot_dimension_numbers<[1], [0], [0], [1], [0, 0, 1, 1], [], []>} : vector<8x784xbf16>, vector<784x128xbf16>, vector<8x128xf32> -> vector<8x128xf32>
    %c0_15 = arith.constant 0 : index
    %c0_16 = arith.constant 0 : index
    %20 = vector.load %arg7[%c0_15, %c0_16] : memref<1x128xf32, #tpu.memory_space<vmem>>, vector<1x128xf32>
    %21 = vector.broadcast %20 : vector<1x128xf32> to vector<8x128xf32>
    %22 = arith.addf %19, %21 : vector<8x128xf32>
    %23 = arith.mulf %22, %22 : vector<8x128xf32>
    %cst_17 = arith.constant dense<0.000000e+00> : vector<8xf32>
    %24 = vector.multi_reduction <add>, %23, %cst_17 [1] : vector<8x128xf32> to vector<8xf32>
    %25 = vector.shape_cast %24 : vector<8xf32> to vector<8x1xf32>
    %cst_18 = arith.constant 1.000000e-24 : f32
    %26 = vector.broadcast %cst_18 : f32 to vector<8x1xf32>
    %27 = arith.maximumf %25, %26 : vector<8x1xf32>
    %28 = math.rsqrt %27 : vector<8x1xf32>
    %cst_19 = arith.constant 2.500000e+01 : f32
    %29 = vector.broadcast %cst_19 : f32 to vector<8x1xf32>
    %30 = arith.mulf %28, %29 : vector<8x1xf32>
    %31 = vector.broadcast %30 : vector<8x1xf32> to vector<8x128xf32>
    %32 = arith.mulf %22, %31 : vector<8x128xf32>
    %33 = arith.truncf %32 : vector<8x128xf32> to vector<8x128xbf16>
    %c0_20 = arith.constant 0 : index
    %c0_21 = arith.constant 0 : index
    %34 = vector.load %arg8[%c0_20, %c0_21] : memref<128x128xbf16, #tpu.memory_space<vmem>>, vector<128x128xbf16>
    %cst_22 = arith.constant dense<0.000000e+00> : vector<8x128xf32>
    %35 = tpu.matmul %33, %34, %cst_22 {dimension_numbers = #tpu.dot_dimension_numbers<[1], [0], [0], [1], [0, 0, 1, 1], [], []>} : vector<8x128xbf16>, vector<128x128xbf16>, vector<8x128xf32> -> vector<8x128xf32>
    %c0_23 = arith.constant 0 : index
    %c0_24 = arith.constant 0 : index
    %36 = vector.load %arg9[%c0_23, %c0_24] : memref<8x128xf32, #tpu.memory_space<vmem>>, vector<8x128xf32>
    tpu.vector_store %arg9[%c0_23, %c0_24], %35 {strides = array<i32>} : memref<8x128xf32, #tpu.memory_space<vmem>>, vector<8x128xf32>,
    return
  }
  func.func @transform_0(%arg0: i32) -> (i32, i32) {
    %c0_i32 = arith.constant 0 : i32
    %c0_i32_0 = arith.constant 0 : i32
    return %arg0, %c0_i32 : i32, i32
  }
  func.func @transform_1(%arg0: i32) -> (i32, i32) {
    %c0_i32 = arith.constant 0 : i32
    %c0_i32_0 = arith.constant 0 : i32
    %c0_i32_1 = arith.constant 0 : i32
    return %c0_i32, %c0_i32_0 : i32, i32
  }
  func.func @transform_2(%arg0: i32) -> (i32, i32) {
    %c0_i32 = arith.constant 0 : i32
    %c0_i32_0 = arith.constant 0 : i32
    %c0_i32_1 = arith.constant 0 : i32
    return %c0_i32, %c0_i32_0 : i32, i32
  }
  func.func @transform_3(%arg0: i32) -> (i32, i32) {
    %c0_i32 = arith.constant 0 : i32
    %c0_i32_0 = arith.constant 0 : i32
    %c0_i32_1 = arith.constant 0 : i32
    return %c0_i32, %c0_i32_0 : i32, i32
  }
  func.func @transform_4(%arg0: i32) -> (i32, i32) {
    %c0_i32 = arith.constant 0 : i32
    %c0_i32_0 = arith.constant 0 : i32
    %c0_i32_1 = arith.constant 0 : i32
    return %c0_i32, %c0_i32_0 : i32, i32
  }
  func.func @transform_5(%arg0: i32) -> (i32, i32) {
    %c0_i32 = arith.constant 0 : i32
    %c0_i32_0 = arith.constant 0 : i32
    %c0_i32_1 = arith.constant 0 : i32
    return %c0_i32, %c0_i32_0 : i32, i32
  }
  func.func @transform_6(%arg0: i32) -> (i32, i32) {
    %c0_i32 = arith.constant 0 : i32
    %c0_i32_0 = arith.constant 0 : i32
    %c0_i32_1 = arith.constant 0 : i32
    return %c0_i32, %c0_i32_0 : i32, i32
  }
  func.func @transform_7(%arg0: i32) -> (i32, i32) {
    %c0_i32 = arith.constant 0 : i32
    %c0_i32_0 = arith.constant 0 : i32
    %c0_i32_1 = arith.constant 0 : i32
    return %c0_i32, %c0_i32_0 : i32, i32
  }
  func.func @transform_8(%arg0: i32) -> (i32, i32) {
    %c0_i32 = arith.constant 0 : i32
    %c0_i32_0 = arith.constant 0 : i32
    return %arg0, %c0_i32 : i32, i32
  }
}

</mosaic_0001>

<llo_original>
// kernel: tpu_custom_call.1
$region0: #{tpu_custom_call.1}
  #allocation0 [shape = 'u32[]', space=smem, size = 0x4, offset = 0x4, fixed_abs, tag = 'smem constant byte address 0x4 - core index']
  #allocation1 [shape = 'u32[144,128]{1,0:T(1,128)}', space=vmem, size = 0x12000, scoped, tag = 'internal scratch']
  %s0 = inlined_call_operand.hbm [shape: f32[8,784], index: 0, kind: input, shape index: {}]
  %s1 = inlined_call_operand.hbm [shape: bf16[784,784], index: 1, kind: input, shape index: {}]
  %s2 = inlined_call_operand.hbm [shape: f32[1,784], index: 2, kind: input, shape index: {}]
  %s3 = inlined_call_operand.hbm [shape: bf16[784,784], index: 3, kind: input, shape index: {}]
  %s4 = inlined_call_operand.hbm [shape: f32[1,784], index: 4, kind: input, shape index: {}]
  %s5 = inlined_call_operand.hbm [shape: bf16[784,128], index: 5, kind: input, shape index: {}]
  %s6 = inlined_call_operand.hbm [shape: f32[1,128], index: 6, kind: input, shape index: {}]
  %s7 = inlined_call_operand.hbm [shape: bf16[128,128], index: 7, kind: input, shape index: {}]
  %s8 = inlined_call_operand.hbm [shape: f32[8,128], index: 8, kind: output, shape index: {}]
  %s9 = sld [smem:[#allocation0]]
  $region74: #{tpu_custom_call.1} parent=0
    _
  %s11 = ssub.s32 1, %s9
  %s12 = scalar_select 0, %s11, %s9
  $region1: #{tpu_custom_call.1} parent=0
    #allocation2 [shape = 'u8[28672]{0}', space=vmem, size = 0x7000, scoped, tag = 'input window, operand 0, single buffered']
    #allocation3 [shape = 's32[1]{0}', space=sflag, size = 0x4, scoped, tag = 'scoped memory for tpu_custom_call.1']
    #allocation4 [shape = 's32[1]{0}', space=sflag, size = 0x4, scoped, tag = 'scoped memory for tpu_custom_call.1']
    #allocation5 [shape = 'u8[1404928]{0}', space=vmem, size = 0x157000, scoped, tag = 'input window, operand 1, single buffered']
    #allocation6 [shape = 's32[1]{0}', space=sflag, size = 0x4, scoped, tag = 'scoped memory for tpu_custom_call.1']
    #allocation7 [shape = 'u8[3584]{0}', space=vmem, size = 0x1000, scoped, tag = 'input window, operand 2, single buffered']
    #allocation8 [shape = 'u8[1404928]{0}', space=vmem, size = 0x157000, scoped, tag = 'input window, operand 3, single buffered']
    #allocation9 [shape = 's32[1]{0}', space=sflag, size = 0x4, scoped, tag = 'scoped memory for tpu_custom_call.1']
    #allocation10 [shape = 'u8[3584]{0}', space=vmem, size = 0x1000, scoped, tag = 'input window, operand 4, single buffered']
    #allocation11 [shape = 'u8[200704]{0}', space=vmem, size = 0x31000, scoped, tag = 'input window, operand 5, single buffered']
    #allocation12 [shape = 's32[1]{0}', space=sflag, size = 0x4, scoped, tag = 'scoped memory for tpu_custom_call.1']
    #allocation13 [shape = 'u8[512]{0}', space=vmem, size = 0x400, scoped, tag = 'input window, operand 6, single buffered']
    #allocation14 [shape = 'u8[32768]{0}', space=vmem, size = 0x8000, scoped, tag = 'input window, operand 7, single buffered']
    #allocation15 [shape = 's32[1]{0}', space=sflag, size = 0x4, scoped, tag = 'scoped memory for tpu_custom_call.1']
    #allocation16 [shape = 'u8[4096]{0}', space=vmem, size = 0x1000, scoped, tag = 'output window, operand 0, single buffered']
    %13 = vsyncpa [#allocation3], 0
    %14 = vsyncpa [#allocation6], 0
    %15 = vsyncpa [#allocation9], 0
    %16 = vsyncpa [#allocation12], 0
    %17 = vsyncpa [#allocation15], 0
    %18 = vsyncpa [#allocation4], 0
    // Predicated region
    $region2: #{tpu_custom_call.1} parent=1 // pred_check
      _
    $region3: #{tpu_custom_call.1} parent=1 // pred_check_branch
      %20 = sbr.rel (0) target = $region5
    $region4: #{tpu_custom_call.1} parent=1 // pred_region
      %s22 = ssub.s32 896, 896
      %23 = vsyncadd [#allocation3], %s22
      %s25 = sshll.u32 [#allocation2], 4
      %s26 = int_to_ptr.vmem [resolvable:$true] %s25
      %28 = dma.hbm_to_vmem [thread:$0]  %s0, 896, %s26, [#allocation3]
    $region5: #{tpu_custom_call.1} parent=1 // pred_fallthru
      _
    // Predicated region
    $region6: #{tpu_custom_call.1} parent=1 // pred_check
      _
    $region7: #{tpu_custom_call.1} parent=1 // pred_check_branch
      %30 = sbr.rel (0) target = $region9
    $region8: #{tpu_custom_call.1} parent=1 // pred_region
      %s32 = ssub.s32 43904, 43904
      %33 = vsyncadd [#allocation6], %s32
      %s34 = sshll.u32 [#allocation5], 4
      %s35 = int_to_ptr.vmem [resolvable:$true] %s34
      %40 = dma.hbm_to_vmem [thread:$0]  %s1, 43904, %s35, [#allocation6], 448, 448, 28
    $region9: #{tpu_custom_call.1} parent=1 // pred_fallthru
      _
    // Predicated region
    $region10: #{tpu_custom_call.1} parent=1 // pred_check
      _
    $region11: #{tpu_custom_call.1} parent=1 // pred_check_branch
      %42 = sbr.rel (0) target = $region13
    $region12: #{tpu_custom_call.1} parent=1 // pred_region
      %s44 = ssub.s32 112, 112
      %45 = vsyncadd [#allocation6], %s44
      %s47 = sshll.u32 [#allocation7], 4
      %s48 = int_to_ptr.vmem [resolvable:$true] %s47
      %50 = dma.hbm_to_vmem [thread:$0]  %s2, 112, %s48, [#allocation6]
    $region13: #{tpu_custom_call.1} parent=1 // pred_fallthru
      _
    // Predicated region
    $region14: #{tpu_custom_call.1} parent=1 // pred_check
      _
    $region15: #{tpu_custom_call.1} parent=1 // pred_check_branch
      %52 = sbr.rel (0) target = $region17
    $region16: #{tpu_custom_call.1} parent=1 // pred_region
      %s54 = ssub.s32 43904, 43904
      %55 = vsyncadd [#allocation9], %s54
      %s56 = sshll.u32 [#allocation8], 4
      %s57 = int_to_ptr.vmem [resolvable:$true] %s56
      %62 = dma.hbm_to_vmem [thread:$0]  %s3, 43904, %s57, [#allocation9], 448, 448, 28
    $region17: #{tpu_custom_call.1} parent=1 // pred_fallthru
      _
    // Predicated region
    $region18: #{tpu_custom_call.1} parent=1 // pred_check
      _
    $region19: #{tpu_custom_call.1} parent=1 // pred_check_branch
      %64 = sbr.rel (0) target = $region21
    $region20: #{tpu_custom_call.1} parent=1 // pred_region
      %s66 = ssub.s32 112, 112
      %67 = vsyncadd [#allocation9], %s66
      %s69 = sshll.u32 [#allocation10], 4
      %s70 = int_to_ptr.vmem [resolvable:$true] %s69
      %72 = dma.hbm_to_vmem [thread:$0]  %s4, 112, %s70, [#allocation9]
    $region21: #{tpu_custom_call.1} parent=1 // pred_fallthru
      _
    // Predicated region
    $region22: #{tpu_custom_call.1} parent=1 // pred_check
      _
    $region23: #{tpu_custom_call.1} parent=1 // pred_check_branch
      %74 = sbr.rel (0) target = $region25
    $region24: #{tpu_custom_call.1} parent=1 // pred_region
      %s76 = ssub.s32 6272, 6272
      %77 = vsyncadd [#allocation12], %s76
      %s78 = sshll.u32 [#allocation11], 4
      %s79 = int_to_ptr.vmem [resolvable:$true] %s78
      %84 = dma.hbm_to_vmem [thread:$0]  %s5, 6272, %s79, [#allocation12], 64, 64, 4
    $region25: #{tpu_custom_call.1} parent=1 // pred_fallthru
      _
    // Predicated region
    $region26: #{tpu_custom_call.1} parent=1 // pred_check
      _
    $region27: #{tpu_custom_call.1} parent=1 // pred_check_branch
      %86 = sbr.rel (0) target = $region29
    $region28: #{tpu_custom_call.1} parent=1 // pred_region
      %s88 = ssub.s32 16, 16
      %89 = vsyncadd [#allocation12], %s88
      %s91 = sshll.u32 [#allocation13], 4
      %s92 = int_to_ptr.vmem [resolvable:$true] %s91
      %94 = dma.hbm_to_vmem [thread:$0]  %s6, 16, %s92, [#allocation12]
    $region29: #{tpu_custom_call.1} parent=1 // pred_fallthru
      _
    // Predicated region
    $region30: #{tpu_custom_call.1} parent=1 // pred_check
      _
    $region31: #{tpu_custom_call.1} parent=1 // pred_check_branch
      %96 = sbr.rel (0) target = $region33
    $region32: #{tpu_custom_call.1} parent=1 // pred_region
      %s98 = ssub.s32 1024, 1024
      %99 = vsyncadd [#allocation15], %s98
      %s100 = sshll.u32 [#allocation14], 4
      %s101 = int_to_ptr.vmem [resolvable:$true] %s100
      %106 = dma.hbm_to_vmem [thread:$0]  %s7, 1024, %s101, [#allocation15], 64, 64, 4
    $region33: #{tpu_custom_call.1} parent=1 // pred_fallthru
      _
    // Predicated region
    $region34: #{tpu_custom_call.1} parent=1 // pred_check
      _
    $region35: #{tpu_custom_call.1} parent=1 // pred_check_branch
      %108 = sbr.rel (0) target = $region37
    $region36: #{tpu_custom_call.1} parent=1 // pred_region
      %109 = dma.done [#allocation3], 896
    $region37: #{tpu_custom_call.1} parent=1 // pred_fallthru
      _
    // Predicated region
    $region38: #{tpu_custom_call.1} parent=1 // pred_check
      _
    $region39: #{tpu_custom_call.1} parent=1 // pred_check_branch
      %111 = sbr.rel (0) target = $region41
    $region40: #{tpu_custom_call.1} parent=1 // pred_region
      %112 = dma.done [#allocation6], 43904
    $region41: #{tpu_custom_call.1} parent=1 // pred_fallthru
      _
    // Predicated region
    $region42: #{tpu_custom_call.1} parent=1 // pred_check
      _
    $region43: #{tpu_custom_call.1} parent=1 // pred_check_branch
      %114 = sbr.rel (0) target = $region45
    $region44: #{tpu_custom_call.1} parent=1 // pred_region
      %115 = dma.done [#allocation6], 112
    $region45: #{tpu_custom_call.1} parent=1 // pred_fallthru
      _
    // Predicated region
    $region46: #{tpu_custom_call.1} parent=1 // pred_check
      _
    $region47: #{tpu_custom_call.1} parent=1 // pred_check_branch
      %117 = sbr.rel (0) target = $region49
    $region48: #{tpu_custom_call.1} parent=1 // pred_region
      %118 = dma.done [#allocation9], 43904
    $region49: #{tpu_custom_call.1} parent=1 // pred_fallthru
      _
    // Predicated region
    $region50: #{tpu_custom_call.1} parent=1 // pred_check
      _
    $region51: #{tpu_custom_call.1} parent=1 // pred_check_branch
      %120 = sbr.rel (0) target = $region53
    $region52: #{tpu_custom_call.1} parent=1 // pred_region
      %121 = dma.done [#allocation9], 112
    $region53: #{tpu_custom_call.1} parent=1 // pred_fallthru
      _
    // Predicated region
    $region54: #{tpu_custom_call.1} parent=1 // pred_check
      _
    $region55: #{tpu_custom_call.1} parent=1 // pred_check_branch
      %123 = sbr.rel (0) target = $region57
    $region56: #{tpu_custom_call.1} parent=1 // pred_region
      %124 = dma.done [#allocation12], 6272
    $region57: #{tpu_custom_call.1} parent=1 // pred_fallthru
      _
    // Predicated region
    $region58: #{tpu_custom_call.1} parent=1 // pred_check
      _
    $region59: #{tpu_custom_call.1} parent=1 // pred_check_branch
      %126 = sbr.rel (0) target = $region61
    $region60: #{tpu_custom_call.1} parent=1 // pred_region
      %127 = dma.done [#allocation12], 16
    $region61: #{tpu_custom_call.1} parent=1 // pred_fallthru
      _
    // Predicated region
    $region62: #{tpu_custom_call.1} parent=1 // pred_check
      _
    $region63: #{tpu_custom_call.1} parent=1 // pred_check_branch
      %129 = sbr.rel (0) target = $region65
    $region64: #{tpu_custom_call.1} parent=1 // pred_region
      %130 = dma.done [#allocation15], 1024
    $region65: #{tpu_custom_call.1} parent=1 // pred_fallthru
      _
    %v132 = vld [vmem:[#allocation2] sm:$0xff]
    %v133 = vld [vmem:[#allocation2 + $0x8] sm:$0xff]
    %v134 = vld [vmem:[#allocation2 + $0x10] sm:$0xff]
    %v135 = vld [vmem:[#allocation2 + $0x18] sm:$0xff]
    %v136 = vld [vmem:[#allocation2 + $0x20] sm:$0xff]
    %v137 = vld [vmem:[#allocation2 + $0x28] sm:$0xff]
    %v138 = vld [vmem:[#allocation2 + $0x30] sm:$0xff]
    %v139 = vpack.c.bf16 %v132, %v132
    %v140 = vpack.c.bf16 %v133, %v133
    %v141 = vpack.c.bf16 %v134, %v134
    %v142 = vpack.c.bf16 %v135, %v135
    %v143 = vpack.c.bf16 %v136, %v136
    %v144 = vpack.c.bf16 %v137, %v137
    %v145 = vpack.c.bf16 %v138, %v138
    %v146 = vld [vmem:[#allocation5] sm:$0xff]
    %v147 = vld [vmem:[#allocation5 + $0x8] sm:$0xff]
    %v148 = vld [vmem:[#allocation5 + $0x10] sm:$0xff]
    %v149 = vld [vmem:[#allocation5 + $0x18] sm:$0xf]
    %v150 = vld [vmem:[#allocation5 + $0x1c] sm:$0xff]
    %v151 = vld [vmem:[#allocation5 + $0x24] sm:$0xff]
    %v152 = vld [vmem:[#allocation5 + $0x2c] sm:$0xff]
    %v153 = vld [vmem:[#allocation5 + $0x34] sm:$0xf]
    %v154 = vld [vmem:[#allocation5 + $0x38] sm:$0xff]
    %v155 = vld [vmem:[#allocation5 + $0x40] sm:$0xff]
    %v156 = vld [vmem:[#allocation5 + $0x48] sm:$0xff]
    %v157 = vld [vmem:[#allocation5 + $0x50] sm:$0xf]
    %v158 = vld [vmem:[#allocation5 + $0x54] sm:$0xff]
    %v159 = vld [vmem:[#allocation5 + $0x5c] sm:$0xff]
    %v160 = vld [vmem:[#allocation5 + $0x64] sm:$0xff]
    %v161 = vld [vmem:[#allocation5 + $0x6c] sm:$0xf]
    %v162 = vld [vmem:[#allocation5 + $0x70] sm:$0xff]
    %v163 = vld [vmem:[#allocation5 + $0x78] sm:$0xff]
    %v164 = vld [vmem:[#allocation5 + $0x80] sm:$0xff]
    %v165 = vld [vmem:[#allocation5 + $0x88] sm:$0xf]
    %v166 = vld [vmem:[#allocation5 + $0x8c] sm:$0xff]
    %v167 = vld [vmem:[#allocation5 + $0x94] sm:$0xff]
    %v168 = vld [vmem:[#allocation5 + $0x9c] sm:$0xff]
    %v169 = vld [vmem:[#allocation5 + $0xa4] sm:$0xf]
    %v170 = vld [vmem:[#allocation5 + $0xa8] sm:$0xff]
    %v171 = vld [vmem:[#allocation5 + $0xb0] sm:$0xff]
    %v172 = vld [vmem:[#allocation5 + $0xb8] sm:$0xff]
    %v173 = vld [vmem:[#allocation5 + $0xc0] sm:$0xf]
    %v174 = vld [vmem:[#allocation5 + $0xc4] sm:$0xff]
    %v175 = vld [vmem:[#allocation5 + $0xcc] sm:$0xff]
    %v176 = vld [vmem:[#allocation5 + $0xd4] sm:$0xff]
    %v177 = vld [vmem:[#allocation5 + $0xdc] sm:$0xf]
    %v178 = vld [vmem:[#allocation5 + $0xe0] sm:$0xff]
    %v179 = vld [vmem:[#allocation5 + $0xe8] sm:$0xff]
    %v180 = vld [vmem:[#allocation5 + $0xf0] sm:$0xff]
    %v181 = vld [vmem:[#allocation5 + $0xf8] sm:$0xf]
    %v182 = vld [vmem:[#allocation5 + $0xfc] sm:$0xff]
    %v183 = vld [vmem:[#allocation5 + $0x104] sm:$0xff]
    %v184 = vld [vmem:[#allocation5 + $0x10c] sm:$0xff]
    %v185 = vld [vmem:[#allocation5 + $0x114] sm:$0xf]
    %v186 = vld [vmem:[#allocation5 + $0x118] sm:$0xff]
    %v187 = vld [vmem:[#allocation5 + $0x120] sm:$0xff]
    %v188 = vld [vmem:[#allocation5 + $0x128] sm:$0xff]
    %v189 = vld [vmem:[#allocation5 + $0x130] sm:$0xf]
    %v190 = vld [vmem:[#allocation5 + $0x134] sm:$0xff]
    %v191 = vld [vmem:[#allocation5 + $0x13c] sm:$0xff]
    %v192 = vld [vmem:[#allocation5 + $0x144] sm:$0xff]
    %v193 = vld [vmem:[#allocation5 + $0x14c] sm:$0xf]
    %v194 = vld [vmem:[#allocation5 + $0x150] sm:$0xff]
    %v195 = vld [vmem:[#allocation5 + $0x158] sm:$0xff]
    %v196 = vld [vmem:[#allocation5 + $0x160] sm:$0xff]
    %v197 = vld [vmem:[#allocation5 + $0x168] sm:$0xf]
    %v198 = vld [vmem:[#allocation5 + $0x16c] sm:$0xff]
    %v199 = vld [vmem:[#allocation5 + $0x174] sm:$0xff]
    %v200 = vld [vmem:[#allocation5 + $0x17c] sm:$0xff]
    %v201 = vld [vmem:[#allocation5 + $0x184] sm:$0xf]
    %v202 = vld [vmem:[#allocation5 + $0x188] sm:$0xff]
    %v203 = vld [vmem:[#allocation5 + $0x190] sm:$0xff]
    %v204 = vld [vmem:[#allocation5 + $0x198] sm:$0xff]
    %v205 = vld [vmem:[#allocation5 + $0x1a0] sm:$0xf]
    %v206 = vld [vmem:[#allocation5 + $0x1a4] sm:$0xff]
    %v207 = vld [vmem:[#allocation5 + $0x1ac] sm:$0xff]
    %v208 = vld [vmem:[#allocation5 + $0x1b4] sm:$0xff]
    %v209 = vld [vmem:[#allocation5 + $0x1bc] sm:$0xf]
    %v210 = vld [vmem:[#allocation5 + $0x1c0] sm:$0xff]
    %v211 = vld [vmem:[#allocation5 + $0x1c8] sm:$0xff]
    %v212 = vld [vmem:[#allocation5 + $0x1d0] sm:$0xff]
    %v213 = vld [vmem:[#allocation5 + $0x1d8] sm:$0xf]
    %v214 = vld [vmem:[#allocation5 + $0x1dc] sm:$0xff]
    %v215 = vld [vmem:[#allocation5 + $0x1e4] sm:$0xff]
    %v216 = vld [vmem:[#allocation5 + $0x1ec] sm:$0xff]
    %v217 = vld [vmem:[#allocation5 + $0x1f4] sm:$0xf]
    %v218 = vld [vmem:[#allocation5 + $0x1f8] sm:$0xff]
    %v219 = vld [vmem:[#allocation5 + $0x200] sm:$0xff]
    %v220 = vld [vmem:[#allocation5 + $0x208] sm:$0xff]
    %v221 = vld [vmem:[#allocation5 + $0x210] sm:$0xf]
    %v222 = vld [vmem:[#allocation5 + $0x214] sm:$0xff]
    %v223 = vld [vmem:[#allocation5 + $0x21c] sm:$0xff]
    %v224 = vld [vmem:[#allocation5 + $0x224] sm:$0xff]
    %v225 = vld [vmem:[#allocation5 + $0x22c] sm:$0xf]
    %v226 = vld [vmem:[#allocation5 + $0x230] sm:$0xff]
    %v227 = vld [vmem:[#allocation5 + $0x238] sm:$0xff]
    %v228 = vld [vmem:[#allocation5 + $0x240] sm:$0xff]
    %v229 = vld [vmem:[#allocation5 + $0x248] sm:$0xf]
    %v230 = vld [vmem:[#allocation5 + $0x24c] sm:$0xff]
    %v231 = vld [vmem:[#allocation5 + $0x254] sm:$0xff]
    %v232 = vld [vmem:[#allocation5 + $0x25c] sm:$0xff]
    %v233 = vld [vmem:[#allocation5 + $0x264] sm:$0xf]
    %v234 = vld [vmem:[#allocation5 + $0x268] sm:$0xff]
    %v235 = vld [vmem:[#allocation5 + $0x270] sm:$0xff]
    %v236 = vld [vmem:[#allocation5 + $0x278] sm:$0xff]
    %v237 = vld [vmem:[#allocation5 + $0x280] sm:$0xf]
    %v238 = vld [vmem:[#allocation5 + $0x284] sm:$0xff]
    %v239 = vld [vmem:[#allocation5 + $0x28c] sm:$0xff]
    %v240 = vld [vmem:[#allocation5 + $0x294] sm:$0xff]
    %v241 = vld [vmem:[#allocation5 + $0x29c] sm:$0xf]
    %v242 = vld [vmem:[#allocation5 + $0x2a0] sm:$0xff]
    %v243 = vld [vmem:[#allocation5 + $0x2a8] sm:$0xff]
    %v244 = vld [vmem:[#allocation5 + $0x2b0] sm:$0xff]
    %v245 = vld [vmem:[#allocation5 + $0x2b8] sm:$0xf]
    %v246 = vld [vmem:[#allocation5 + $0x2bc] sm:$0xff]
    %v247 = vld [vmem:[#allocation5 + $0x2c4] sm:$0xff]
    %v248 = vld [vmem:[#allocation5 + $0x2cc] sm:$0xff]
    %v249 = vld [vmem:[#allocation5 + $0x2d4] sm:$0xf]
    %v250 = vld [vmem:[#allocation5 + $0x2d8] sm:$0xff]
    %v251 = vld [vmem:[#allocation5 + $0x2e0] sm:$0xff]
    %v252 = vld [vmem:[#allocation5 + $0x2e8] sm:$0xff]
    %v253 = vld [vmem:[#allocation5 + $0x2f0] sm:$0xf]
    %v254 = vld [vmem:[#allocation5 + $0x2f4] sm:$0xff]
    %v255 = vld [vmem:[#allocation5 + $0x2fc] sm:$0xff]
    %v256 = vld [vmem:[#allocation5 + $0x304] sm:$0xff]
    %v257 = vld [vmem:[#allocation5 + $0x30c] sm:$0xf]
    %v258 = vld [vmem:[#allocation5 + $0x310] sm:$0xff]
    %v259 = vld [vmem:[#allocation5 + $0x318] sm:$0xff]
    %v260 = vld [vmem:[#allocation5 + $0x320] sm:$0xff]
    %v261 = vld [vmem:[#allocation5 + $0x328] sm:$0xf]
    %v262 = vld [vmem:[#allocation5 + $0x32c] sm:$0xff]
    %v263 = vld [vmem:[#allocation5 + $0x334] sm:$0xff]
    %v264 = vld [vmem:[#allocation5 + $0x33c] sm:$0xff]
    %v265 = vld [vmem:[#allocation5 + $0x344] sm:$0xf]
    %v266 = vld [vmem:[#allocation5 + $0x348] sm:$0xff]
    %v267 = vld [vmem:[#allocation5 + $0x350] sm:$0xff]
    %v268 = vld [vmem:[#allocation5 + $0x358] sm:$0xff]
    %v269 = vld [vmem:[#allocation5 + $0x360] sm:$0xf]
    %v270 = vld [vmem:[#allocation5 + $0x364] sm:$0xff]
    %v271 = vld [vmem:[#allocation5 + $0x36c] sm:$0xff]
    %v272 = vld [vmem:[#allocation5 + $0x374] sm:$0xff]
    %v273 = vld [vmem:[#allocation5 + $0x37c] sm:$0xf]
    %v274 = vld [vmem:[#allocation5 + $0x380] sm:$0xff]
    %v275 = vld [vmem:[#allocation5 + $0x388] sm:$0xff]
    %v276 = vld [vmem:[#allocation5 + $0x390] sm:$0xff]
    %v277 = vld [vmem:[#allocation5 + $0x398] sm:$0xf]
    %v278 = vld [vmem:[#allocation5 + $0x39c] sm:$0xff]
    %v279 = vld [vmem:[#allocation5 + $0x3a4] sm:$0xff]
    %v280 = vld [vmem:[#allocation5 + $0x3ac] sm:$0xff]
    %v281 = vld [vmem:[#allocation5 + $0x3b4] sm:$0xf]
    %v282 = vld [vmem:[#allocation5 + $0x3b8] sm:$0xff]
    %v283 = vld [vmem:[#allocation5 + $0x3c0] sm:$0xff]
    %v284 = vld [vmem:[#allocation5 + $0x3c8] sm:$0xff]
    %v285 = vld [vmem:[#allocation5 + $0x3d0] sm:$0xf]
    %v286 = vld [vmem:[#allocation5 + $0x3d4] sm:$0xff]
    %v287 = vld [vmem:[#allocation5 + $0x3dc] sm:$0xff]
    %v288 = vld [vmem:[#allocation5 + $0x3e4] sm:$0xff]
    %v289 = vld [vmem:[#allocation5 + $0x3ec] sm:$0xf]
    %v290 = vld [vmem:[#allocation5 + $0x3f0] sm:$0xff]
    %v291 = vld [vmem:[#allocation5 + $0x3f8] sm:$0xff]
    %v292 = vld [vmem:[#allocation5 + $0x400] sm:$0xff]
    %v293 = vld [vmem:[#allocation5 + $0x408] sm:$0xf]
    %v294 = vld [vmem:[#allocation5 + $0x40c] sm:$0xff]
    %v295 = vld [vmem:[#allocation5 + $0x414] sm:$0xff]
    %v296 = vld [vmem:[#allocation5 + $0x41c] sm:$0xff]
    %v297 = vld [vmem:[#allocation5 + $0x424] sm:$0xf]
    %v298 = vld [vmem:[#allocation5 + $0x428] sm:$0xff]
    %v299 = vld [vmem:[#allocation5 + $0x430] sm:$0xff]
    %v300 = vld [vmem:[#allocation5 + $0x438] sm:$0xff]
    %v301 = vld [vmem:[#allocation5 + $0x440] sm:$0xf]
    %v302 = vld [vmem:[#allocation5 + $0x444] sm:$0xff]
    %v303 = vld [vmem:[#allocation5 + $0x44c] sm:$0xff]
    %v304 = vld [vmem:[#allocation5 + $0x454] sm:$0xff]
    %v305 = vld [vmem:[#allocation5 + $0x45c] sm:$0xf]
    %v306 = vld [vmem:[#allocation5 + $0x460] sm:$0xff]
    %v307 = vld [vmem:[#allocation5 + $0x468] sm:$0xff]
    %v308 = vld [vmem:[#allocation5 + $0x470] sm:$0xff]
    %v309 = vld [vmem:[#allocation5 + $0x478] sm:$0xf]
    %v310 = vld [vmem:[#allocation5 + $0x47c] sm:$0xff]
    %v311 = vld [vmem:[#allocation5 + $0x484] sm:$0xff]
    %v312 = vld [vmem:[#allocation5 + $0x48c] sm:$0xff]
    %v313 = vld [vmem:[#allocation5 + $0x494] sm:$0xf]
    %v314 = vld [vmem:[#allocation5 + $0x498] sm:$0xff]
    %v315 = vld [vmem:[#allocation5 + $0x4a0] sm:$0xff]
    %v316 = vld [vmem:[#allocation5 + $0x4a8] sm:$0xff]
    %v317 = vld [vmem:[#allocation5 + $0x4b0] sm:$0xf]
    %v318 = vld [vmem:[#allocation5 + $0x4b4] sm:$0xff]
    %v319 = vld [vmem:[#allocation5 + $0x4bc] sm:$0xff]
    %v320 = vld [vmem:[#allocation5 + $0x4c4] sm:$0xff]
    %v321 = vld [vmem:[#allocation5 + $0x4cc] sm:$0xf]
    %v322 = vld [vmem:[#allocation5 + $0x4d0] sm:$0xff]
    %v323 = vld [vmem:[#allocation5 + $0x4d8] sm:$0xff]
    %v324 = vld [vmem:[#allocation5 + $0x4e0] sm:$0xff]
    %v325 = vld [vmem:[#allocation5 + $0x4e8] sm:$0xf]
    %v326 = vld [vmem:[#allocation5 + $0x4ec] sm:$0xff]
    %v327 = vld [vmem:[#allocation5 + $0x4f4] sm:$0xff]
    %v328 = vld [vmem:[#allocation5 + $0x4fc] sm:$0xff]
    %v329 = vld [vmem:[#allocation5 + $0x504] sm:$0xf]
    %v330 = vld [vmem:[#allocation5 + $0x508] sm:$0xff]
    %v331 = vld [vmem:[#allocation5 + $0x510] sm:$0xff]
    %v332 = vld [vmem:[#allocation5 + $0x518] sm:$0xff]
    %v333 = vld [vmem:[#allocation5 + $0x520] sm:$0xf]
    %v334 = vld [vmem:[#allocation5 + $0x524] sm:$0xff]
    %v335 = vld [vmem:[#allocation5 + $0x52c] sm:$0xff]
    %v336 = vld [vmem:[#allocation5 + $0x534] sm:$0xff]
    %v337 = vld [vmem:[#allocation5 + $0x53c] sm:$0xf]
    %v338 = vld [vmem:[#allocation5 + $0x540] sm:$0xff]
    %v339 = vld [vmem:[#allocation5 + $0x548] sm:$0xff]
    %v340 = vld [vmem:[#allocation5 + $0x550] sm:$0xff]
    %v341 = vld [vmem:[#allocation5 + $0x558] sm:$0xf]
    %v342 = vld [vmem:[#allocation5 + $0x55c] sm:$0xff]
    %v343 = vld [vmem:[#allocation5 + $0x564] sm:$0xff]
    %v344 = vld [vmem:[#allocation5 + $0x56c] sm:$0xff]
    %v345 = vld [vmem:[#allocation5 + $0x574] sm:$0xf]
    %v346 = vld [vmem:[#allocation5 + $0x578] sm:$0xff]
    %v347 = vld [vmem:[#allocation5 + $0x580] sm:$0xff]
    %v348 = vld [vmem:[#allocation5 + $0x588] sm:$0xff]
    %v349 = vld [vmem:[#allocation5 + $0x590] sm:$0xf]
    %v350 = vld [vmem:[#allocation5 + $0x594] sm:$0xff]
    %v351 = vld [vmem:[#allocation5 + $0x59c] sm:$0xff]
    %v352 = vld [vmem:[#allocation5 + $0x5a4] sm:$0xff]
    %v353 = vld [vmem:[#allocation5 + $0x5ac] sm:$0xf]
    %v354 = vld [vmem:[#allocation5 + $0x5b0] sm:$0xff]
    %v355 = vld [vmem:[#allocation5 + $0x5b8] sm:$0xff]
    %v356 = vld [vmem:[#allocation5 + $0x5c0] sm:$0xff]
    %v357 = vld [vmem:[#allocation5 + $0x5c8] sm:$0xf]
    %v358 = vld [vmem:[#allocation5 + $0x5cc] sm:$0xff]
    %v359 = vld [vmem:[#allocation5 + $0x5d4] sm:$0xff]
    %v360 = vld [vmem:[#allocation5 + $0x5dc] sm:$0xff]
    %v361 = vld [vmem:[#allocation5 + $0x5e4] sm:$0xf]
    %v362 = vld [vmem:[#allocation5 + $0x5e8] sm:$0xff]
    %v363 = vld [vmem:[#allocation5 + $0x5f0] sm:$0xff]
    %v364 = vld [vmem:[#allocation5 + $0x5f8] sm:$0xff]
    %v365 = vld [vmem:[#allocation5 + $0x600] sm:$0xf]
    %v366 = vld [vmem:[#allocation5 + $0x604] sm:$0xff]
    %v367 = vld [vmem:[#allocation5 + $0x60c] sm:$0xff]
    %v368 = vld [vmem:[#allocation5 + $0x614] sm:$0xff]
    %v369 = vld [vmem:[#allocation5 + $0x61c] sm:$0xf]
    %v370 = vld [vmem:[#allocation5 + $0x620] sm:$0xff]
    %v371 = vld [vmem:[#allocation5 + $0x628] sm:$0xff]
    %v372 = vld [vmem:[#allocation5 + $0x630] sm:$0xff]
    %v373 = vld [vmem:[#allocation5 + $0x638] sm:$0xf]
    %v374 = vld [vmem:[#allocation5 + $0x63c] sm:$0xff]
    %v375 = vld [vmem:[#allocation5 + $0x644] sm:$0xff]
    %v376 = vld [vmem:[#allocation5 + $0x64c] sm:$0xff]
    %v377 = vld [vmem:[#allocation5 + $0x654] sm:$0xf]
    %v378 = vld [vmem:[#allocation5 + $0x658] sm:$0xff]
    %v379 = vld [vmem:[#allocation5 + $0x660] sm:$0xff]
    %v380 = vld [vmem:[#allocation5 + $0x668] sm:$0xff]
    %v381 = vld [vmem:[#allocation5 + $0x670] sm:$0xf]
    %v382 = vld [vmem:[#allocation5 + $0x674] sm:$0xff]
    %v383 = vld [vmem:[#allocation5 + $0x67c] sm:$0xff]
    %v384 = vld [vmem:[#allocation5 + $0x684] sm:$0xff]
    %v385 = vld [vmem:[#allocation5 + $0x68c] sm:$0xf]
    %v386 = vld [vmem:[#allocation5 + $0x690] sm:$0xff]
    %v387 = vld [vmem:[#allocation5 + $0x698] sm:$0xff]
    %v388 = vld [vmem:[#allocation5 + $0x6a0] sm:$0xff]
    %v389 = vld [vmem:[#allocation5 + $0x6a8] sm:$0xf]
    %v390 = vld [vmem:[#allocation5 + $0x6ac] sm:$0xff]
    %v391 = vld [vmem:[#allocation5 + $0x6b4] sm:$0xff]
    %v392 = vld [vmem:[#allocation5 + $0x6bc] sm:$0xff]
    %v393 = vld [vmem:[#allocation5 + $0x6c4] sm:$0xf]
    %v394 = vld [vmem:[#allocation5 + $0x6c8] sm:$0xff]
    %v395 = vld [vmem:[#allocation5 + $0x6d0] sm:$0xff]
    %v396 = vld [vmem:[#allocation5 + $0x6d8] sm:$0xff]
    %v397 = vld [vmem:[#allocation5 + $0x6e0] sm:$0xf]
    %v398 = vld [vmem:[#allocation5 + $0x6e4] sm:$0xff]
    %v399 = vld [vmem:[#allocation5 + $0x6ec] sm:$0xff]
    %v400 = vld [vmem:[#allocation5 + $0x6f4] sm:$0xff]
    %v401 = vld [vmem:[#allocation5 + $0x6fc] sm:$0xf]
    %v402 = vld [vmem:[#allocation5 + $0x700] sm:$0xff]
    %v403 = vld [vmem:[#allocation5 + $0x708] sm:$0xff]
    %v404 = vld [vmem:[#allocation5 + $0x710] sm:$0xff]
    %v405 = vld [vmem:[#allocation5 + $0x718] sm:$0xf]
    %v406 = vld [vmem:[#allocation5 + $0x71c] sm:$0xff]
    %v407 = vld [vmem:[#allocation5 + $0x724] sm:$0xff]
    %v408 = vld [vmem:[#allocation5 + $0x72c] sm:$0xff]
    %v409 = vld [vmem:[#allocation5 + $0x734] sm:$0xf]
    %v410 = vld [vmem:[#allocation5 + $0x738] sm:$0xff]
    %v411 = vld [vmem:[#allocation5 + $0x740] sm:$0xff]
    %v412 = vld [vmem:[#allocation5 + $0x748] sm:$0xff]
    %v413 = vld [vmem:[#allocation5 + $0x750] sm:$0xf]
    %v414 = vld [vmem:[#allocation5 + $0x754] sm:$0xff]
    %v415 = vld [vmem:[#allocation5 + $0x75c] sm:$0xff]
    %v416 = vld [vmem:[#allocation5 + $0x764] sm:$0xff]
    %v417 = vld [vmem:[#allocation5 + $0x76c] sm:$0xf]
    %v418 = vld [vmem:[#allocation5 + $0x770] sm:$0xff]
    %v419 = vld [vmem:[#allocation5 + $0x778] sm:$0xff]
    %v420 = vld [vmem:[#allocation5 + $0x780] sm:$0xff]
    %v421 = vld [vmem:[#allocation5 + $0x788] sm:$0xf]
    %v422 = vld [vmem:[#allocation5 + $0x78c] sm:$0xff]
    %v423 = vld [vmem:[#allocation5 + $0x794] sm:$0xff]
    %v424 = vld [vmem:[#allocation5 + $0x79c] sm:$0xff]
    %v425 = vld [vmem:[#allocation5 + $0x7a4] sm:$0xf]
    %v426 = vld [vmem:[#allocation5 + $0x7a8] sm:$0xff]
    %v427 = vld [vmem:[#allocation5 + $0x7b0] sm:$0xff]
    %v428 = vld [vmem:[#allocation5 + $0x7b8] sm:$0xff]
    %v429 = vld [vmem:[#allocation5 + $0x7c0] sm:$0xf]
    %v430 = vld [vmem:[#allocation5 + $0x7c4] sm:$0xff]
    %v431 = vld [vmem:[#allocation5 + $0x7cc] sm:$0xff]
    %v432 = vld [vmem:[#allocation5 + $0x7d4] sm:$0xff]
    %v433 = vld [vmem:[#allocation5 + $0x7dc] sm:$0xf]
    %v434 = vld [vmem:[#allocation5 + $0x7e0] sm:$0xff]
    %v435 = vld [vmem:[#allocation5 + $0x7e8] sm:$0xff]
    %v436 = vld [vmem:[#allocation5 + $0x7f0] sm:$0xff]
    %v437 = vld [vmem:[#allocation5 + $0x7f8] sm:$0xf]
    %v438 = vld [vmem:[#allocation5 + $0x7fc] sm:$0xff]
    %v439 = vld [vmem:[#allocation5 + $0x804] sm:$0xff]
    %v440 = vld [vmem:[#allocation5 + $0x80c] sm:$0xff]
    %v441 = vld [vmem:[#allocation5 + $0x814] sm:$0xf]
    %v442 = vld [vmem:[#allocation5 + $0x818] sm:$0xff]
    %v443 = vld [vmem:[#allocation5 + $0x820] sm:$0xff]
    %v444 = vld [vmem:[#allocation5 + $0x828] sm:$0xff]
    %v445 = vld [vmem:[#allocation5 + $0x830] sm:$0xf]
    %v446 = vld [vmem:[#allocation5 + $0x834] sm:$0xff]
    %v447 = vld [vmem:[#allocation5 + $0x83c] sm:$0xff]
    %v448 = vld [vmem:[#allocation5 + $0x844] sm:$0xff]
    %v449 = vld [vmem:[#allocation5 + $0x84c] sm:$0xf]
    %v450 = vld [vmem:[#allocation5 + $0x850] sm:$0xff]
    %v451 = vld [vmem:[#allocation5 + $0x858] sm:$0xff]
    %v452 = vld [vmem:[#allocation5 + $0x860] sm:$0xff]
    %v453 = vld [vmem:[#allocation5 + $0x868] sm:$0xf]
    %v454 = vld [vmem:[#allocation5 + $0x86c] sm:$0xff]
    %v455 = vld [vmem:[#allocation5 + $0x874] sm:$0xff]
    %v456 = vld [vmem:[#allocation5 + $0x87c] sm:$0xff]
    %v457 = vld [vmem:[#allocation5 + $0x884] sm:$0xf]
    %v458 = vld [vmem:[#allocation5 + $0x888] sm:$0xff]
    %v459 = vld [vmem:[#allocation5 + $0x890] sm:$0xff]
    %v460 = vld [vmem:[#allocation5 + $0x898] sm:$0xff]
    %v461 = vld [vmem:[#allocation5 + $0x8a0] sm:$0xf]
    %v462 = vld [vmem:[#allocation5 + $0x8a4] sm:$0xff]
    %v463 = vld [vmem:[#allocation5 + $0x8ac] sm:$0xff]
    %v464 = vld [vmem:[#allocation5 + $0x8b4] sm:$0xff]
    %v465 = vld [vmem:[#allocation5 + $0x8bc] sm:$0xf]
    %v466 = vld [vmem:[#allocation5 + $0x8c0] sm:$0xff]
    %v467 = vld [vmem:[#allocation5 + $0x8c8] sm:$0xff]
    %v468 = vld [vmem:[#allocation5 + $0x8d0] sm:$0xff]
    %v469 = vld [vmem:[#allocation5 + $0x8d8] sm:$0xf]
    %v470 = vld [vmem:[#allocation5 + $0x8dc] sm:$0xff]
    %v471 = vld [vmem:[#allocation5 + $0x8e4] sm:$0xff]
    %v472 = vld [vmem:[#allocation5 + $0x8ec] sm:$0xff]
    %v473 = vld [vmem:[#allocation5 + $0x8f4] sm:$0xf]
    %v474 = vld [vmem:[#allocation5 + $0x8f8] sm:$0xff]
    %v475 = vld [vmem:[#allocation5 + $0x900] sm:$0xff]
    %v476 = vld [vmem:[#allocation5 + $0x908] sm:$0xff]
    %v477 = vld [vmem:[#allocation5 + $0x910] sm:$0xf]
    %v478 = vld [vmem:[#allocation5 + $0x914] sm:$0xff]
    %v479 = vld [vmem:[#allocation5 + $0x91c] sm:$0xff]
    %v480 = vld [vmem:[#allocation5 + $0x924] sm:$0xff]
    %v481 = vld [vmem:[#allocation5 + $0x92c] sm:$0xf]
    %v482 = vld [vmem:[#allocation5 + $0x930] sm:$0xff]
    %v483 = vld [vmem:[#allocation5 + $0x938] sm:$0xff]
    %v484 = vld [vmem:[#allocation5 + $0x940] sm:$0xff]
    %v485 = vld [vmem:[#allocation5 + $0x948] sm:$0xf]
    %v486 = vld [vmem:[#allocation5 + $0x94c] sm:$0xff]
    %v487 = vld [vmem:[#allocation5 + $0x954] sm:$0xff]
    %v488 = vld [vmem:[#allocation5 + $0x95c] sm:$0xff]
    %v489 = vld [vmem:[#allocation5 + $0x964] sm:$0xf]
    %v490 = vld [vmem:[#allocation5 + $0x968] sm:$0xff]
    %v491 = vld [vmem:[#allocation5 + $0x970] sm:$0xff]
    %v492 = vld [vmem:[#allocation5 + $0x978] sm:$0xff]
    %v493 = vld [vmem:[#allocation5 + $0x980] sm:$0xf]
    %v494 = vld [vmem:[#allocation5 + $0x984] sm:$0xff]
    %v495 = vld [vmem:[#allocation5 + $0x98c] sm:$0xff]
    %v496 = vld [vmem:[#allocation5 + $0x994] sm:$0xff]
    %v497 = vld [vmem:[#allocation5 + $0x99c] sm:$0xf]
    %v498 = vld [vmem:[#allocation5 + $0x9a0] sm:$0xff]
    %v499 = vld [vmem:[#allocation5 + $0x9a8] sm:$0xff]
    %v500 = vld [vmem:[#allocation5 + $0x9b0] sm:$0xff]
    %v501 = vld [vmem:[#allocation5 + $0x9b8] sm:$0xf]
    %v502 = vld [vmem:[#allocation5 + $0x9bc] sm:$0xff]
    %v503 = vld [vmem:[#allocation5 + $0x9c4] sm:$0xff]
    %v504 = vld [vmem:[#allocation5 + $0x9cc] sm:$0xff]
    %v505 = vld [vmem:[#allocation5 + $0x9d4] sm:$0xf]
    %v506 = vld [vmem:[#allocation5 + $0x9d8] sm:$0xff]
    %v507 = vld [vmem:[#allocation5 + $0x9e0] sm:$0xff]
    %v508 = vld [vmem:[#allocation5 + $0x9e8] sm:$0xff]
    %v509 = vld [vmem:[#allocation5 + $0x9f0] sm:$0xf]
    %v510 = vld [vmem:[#allocation5 + $0x9f4] sm:$0xff]
    %v511 = vld [vmem:[#allocation5 + $0x9fc] sm:$0xff]
    %v512 = vld [vmem:[#allocation5 + $0xa04] sm:$0xff]
    %v513 = vld [vmem:[#allocation5 + $0xa0c] sm:$0xf]
    %v514 = vld [vmem:[#allocation5 + $0xa10] sm:$0xff]
    %v515 = vld [vmem:[#allocation5 + $0xa18] sm:$0xff]
    %v516 = vld [vmem:[#allocation5 + $0xa20] sm:$0xff]
    %v517 = vld [vmem:[#allocation5 + $0xa28] sm:$0xf]
    %v518 = vld [vmem:[#allocation5 + $0xa2c] sm:$0xff]
    %v519 = vld [vmem:[#allocation5 + $0xa34] sm:$0xff]
    %v520 = vld [vmem:[#allocation5 + $0xa3c] sm:$0xff]
    %v521 = vld [vmem:[#allocation5 + $0xa44] sm:$0xf]
    %v522 = vld [vmem:[#allocation5 + $0xa48] sm:$0xff]
    %v523 = vld [vmem:[#allocation5 + $0xa50] sm:$0xff]
    %v524 = vld [vmem:[#allocation5 + $0xa58] sm:$0xff]
    %v525 = vld [vmem:[#allocation5 + $0xa60] sm:$0xf]
    %v526 = vld [vmem:[#allocation5 + $0xa64] sm:$0xff]
    %v527 = vld [vmem:[#allocation5 + $0xa6c] sm:$0xff]
    %v528 = vld [vmem:[#allocation5 + $0xa74] sm:$0xff]
    %v529 = vld [vmem:[#allocation5 + $0xa7c] sm:$0xf]
    %v530 = vld [vmem:[#allocation5 + $0xa80] sm:$0xff]
    %v531 = vld [vmem:[#allocation5 + $0xa88] sm:$0xff]
    %v532 = vld [vmem:[#allocation5 + $0xa90] sm:$0xff]
    %v533 = vld [vmem:[#allocation5 + $0xa98] sm:$0xf]
    %v534 = vld [vmem:[#allocation5 + $0xa9c] sm:$0xff]
    %v535 = vld [vmem:[#allocation5 + $0xaa4] sm:$0xff]
    %v536 = vld [vmem:[#allocation5 + $0xaac] sm:$0xff]
    %v537 = vld [vmem:[#allocation5 + $0xab4] sm:$0xf]
    %v538 = vld [vmem:[#allocation7] sm:$0x7f]
    %v540 = vlaneseq
    %v541 = vshrl.u32 %v540, 7
    %v542 = vsub.s32 0, %v541
    %v543 = vrot.slane %v538, %v542
    %v544 = vlaneseq
    %v545 = vshrl.u32 %v544, 7
    %v546 = vsub.s32 1, %v545
    %v547 = vrot.slane %v538, %v546
    %v548 = vlaneseq
    %v549 = vshrl.u32 %v548, 7
    %v550 = vsub.s32 2, %v549
    %v551 = vrot.slane %v538, %v550
    %v552 = vlaneseq
    %v553 = vshrl.u32 %v552, 7
    %v554 = vsub.s32 3, %v553
    %v555 = vrot.slane %v538, %v554
    %v556 = vlaneseq
    %v557 = vshrl.u32 %v556, 7
    %v558 = vsub.s32 4, %v557
    %v559 = vrot.slane %v538, %v558
    %v560 = vlaneseq
    %v561 = vshrl.u32 %v560, 7
    %v562 = vsub.s32 5, %v561
    %v563 = vrot.slane %v538, %v562
    %v564 = vlaneseq
    %v565 = vshrl.u32 %v564, 7
    %v566 = vsub.s32 6, %v565
    %v567 = vrot.slane %v538, %v566
    %v967 = vunpack.c.l.b16 %v146
    %v968 = vunpack.c.h.b16 %v146
    %v969 = vunpack.c.l.b16 %v147
    %v970 = vunpack.c.h.b16 %v147
    %v971 = vunpack.c.l.b16 %v148
    %v972 = vunpack.c.h.b16 %v148
    %v973 = vunpack.c.l.b16 %v149
    %v974 = vunpack.c.l.b16 %v150
    %v975 = vunpack.c.h.b16 %v150
    %v976 = vunpack.c.l.b16 %v151
    %v977 = vunpack.c.h.b16 %v151
    %v978 = vunpack.c.l.b16 %v152
    %v979 = vunpack.c.h.b16 %v152
    %v980 = vunpack.c.l.b16 %v153
    %v981 = vunpack.c.l.b16 %v154
    %v982 = vunpack.c.h.b16 %v154
    %v983 = vunpack.c.l.b16 %v155
    %v984 = vunpack.c.h.b16 %v155
    %v985 = vunpack.c.l.b16 %v156
    %v986 = vunpack.c.h.b16 %v156
    %v987 = vunpack.c.l.b16 %v157
    %v988 = vunpack.c.l.b16 %v158
    %v989 = vunpack.c.h.b16 %v158
    %v990 = vunpack.c.l.b16 %v159
    %v991 = vunpack.c.h.b16 %v159
    %v992 = vunpack.c.l.b16 %v160
    %v993 = vunpack.c.h.b16 %v160
    %v994 = vunpack.c.l.b16 %v161
    %v995 = vunpack.c.l.b16 %v162
    %v996 = vunpack.c.h.b16 %v162
    %v997 = vunpack.c.l.b16 %v163
    %v998 = vunpack.c.h.b16 %v163
    %v999 = vunpack.c.l.b16 %v164
    %v1000 = vunpack.c.h.b16 %v164
    %v1001 = vunpack.c.l.b16 %v165
    %v1002 = vunpack.c.l.b16 %v166
    %v1003 = vunpack.c.h.b16 %v166
    %v1004 = vunpack.c.l.b16 %v167
    %v1005 = vunpack.c.h.b16 %v167
    %v1006 = vunpack.c.l.b16 %v168
    %v1007 = vunpack.c.h.b16 %v168
    %v1008 = vunpack.c.l.b16 %v169
    %v1009 = vunpack.c.l.b16 %v170
    %v1010 = vunpack.c.h.b16 %v170
    %v1011 = vunpack.c.l.b16 %v171
    %v1012 = vunpack.c.h.b16 %v171
    %v1013 = vunpack.c.l.b16 %v172
    %v1014 = vunpack.c.h.b16 %v172
    %v1015 = vunpack.c.l.b16 %v173
    %v1016 = vunpack.c.l.b16 %v174
    %v1017 = vunpack.c.h.b16 %v174
    %v1018 = vunpack.c.l.b16 %v175
    %v1019 = vunpack.c.h.b16 %v175
    %v1020 = vunpack.c.l.b16 %v176
    %v1021 = vunpack.c.h.b16 %v176
    %v1022 = vunpack.c.l.b16 %v177
    %v1023 = vunpack.c.l.b16 %v178
    %v1024 = vunpack.c.h.b16 %v178
    %v1025 = vunpack.c.l.b16 %v179
    %v1026 = vunpack.c.h.b16 %v179
    %v1027 = vunpack.c.l.b16 %v180
    %v1028 = vunpack.c.h.b16 %v180
    %v1029 = vunpack.c.l.b16 %v181
    %v1030 = vunpack.c.l.b16 %v182
    %v1031 = vunpack.c.h.b16 %v182
    %v1032 = vunpack.c.l.b16 %v183
    %v1033 = vunpack.c.h.b16 %v183
    %v1034 = vunpack.c.l.b16 %v184
    %v1035 = vunpack.c.h.b16 %v184
    %v1036 = vunpack.c.l.b16 %v185
    %v1037 = vunpack.c.l.b16 %v186
    %v1038 = vunpack.c.h.b16 %v186
    %v1039 = vunpack.c.l.b16 %v187
    %v1040 = vunpack.c.h.b16 %v187
    %v1041 = vunpack.c.l.b16 %v188
    %v1042 = vunpack.c.h.b16 %v188
    %v1043 = vunpack.c.l.b16 %v189
    %v1044 = vunpack.c.l.b16 %v190
    %v1045 = vunpack.c.h.b16 %v190
    %v1046 = vunpack.c.l.b16 %v191
    %v1047 = vunpack.c.h.b16 %v191
    %v1048 = vunpack.c.l.b16 %v192
    %v1049 = vunpack.c.h.b16 %v192
    %v1050 = vunpack.c.l.b16 %v193
    %v1051 = vunpack.c.l.b16 %v194
    %v1052 = vunpack.c.h.b16 %v194
    %v1053 = vunpack.c.l.b16 %v195
    %v1054 = vunpack.c.h.b16 %v195
    %v1055 = vunpack.c.l.b16 %v196
    %v1056 = vunpack.c.h.b16 %v196
    %v1057 = vunpack.c.l.b16 %v197
    %v1058 = vunpack.c.l.b16 %v198
    %v1059 = vunpack.c.h.b16 %v198
    %v1060 = vunpack.c.l.b16 %v199
    %v1061 = vunpack.c.h.b16 %v199
    %v1062 = vunpack.c.l.b16 %v200
    %v1063 = vunpack.c.h.b16 %v200
    %v1064 = vunpack.c.l.b16 %v201
    %v1065 = vunpack.c.l.b16 %v202
    %v1066 = vunpack.c.h.b16 %v202
    %v1067 = vunpack.c.l.b16 %v203
    %v1068 = vunpack.c.h.b16 %v203
    %v1069 = vunpack.c.l.b16 %v204
    %v1070 = vunpack.c.h.b16 %v204
    %v1071 = vunpack.c.l.b16 %v205
    %v1072 = vunpack.c.l.b16 %v206
    %v1073 = vunpack.c.h.b16 %v206
    %v1074 = vunpack.c.l.b16 %v207
    %v1075 = vunpack.c.h.b16 %v207
    %v1076 = vunpack.c.l.b16 %v208
    %v1077 = vunpack.c.h.b16 %v208
    %v1078 = vunpack.c.l.b16 %v209
    %v1079 = vunpack.c.l.b16 %v210
    %v1080 = vunpack.c.h.b16 %v210
    %v1081 = vunpack.c.l.b16 %v211
    %v1082 = vunpack.c.h.b16 %v211
    %v1083 = vunpack.c.l.b16 %v212
    %v1084 = vunpack.c.h.b16 %v212
    %v1085 = vunpack.c.l.b16 %v213
    %v1086 = vunpack.c.l.b16 %v214
    %v1087 = vunpack.c.h.b16 %v214
    %v1088 = vunpack.c.l.b16 %v215
    %v1089 = vunpack.c.h.b16 %v215
    %v1090 = vunpack.c.l.b16 %v216
    %v1091 = vunpack.c.h.b16 %v216
    %v1092 = vunpack.c.l.b16 %v217
    %v1093 = vunpack.c.l.b16 %v218
    %v1094 = vunpack.c.h.b16 %v218
    %v1095 = vunpack.c.l.b16 %v219
    %v1096 = vunpack.c.h.b16 %v219
    %v1097 = vunpack.c.l.b16 %v220
    %v1098 = vunpack.c.h.b16 %v220
    %v1099 = vunpack.c.l.b16 %v221
    %v1100 = vunpack.c.l.b16 %v222
    %v1101 = vunpack.c.h.b16 %v222
    %v1102 = vunpack.c.l.b16 %v223
    %v1103 = vunpack.c.h.b16 %v223
    %v1104 = vunpack.c.l.b16 %v224
    %v1105 = vunpack.c.h.b16 %v224
    %v1106 = vunpack.c.l.b16 %v225
    %v1107 = vunpack.c.l.b16 %v226
    %v1108 = vunpack.c.h.b16 %v226
    %v1109 = vunpack.c.l.b16 %v227
    %v1110 = vunpack.c.h.b16 %v227
    %v1111 = vunpack.c.l.b16 %v228
    %v1112 = vunpack.c.h.b16 %v228
    %v1113 = vunpack.c.l.b16 %v229
    %v1114 = vunpack.c.l.b16 %v230
    %v1115 = vunpack.c.h.b16 %v230
    %v1116 = vunpack.c.l.b16 %v231
    %v1117 = vunpack.c.h.b16 %v231
    %v1118 = vunpack.c.l.b16 %v232
    %v1119 = vunpack.c.h.b16 %v232
    %v1120 = vunpack.c.l.b16 %v233
    %v1121 = vunpack.c.l.b16 %v234
    %v1122 = vunpack.c.h.b16 %v234
    %v1123 = vunpack.c.l.b16 %v235
    %v1124 = vunpack.c.h.b16 %v235
    %v1125 = vunpack.c.l.b16 %v236
    %v1126 = vunpack.c.h.b16 %v236
    %v1127 = vunpack.c.l.b16 %v237
    %v1128 = vunpack.c.l.b16 %v238
    %v1129 = vunpack.c.h.b16 %v238
    %v1130 = vunpack.c.l.b16 %v239
    %v1131 = vunpack.c.h.b16 %v239
    %v1132 = vunpack.c.l.b16 %v240
    %v1133 = vunpack.c.h.b16 %v240
    %v1134 = vunpack.c.l.b16 %v241
    %v1135 = vunpack.c.l.b16 %v242
    %v1136 = vunpack.c.h.b16 %v242
    %v1137 = vunpack.c.l.b16 %v243
    %v1138 = vunpack.c.h.b16 %v243
    %v1139 = vunpack.c.l.b16 %v244
    %v1140 = vunpack.c.h.b16 %v244
    %v1141 = vunpack.c.l.b16 %v245
    %v1142 = vunpack.c.l.b16 %v246
    %v1143 = vunpack.c.h.b16 %v246
    %v1144 = vunpack.c.l.b16 %v247
    %v1145 = vunpack.c.h.b16 %v247
    %v1146 = vunpack.c.l.b16 %v248
    %v1147 = vunpack.c.h.b16 %v248
    %v1148 = vunpack.c.l.b16 %v249
    %v1149 = vunpack.c.l.b16 %v250
    %v1150 = vunpack.c.h.b16 %v250
    %v1151 = vunpack.c.l.b16 %v251
    %v1152 = vunpack.c.h.b16 %v251
    %v1153 = vunpack.c.l.b16 %v252
    %v1154 = vunpack.c.h.b16 %v252
    %v1155 = vunpack.c.l.b16 %v253
    %v1156 = vunpack.c.l.b16 %v254
    %v1157 = vunpack.c.h.b16 %v254
    %v1158 = vunpack.c.l.b16 %v255
    %v1159 = vunpack.c.h.b16 %v255
    %v1160 = vunpack.c.l.b16 %v256
    %v1161 = vunpack.c.h.b16 %v256
    %v1162 = vunpack.c.l.b16 %v257
    %v1163 = vunpack.c.l.b16 %v258
    %v1164 = vunpack.c.h.b16 %v258
    %v1165 = vunpack.c.l.b16 %v259
    %v1166 = vunpack.c.h.b16 %v259
    %v1167 = vunpack.c.l.b16 %v260
    %v1168 = vunpack.c.h.b16 %v260
    %v1169 = vunpack.c.l.b16 %v261
    %v1170 = vunpack.c.l.b16 %v262
    %v1171 = vunpack.c.h.b16 %v262
    %v1172 = vunpack.c.l.b16 %v263
    %v1173 = vunpack.c.h.b16 %v263
    %v1174 = vunpack.c.l.b16 %v264
    %v1175 = vunpack.c.h.b16 %v264
    %v1176 = vunpack.c.l.b16 %v265
    %v1177 = vunpack.c.l.b16 %v266
    %v1178 = vunpack.c.h.b16 %v266
    %v1179 = vunpack.c.l.b16 %v267
    %v1180 = vunpack.c.h.b16 %v267
    %v1181 = vunpack.c.l.b16 %v268
    %v1182 = vunpack.c.h.b16 %v268
    %v1183 = vunpack.c.l.b16 %v269
    %v1184 = vunpack.c.l.b16 %v270
    %v1185 = vunpack.c.h.b16 %v270
    %v1186 = vunpack.c.l.b16 %v271
    %v1187 = vunpack.c.h.b16 %v271
    %v1188 = vunpack.c.l.b16 %v272
    %v1189 = vunpack.c.h.b16 %v272
    %v1190 = vunpack.c.l.b16 %v273
    %v1191 = vunpack.c.l.b16 %v274
    %v1192 = vunpack.c.h.b16 %v274
    %v1193 = vunpack.c.l.b16 %v275
    %v1194 = vunpack.c.h.b16 %v275
    %v1195 = vunpack.c.l.b16 %v276
    %v1196 = vunpack.c.h.b16 %v276
    %v1197 = vunpack.c.l.b16 %v277
    %v1198 = vunpack.c.l.b16 %v278
    %v1199 = vunpack.c.h.b16 %v278
    %v1200 = vunpack.c.l.b16 %v279
    %v1201 = vunpack.c.h.b16 %v279
    %v1202 = vunpack.c.l.b16 %v280
    %v1203 = vunpack.c.h.b16 %v280
    %v1204 = vunpack.c.l.b16 %v281
    %v1205 = vunpack.c.l.b16 %v282
    %v1206 = vunpack.c.h.b16 %v282
    %v1207 = vunpack.c.l.b16 %v283
    %v1208 = vunpack.c.h.b16 %v283
    %v1209 = vunpack.c.l.b16 %v284
    %v1210 = vunpack.c.h.b16 %v284
    %v1211 = vunpack.c.l.b16 %v285
    %v1212 = vunpack.c.l.b16 %v286
    %v1213 = vunpack.c.h.b16 %v286
    %v1214 = vunpack.c.l.b16 %v287
    %v1215 = vunpack.c.h.b16 %v287
    %v1216 = vunpack.c.l.b16 %v288
    %v1217 = vunpack.c.h.b16 %v288
    %v1218 = vunpack.c.l.b16 %v289
    %v1219 = vunpack.c.l.b16 %v290
    %v1220 = vunpack.c.h.b16 %v290
    %v1221 = vunpack.c.l.b16 %v291
    %v1222 = vunpack.c.h.b16 %v291
    %v1223 = vunpack.c.l.b16 %v292
    %v1224 = vunpack.c.h.b16 %v292
    %v1225 = vunpack.c.l.b16 %v293
    %v1226 = vunpack.c.l.b16 %v294
    %v1227 = vunpack.c.h.b16 %v294
    %v1228 = vunpack.c.l.b16 %v295
    %v1229 = vunpack.c.h.b16 %v295
    %v1230 = vunpack.c.l.b16 %v296
    %v1231 = vunpack.c.h.b16 %v296
    %v1232 = vunpack.c.l.b16 %v297
    %v1233 = vunpack.c.l.b16 %v298
    %v1234 = vunpack.c.h.b16 %v298
    %v1235 = vunpack.c.l.b16 %v299
    %v1236 = vunpack.c.h.b16 %v299
    %v1237 = vunpack.c.l.b16 %v300
    %v1238 = vunpack.c.h.b16 %v300
    %v1239 = vunpack.c.l.b16 %v301
    %v1240 = vunpack.c.l.b16 %v302
    %v1241 = vunpack.c.h.b16 %v302
    %v1242 = vunpack.c.l.b16 %v303
    %v1243 = vunpack.c.h.b16 %v303
    %v1244 = vunpack.c.l.b16 %v304
    %v1245 = vunpack.c.h.b16 %v304
    %v1246 = vunpack.c.l.b16 %v305
    %v1247 = vunpack.c.l.b16 %v306
    %v1248 = vunpack.c.h.b16 %v306
    %v1249 = vunpack.c.l.b16 %v307
    %v1250 = vunpack.c.h.b16 %v307
    %v1251 = vunpack.c.l.b16 %v308
    %v1252 = vunpack.c.h.b16 %v308
    %v1253 = vunpack.c.l.b16 %v309
    %v1254 = vunpack.c.l.b16 %v310
    %v1255 = vunpack.c.h.b16 %v310
    %v1256 = vunpack.c.l.b16 %v311
    %v1257 = vunpack.c.h.b16 %v311
    %v1258 = vunpack.c.l.b16 %v312
    %v1259 = vunpack.c.h.b16 %v312
    %v1260 = vunpack.c.l.b16 %v313
    %v1261 = vunpack.c.l.b16 %v314
    %v1262 = vunpack.c.h.b16 %v314
    %v1263 = vunpack.c.l.b16 %v315
    %v1264 = vunpack.c.h.b16 %v315
    %v1265 = vunpack.c.l.b16 %v316
    %v1266 = vunpack.c.h.b16 %v316
    %v1267 = vunpack.c.l.b16 %v317
    %v1268 = vunpack.c.l.b16 %v318
    %v1269 = vunpack.c.h.b16 %v318
    %v1270 = vunpack.c.l.b16 %v319
    %v1271 = vunpack.c.h.b16 %v319
    %v1272 = vunpack.c.l.b16 %v320
    %v1273 = vunpack.c.h.b16 %v320
    %v1274 = vunpack.c.l.b16 %v321
    %v1275 = vunpack.c.l.b16 %v322
    %v1276 = vunpack.c.h.b16 %v322
    %v1277 = vunpack.c.l.b16 %v323
    %v1278 = vunpack.c.h.b16 %v323
    %v1279 = vunpack.c.l.b16 %v324
    %v1280 = vunpack.c.h.b16 %v324
    %v1281 = vunpack.c.l.b16 %v325
    %v1282 = vunpack.c.l.b16 %v326
    %v1283 = vunpack.c.h.b16 %v326
    %v1284 = vunpack.c.l.b16 %v327
    %v1285 = vunpack.c.h.b16 %v327
    %v1286 = vunpack.c.l.b16 %v328
    %v1287 = vunpack.c.h.b16 %v328
    %v1288 = vunpack.c.l.b16 %v329
    %v1289 = vunpack.c.l.b16 %v330
    %v1290 = vunpack.c.h.b16 %v330
    %v1291 = vunpack.c.l.b16 %v331
    %v1292 = vunpack.c.h.b16 %v331
    %v1293 = vunpack.c.l.b16 %v332
    %v1294 = vunpack.c.h.b16 %v332
    %v1295 = vunpack.c.l.b16 %v333
    %v1296 = vunpack.c.l.b16 %v334
    %v1297 = vunpack.c.h.b16 %v334
    %v1298 = vunpack.c.l.b16 %v335
    %v1299 = vunpack.c.h.b16 %v335
    %v1300 = vunpack.c.l.b16 %v336
    %v1301 = vunpack.c.h.b16 %v336
    %v1302 = vunpack.c.l.b16 %v337
    %v1303 = vunpack.c.l.b16 %v338
    %v1304 = vunpack.c.h.b16 %v338
    %v1305 = vunpack.c.l.b16 %v339
    %v1306 = vunpack.c.h.b16 %v339
    %v1307 = vunpack.c.l.b16 %v340
    %v1308 = vunpack.c.h.b16 %v340
    %v1309 = vunpack.c.l.b16 %v341
    %v1310 = vunpack.c.l.b16 %v342
    %v1311 = vunpack.c.h.b16 %v342
    %v1312 = vunpack.c.l.b16 %v343
    %v1313 = vunpack.c.h.b16 %v343
    %v1314 = vunpack.c.l.b16 %v344
    %v1315 = vunpack.c.h.b16 %v344
    %v1316 = vunpack.c.l.b16 %v345
    %v1317 = vunpack.c.l.b16 %v346
    %v1318 = vunpack.c.h.b16 %v346
    %v1319 = vunpack.c.l.b16 %v347
    %v1320 = vunpack.c.h.b16 %v347
    %v1321 = vunpack.c.l.b16 %v348
    %v1322 = vunpack.c.h.b16 %v348
    %v1323 = vunpack.c.l.b16 %v349
    %v1324 = vunpack.c.l.b16 %v350
    %v1325 = vunpack.c.h.b16 %v350
    %v1326 = vunpack.c.l.b16 %v351
    %v1327 = vunpack.c.h.b16 %v351
    %v1328 = vunpack.c.l.b16 %v352
    %v1329 = vunpack.c.h.b16 %v352
    %v1330 = vunpack.c.l.b16 %v353
    %v1331 = vunpack.c.l.b16 %v354
    %v1332 = vunpack.c.h.b16 %v354
    %v1333 = vunpack.c.l.b16 %v355
    %v1334 = vunpack.c.h.b16 %v355
    %v1335 = vunpack.c.l.b16 %v356
    %v1336 = vunpack.c.h.b16 %v356
    %v1337 = vunpack.c.l.b16 %v357
    %v1338 = vunpack.c.l.b16 %v358
    %v1339 = vunpack.c.h.b16 %v358
    %v1340 = vunpack.c.l.b16 %v359
    %v1341 = vunpack.c.h.b16 %v359
    %v1342 = vunpack.c.l.b16 %v360
    %v1343 = vunpack.c.h.b16 %v360
    %v1344 = vunpack.c.l.b16 %v361
    %v1345 = vunpack.c.l.b16 %v362
    %v1346 = vunpack.c.h.b16 %v362
    %v1347 = vunpack.c.l.b16 %v363
    %v1348 = vunpack.c.h.b16 %v363
    %v1349 = vunpack.c.l.b16 %v364
    %v1350 = vunpack.c.h.b16 %v364
    %v1351 = vunpack.c.l.b16 %v365
    %v1352 = vunpack.c.l.b16 %v366
    %v1353 = vunpack.c.h.b16 %v366
    %v1354 = vunpack.c.l.b16 %v367
    %v1355 = vunpack.c.h.b16 %v367
    %v1356 = vunpack.c.l.b16 %v368
    %v1357 = vunpack.c.h.b16 %v368
    %v1358 = vunpack.c.l.b16 %v369
    %v1359 = vunpack.c.l.b16 %v370
    %v1360 = vunpack.c.h.b16 %v370
    %v1361 = vunpack.c.l.b16 %v371
    %v1362 = vunpack.c.h.b16 %v371
    %v1363 = vunpack.c.l.b16 %v372
    %v1364 = vunpack.c.h.b16 %v372
    %v1365 = vunpack.c.l.b16 %v373
    %v1366 = vunpack.c.l.b16 %v374
    %v1367 = vunpack.c.h.b16 %v374
    %v1368 = vunpack.c.l.b16 %v375
    %v1369 = vunpack.c.h.b16 %v375
    %v1370 = vunpack.c.l.b16 %v376
    %v1371 = vunpack.c.h.b16 %v376
    %v1372 = vunpack.c.l.b16 %v377
    %v1373 = vunpack.c.l.b16 %v378
    %v1374 = vunpack.c.h.b16 %v378
    %v1375 = vunpack.c.l.b16 %v379
    %v1376 = vunpack.c.h.b16 %v379
    %v1377 = vunpack.c.l.b16 %v380
    %v1378 = vunpack.c.h.b16 %v380
    %v1379 = vunpack.c.l.b16 %v381
    %v1380 = vunpack.c.l.b16 %v382
    %v1381 = vunpack.c.h.b16 %v382
    %v1382 = vunpack.c.l.b16 %v383
    %v1383 = vunpack.c.h.b16 %v383
    %v1384 = vunpack.c.l.b16 %v384
    %v1385 = vunpack.c.h.b16 %v384
    %v1386 = vunpack.c.l.b16 %v385
    %v1387 = vunpack.c.l.b16 %v386
    %v1388 = vunpack.c.h.b16 %v386
    %v1389 = vunpack.c.l.b16 %v387
    %v1390 = vunpack.c.h.b16 %v387
    %v1391 = vunpack.c.l.b16 %v388
    %v1392 = vunpack.c.h.b16 %v388
    %v1393 = vunpack.c.l.b16 %v389
    %v1394 = vunpack.c.l.b16 %v390
    %v1395 = vunpack.c.h.b16 %v390
    %v1396 = vunpack.c.l.b16 %v391
    %v1397 = vunpack.c.h.b16 %v391
    %v1398 = vunpack.c.l.b16 %v392
    %v1399 = vunpack.c.h.b16 %v392
    %v1400 = vunpack.c.l.b16 %v393
    %v1401 = vunpack.c.l.b16 %v394
    %v1402 = vunpack.c.h.b16 %v394
    %v1403 = vunpack.c.l.b16 %v395
    %v1404 = vunpack.c.h.b16 %v395
    %v1405 = vunpack.c.l.b16 %v396
    %v1406 = vunpack.c.h.b16 %v396
    %v1407 = vunpack.c.l.b16 %v397
    %v1408 = vunpack.c.l.b16 %v398
    %v1409 = vunpack.c.h.b16 %v398
    %v1410 = vunpack.c.l.b16 %v399
    %v1411 = vunpack.c.h.b16 %v399
    %v1412 = vunpack.c.l.b16 %v400
    %v1413 = vunpack.c.h.b16 %v400
    %v1414 = vunpack.c.l.b16 %v401
    %v1415 = vunpack.c.l.b16 %v402
    %v1416 = vunpack.c.h.b16 %v402
    %v1417 = vunpack.c.l.b16 %v403
    %v1418 = vunpack.c.h.b16 %v403
    %v1419 = vunpack.c.l.b16 %v404
    %v1420 = vunpack.c.h.b16 %v404
    %v1421 = vunpack.c.l.b16 %v405
    %v1422 = vunpack.c.l.b16 %v406
    %v1423 = vunpack.c.h.b16 %v406
    %v1424 = vunpack.c.l.b16 %v407
    %v1425 = vunpack.c.h.b16 %v407
    %v1426 = vunpack.c.l.b16 %v408
    %v1427 = vunpack.c.h.b16 %v408
    %v1428 = vunpack.c.l.b16 %v409
    %v1429 = vunpack.c.l.b16 %v410
    %v1430 = vunpack.c.h.b16 %v410
    %v1431 = vunpack.c.l.b16 %v411
    %v1432 = vunpack.c.h.b16 %v411
    %v1433 = vunpack.c.l.b16 %v412
    %v1434 = vunpack.c.h.b16 %v412
    %v1435 = vunpack.c.l.b16 %v413
    %v1436 = vunpack.c.l.b16 %v414
    %v1437 = vunpack.c.h.b16 %v414
    %v1438 = vunpack.c.l.b16 %v415
    %v1439 = vunpack.c.h.b16 %v415
    %v1440 = vunpack.c.l.b16 %v416
    %v1441 = vunpack.c.h.b16 %v416
    %v1442 = vunpack.c.l.b16 %v417
    %v1443 = vunpack.c.l.b16 %v418
    %v1444 = vunpack.c.h.b16 %v418
    %v1445 = vunpack.c.l.b16 %v419
    %v1446 = vunpack.c.h.b16 %v419
    %v1447 = vunpack.c.l.b16 %v420
    %v1448 = vunpack.c.h.b16 %v420
    %v1449 = vunpack.c.l.b16 %v421
    %v1450 = vunpack.c.l.b16 %v422
    %v1451 = vunpack.c.h.b16 %v422
    %v1452 = vunpack.c.l.b16 %v423
    %v1453 = vunpack.c.h.b16 %v423
    %v1454 = vunpack.c.l.b16 %v424
    %v1455 = vunpack.c.h.b16 %v424
    %v1456 = vunpack.c.l.b16 %v425
    %v1457 = vunpack.c.l.b16 %v426
    %v1458 = vunpack.c.h.b16 %v426
    %v1459 = vunpack.c.l.b16 %v427
    %v1460 = vunpack.c.h.b16 %v427
    %v1461 = vunpack.c.l.b16 %v428
    %v1462 = vunpack.c.h.b16 %v428
    %v1463 = vunpack.c.l.b16 %v429
    %v1464 = vunpack.c.l.b16 %v430
    %v1465 = vunpack.c.h.b16 %v430
    %v1466 = vunpack.c.l.b16 %v431
    %v1467 = vunpack.c.h.b16 %v431
    %v1468 = vunpack.c.l.b16 %v432
    %v1469 = vunpack.c.h.b16 %v432
    %v1470 = vunpack.c.l.b16 %v433
    %v1471 = vunpack.c.l.b16 %v434
    %v1472 = vunpack.c.h.b16 %v434
    %v1473 = vunpack.c.l.b16 %v435
    %v1474 = vunpack.c.h.b16 %v435
    %v1475 = vunpack.c.l.b16 %v436
    %v1476 = vunpack.c.h.b16 %v436
    %v1477 = vunpack.c.l.b16 %v437
    %v1478 = vunpack.c.l.b16 %v438
    %v1479 = vunpack.c.h.b16 %v438
    %v1480 = vunpack.c.l.b16 %v439
    %v1481 = vunpack.c.h.b16 %v439
    %v1482 = vunpack.c.l.b16 %v440
    %v1483 = vunpack.c.h.b16 %v440
    %v1484 = vunpack.c.l.b16 %v441
    %v1485 = vunpack.c.l.b16 %v442
    %v1486 = vunpack.c.h.b16 %v442
    %v1487 = vunpack.c.l.b16 %v443
    %v1488 = vunpack.c.h.b16 %v443
    %v1489 = vunpack.c.l.b16 %v444
    %v1490 = vunpack.c.h.b16 %v444
    %v1491 = vunpack.c.l.b16 %v445
    %v1492 = vunpack.c.l.b16 %v446
    %v1493 = vunpack.c.h.b16 %v446
    %v1494 = vunpack.c.l.b16 %v447
    %v1495 = vunpack.c.h.b16 %v447
    %v1496 = vunpack.c.l.b16 %v448
    %v1497 = vunpack.c.h.b16 %v448
    %v1498 = vunpack.c.l.b16 %v449
    %v1499 = vunpack.c.l.b16 %v450
    %v1500 = vunpack.c.h.b16 %v450
    %v1501 = vunpack.c.l.b16 %v451
    %v1502 = vunpack.c.h.b16 %v451
    %v1503 = vunpack.c.l.b16 %v452
    %v1504 = vunpack.c.h.b16 %v452
    %v1505 = vunpack.c.l.b16 %v453
    %v1506 = vunpack.c.l.b16 %v454
    %v1507 = vunpack.c.h.b16 %v454
    %v1508 = vunpack.c.l.b16 %v455
    %v1509 = vunpack.c.h.b16 %v455
    %v1510 = vunpack.c.l.b16 %v456
    %v1511 = vunpack.c.h.b16 %v456
    %v1512 = vunpack.c.l.b16 %v457
    %v1513 = vunpack.c.l.b16 %v458
    %v1514 = vunpack.c.h.b16 %v458
    %v1515 = vunpack.c.l.b16 %v459
    %v1516 = vunpack.c.h.b16 %v459
    %v1517 = vunpack.c.l.b16 %v460
    %v1518 = vunpack.c.h.b16 %v460
    %v1519 = vunpack.c.l.b16 %v461
    %v1520 = vunpack.c.l.b16 %v462
    %v1521 = vunpack.c.h.b16 %v462
    %v1522 = vunpack.c.l.b16 %v463
    %v1523 = vunpack.c.h.b16 %v463
    %v1524 = vunpack.c.l.b16 %v464
    %v1525 = vunpack.c.h.b16 %v464
    %v1526 = vunpack.c.l.b16 %v465
    %v1527 = vunpack.c.l.b16 %v466
    %v1528 = vunpack.c.h.b16 %v466
    %v1529 = vunpack.c.l.b16 %v467
    %v1530 = vunpack.c.h.b16 %v467
    %v1531 = vunpack.c.l.b16 %v468
    %v1532 = vunpack.c.h.b16 %v468
    %v1533 = vunpack.c.l.b16 %v469
    %v1534 = vunpack.c.l.b16 %v470
    %v1535 = vunpack.c.h.b16 %v470
    %v1536 = vunpack.c.l.b16 %v471
    %v1537 = vunpack.c.h.b16 %v471
    %v1538 = vunpack.c.l.b16 %v472
    %v1539 = vunpack.c.h.b16 %v472
    %v1540 = vunpack.c.l.b16 %v473
    %v1541 = vunpack.c.l.b16 %v474
    %v1542 = vunpack.c.h.b16 %v474
    %v1543 = vunpack.c.l.b16 %v475
    %v1544 = vunpack.c.h.b16 %v475
    %v1545 = vunpack.c.l.b16 %v476
    %v1546 = vunpack.c.h.b16 %v476
    %v1547 = vunpack.c.l.b16 %v477
    %v1548 = vunpack.c.l.b16 %v478
    %v1549 = vunpack.c.h.b16 %v478
    %v1550 = vunpack.c.l.b16 %v479
    %v1551 = vunpack.c.h.b16 %v479
    %v1552 = vunpack.c.l.b16 %v480
    %v1553 = vunpack.c.h.b16 %v480
    %v1554 = vunpack.c.l.b16 %v481
    %v1555 = vunpack.c.l.b16 %v482
    %v1556 = vunpack.c.h.b16 %v482
    %v1557 = vunpack.c.l.b16 %v483
    %v1558 = vunpack.c.h.b16 %v483
    %v1559 = vunpack.c.l.b16 %v484
    %v1560 = vunpack.c.h.b16 %v484
    %v1561 = vunpack.c.l.b16 %v485
    %v1562 = vunpack.c.l.b16 %v486
    %v1563 = vunpack.c.h.b16 %v486
    %v1564 = vunpack.c.l.b16 %v487
    %v1565 = vunpack.c.h.b16 %v487
    %v1566 = vunpack.c.l.b16 %v488
    %v1567 = vunpack.c.h.b16 %v488
    %v1568 = vunpack.c.l.b16 %v489
    %v1569 = vunpack.c.l.b16 %v490
    %v1570 = vunpack.c.h.b16 %v490
    %v1571 = vunpack.c.l.b16 %v491
    %v1572 = vunpack.c.h.b16 %v491
    %v1573 = vunpack.c.l.b16 %v492
    %v1574 = vunpack.c.h.b16 %v492
    %v1575 = vunpack.c.l.b16 %v493
    %v1576 = vunpack.c.l.b16 %v494
    %v1577 = vunpack.c.h.b16 %v494
    %v1578 = vunpack.c.l.b16 %v495
    %v1579 = vunpack.c.h.b16 %v495
    %v1580 = vunpack.c.l.b16 %v496
    %v1581 = vunpack.c.h.b16 %v496
    %v1582 = vunpack.c.l.b16 %v497
    %v1583 = vunpack.c.l.b16 %v498
    %v1584 = vunpack.c.h.b16 %v498
    %v1585 = vunpack.c.l.b16 %v499
    %v1586 = vunpack.c.h.b16 %v499
    %v1587 = vunpack.c.l.b16 %v500
    %v1588 = vunpack.c.h.b16 %v500
    %v1589 = vunpack.c.l.b16 %v501
    %v1590 = vunpack.c.l.b16 %v502
    %v1591 = vunpack.c.h.b16 %v502
    %v1592 = vunpack.c.l.b16 %v503
    %v1593 = vunpack.c.h.b16 %v503
    %v1594 = vunpack.c.l.b16 %v504
    %v1595 = vunpack.c.h.b16 %v504
    %v1596 = vunpack.c.l.b16 %v505
    %v1597 = vunpack.c.l.b16 %v506
    %v1598 = vunpack.c.h.b16 %v506
    %v1599 = vunpack.c.l.b16 %v507
    %v1600 = vunpack.c.h.b16 %v507
    %v1601 = vunpack.c.l.b16 %v508
    %v1602 = vunpack.c.h.b16 %v508
    %v1603 = vunpack.c.l.b16 %v509
    %v1604 = vunpack.c.l.b16 %v510
    %v1605 = vunpack.c.h.b16 %v510
    %v1606 = vunpack.c.l.b16 %v511
    %v1607 = vunpack.c.h.b16 %v511
    %v1608 = vunpack.c.l.b16 %v512
    %v1609 = vunpack.c.h.b16 %v512
    %v1610 = vunpack.c.l.b16 %v513
    %v1611 = vunpack.c.l.b16 %v514
    %v1612 = vunpack.c.h.b16 %v514
    %v1613 = vunpack.c.l.b16 %v515
    %v1614 = vunpack.c.h.b16 %v515
    %v1615 = vunpack.c.l.b16 %v516
    %v1616 = vunpack.c.h.b16 %v516
    %v1617 = vunpack.c.l.b16 %v517
    %v1618 = vunpack.c.l.b16 %v518
    %v1619 = vunpack.c.h.b16 %v518
    %v1620 = vunpack.c.l.b16 %v519
    %v1621 = vunpack.c.h.b16 %v519
    %v1622 = vunpack.c.l.b16 %v520
    %v1623 = vunpack.c.h.b16 %v520
    %v1624 = vunpack.c.l.b16 %v521
    %v1625 = vunpack.c.l.b16 %v522
    %v1626 = vunpack.c.h.b16 %v522
    %v1627 = vunpack.c.l.b16 %v523
    %v1628 = vunpack.c.h.b16 %v523
    %v1629 = vunpack.c.l.b16 %v524
    %v1630 = vunpack.c.h.b16 %v524
    %v1631 = vunpack.c.l.b16 %v525
    %v1632 = vunpack.c.l.b16 %v526
    %v1633 = vunpack.c.h.b16 %v526
    %v1634 = vunpack.c.l.b16 %v527
    %v1635 = vunpack.c.h.b16 %v527
    %v1636 = vunpack.c.l.b16 %v528
    %v1637 = vunpack.c.h.b16 %v528
    %v1638 = vunpack.c.l.b16 %v529
    %v1639 = vunpack.c.l.b16 %v530
    %v1640 = vunpack.c.h.b16 %v530
    %v1641 = vunpack.c.l.b16 %v531
    %v1642 = vunpack.c.h.b16 %v531
    %v1643 = vunpack.c.l.b16 %v532
    %v1644 = vunpack.c.h.b16 %v532
    %v1645 = vunpack.c.l.b16 %v533
    %v1646 = vunpack.c.l.b16 %v534
    %v1647 = vunpack.c.h.b16 %v534
    %v1648 = vunpack.c.l.b16 %v535
    %v1649 = vunpack.c.h.b16 %v535
    %v1650 = vunpack.c.l.b16 %v536
    %v1651 = vunpack.c.h.b16 %v536
    %v1652 = vunpack.c.l.b16 %v537
    %v1653 = vpack.c.b16 %v974, %v967
    %v1654 = vpack.c.b16 %v975, %v968
    %v1655 = vpack.c.b16 %v976, %v969
    %v1656 = vpack.c.b16 %v977, %v970
    %v1657 = vpack.c.b16 %v978, %v971
    %v1658 = vpack.c.b16 %v979, %v972
    %v1659 = vpack.c.b16 %v980, %v973
    %v1660 = vpack.c.b16 %v988, %v981
    %v1661 = vpack.c.b16 %v989, %v982
    %v1662 = vpack.c.b16 %v990, %v983
    %v1663 = vpack.c.b16 %v991, %v984
    %v1664 = vpack.c.b16 %v992, %v985
    %v1665 = vpack.c.b16 %v993, %v986
    %v1666 = vpack.c.b16 %v994, %v987
    %v1667 = vpack.c.b16 %v1002, %v995
    %v1668 = vpack.c.b16 %v1003, %v996
    %v1669 = vpack.c.b16 %v1004, %v997
    %v1670 = vpack.c.b16 %v1005, %v998
    %v1671 = vpack.c.b16 %v1006, %v999
    %v1672 = vpack.c.b16 %v1007, %v1000
    %v1673 = vpack.c.b16 %v1008, %v1001
    %v1674 = vpack.c.b16 %v1016, %v1009
    %v1675 = vpack.c.b16 %v1017, %v1010
    %v1676 = vpack.c.b16 %v1018, %v1011
    %v1677 = vpack.c.b16 %v1019, %v1012
    %v1678 = vpack.c.b16 %v1020, %v1013
    %v1679 = vpack.c.b16 %v1021, %v1014
    %v1680 = vpack.c.b16 %v1022, %v1015
    %v1681 = vpack.c.b16 %v1030, %v1023
    %v1682 = vpack.c.b16 %v1031, %v1024
    %v1683 = vpack.c.b16 %v1032, %v1025
    %v1684 = vpack.c.b16 %v1033, %v1026
    %v1685 = vpack.c.b16 %v1034, %v1027
    %v1686 = vpack.c.b16 %v1035, %v1028
    %v1687 = vpack.c.b16 %v1036, %v1029
    %v1688 = vpack.c.b16 %v1044, %v1037
    %v1689 = vpack.c.b16 %v1045, %v1038
    %v1690 = vpack.c.b16 %v1046, %v1039
    %v1691 = vpack.c.b16 %v1047, %v1040
    %v1692 = vpack.c.b16 %v1048, %v1041
    %v1693 = vpack.c.b16 %v1049, %v1042
    %v1694 = vpack.c.b16 %v1050, %v1043
    %v1695 = vpack.c.b16 %v1058, %v1051
    %v1696 = vpack.c.b16 %v1059, %v1052
    %v1697 = vpack.c.b16 %v1060, %v1053
    %v1698 = vpack.c.b16 %v1061, %v1054
    %v1699 = vpack.c.b16 %v1062, %v1055
    %v1700 = vpack.c.b16 %v1063, %v1056
    %v1701 = vpack.c.b16 %v1064, %v1057
    %v1702 = vpack.c.b16 %v1072, %v1065
    %v1703 = vpack.c.b16 %v1073, %v1066
    %v1704 = vpack.c.b16 %v1074, %v1067
    %v1705 = vpack.c.b16 %v1075, %v1068
    %v1706 = vpack.c.b16 %v1076, %v1069
    %v1707 = vpack.c.b16 %v1077, %v1070
    %v1708 = vpack.c.b16 %v1078, %v1071
    %v1709 = vpack.c.b16 %v1086, %v1079
    %v1710 = vpack.c.b16 %v1087, %v1080
    %v1711 = vpack.c.b16 %v1088, %v1081
    %v1712 = vpack.c.b16 %v1089, %v1082
    %v1713 = vpack.c.b16 %v1090, %v1083
    %v1714 = vpack.c.b16 %v1091, %v1084
    %v1715 = vpack.c.b16 %v1092, %v1085
    %v1716 = vpack.c.b16 %v1100, %v1093
    %v1717 = vpack.c.b16 %v1101, %v1094
    %v1718 = vpack.c.b16 %v1102, %v1095
    %v1719 = vpack.c.b16 %v1103, %v1096
    %v1720 = vpack.c.b16 %v1104, %v1097
    %v1721 = vpack.c.b16 %v1105, %v1098
    %v1722 = vpack.c.b16 %v1106, %v1099
    %v1723 = vpack.c.b16 %v1114, %v1107
    %v1724 = vpack.c.b16 %v1115, %v1108
    %v1725 = vpack.c.b16 %v1116, %v1109
    %v1726 = vpack.c.b16 %v1117, %v1110
    %v1727 = vpack.c.b16 %v1118, %v1111
    %v1728 = vpack.c.b16 %v1119, %v1112
    %v1729 = vpack.c.b16 %v1120, %v1113
    %v1730 = vpack.c.b16 %v1128, %v1121
    %v1731 = vpack.c.b16 %v1129, %v1122
    %v1732 = vpack.c.b16 %v1130, %v1123
    %v1733 = vpack.c.b16 %v1131, %v1124
    %v1734 = vpack.c.b16 %v1132, %v1125
    %v1735 = vpack.c.b16 %v1133, %v1126
    %v1736 = vpack.c.b16 %v1134, %v1127
    %v1737 = vpack.c.b16 %v1142, %v1135
    %v1738 = vpack.c.b16 %v1143, %v1136
    %v1739 = vpack.c.b16 %v1144, %v1137
    %v1740 = vpack.c.b16 %v1145, %v1138
    %v1741 = vpack.c.b16 %v1146, %v1139
    %v1742 = vpack.c.b16 %v1147, %v1140
    %v1743 = vpack.c.b16 %v1148, %v1141
    %v1744 = vpack.c.b16 %v1156, %v1149
    %v1745 = vpack.c.b16 %v1157, %v1150
    %v1746 = vpack.c.b16 %v1158, %v1151
    %v1747 = vpack.c.b16 %v1159, %v1152
    %v1748 = vpack.c.b16 %v1160, %v1153
    %v1749 = vpack.c.b16 %v1161, %v1154
    %v1750 = vpack.c.b16 %v1162, %v1155
    %v1751 = vpack.c.b16 %v1170, %v1163
    %v1752 = vpack.c.b16 %v1171, %v1164
    %v1753 = vpack.c.b16 %v1172, %v1165
    %v1754 = vpack.c.b16 %v1173, %v1166
    %v1755 = vpack.c.b16 %v1174, %v1167
    %v1756 = vpack.c.b16 %v1175, %v1168
    %v1757 = vpack.c.b16 %v1176, %v1169
    %v1758 = vpack.c.b16 %v1184, %v1177
    %v1759 = vpack.c.b16 %v1185, %v1178
    %v1760 = vpack.c.b16 %v1186, %v1179
    %v1761 = vpack.c.b16 %v1187, %v1180
    %v1762 = vpack.c.b16 %v1188, %v1181
    %v1763 = vpack.c.b16 %v1189, %v1182
    %v1764 = vpack.c.b16 %v1190, %v1183
    %v1765 = vpack.c.b16 %v1198, %v1191
    %v1766 = vpack.c.b16 %v1199, %v1192
    %v1767 = vpack.c.b16 %v1200, %v1193
    %v1768 = vpack.c.b16 %v1201, %v1194
    %v1769 = vpack.c.b16 %v1202, %v1195
    %v1770 = vpack.c.b16 %v1203, %v1196
    %v1771 = vpack.c.b16 %v1204, %v1197
    %v1772 = vpack.c.b16 %v1212, %v1205
    %v1773 = vpack.c.b16 %v1213, %v1206
    %v1774 = vpack.c.b16 %v1214, %v1207
    %v1775 = vpack.c.b16 %v1215, %v1208
    %v1776 = vpack.c.b16 %v1216, %v1209
    %v1777 = vpack.c.b16 %v1217, %v1210
    %v1778 = vpack.c.b16 %v1218, %v1211
    %v1779 = vpack.c.b16 %v1226, %v1219
    %v1780 = vpack.c.b16 %v1227, %v1220
    %v1781 = vpack.c.b16 %v1228, %v1221
    %v1782 = vpack.c.b16 %v1229, %v1222
    %v1783 = vpack.c.b16 %v1230, %v1223
    %v1784 = vpack.c.b16 %v1231, %v1224
    %v1785 = vpack.c.b16 %v1232, %v1225
    %v1786 = vpack.c.b16 %v1240, %v1233
    %v1787 = vpack.c.b16 %v1241, %v1234
    %v1788 = vpack.c.b16 %v1242, %v1235
    %v1789 = vpack.c.b16 %v1243, %v1236
    %v1790 = vpack.c.b16 %v1244, %v1237
    %v1791 = vpack.c.b16 %v1245, %v1238
    %v1792 = vpack.c.b16 %v1246, %v1239
    %v1793 = vpack.c.b16 %v1254, %v1247
    %v1794 = vpack.c.b16 %v1255, %v1248
    %v1795 = vpack.c.b16 %v1256, %v1249
    %v1796 = vpack.c.b16 %v1257, %v1250
    %v1797 = vpack.c.b16 %v1258, %v1251
    %v1798 = vpack.c.b16 %v1259, %v1252
    %v1799 = vpack.c.b16 %v1260, %v1253
    %v1800 = vpack.c.b16 %v1268, %v1261
    %v1801 = vpack.c.b16 %v1269, %v1262
    %v1802 = vpack.c.b16 %v1270, %v1263
    %v1803 = vpack.c.b16 %v1271, %v1264
    %v1804 = vpack.c.b16 %v1272, %v1265
    %v1805 = vpack.c.b16 %v1273, %v1266
    %v1806 = vpack.c.b16 %v1274, %v1267
    %v1807 = vpack.c.b16 %v1282, %v1275
    %v1808 = vpack.c.b16 %v1283, %v1276
    %v1809 = vpack.c.b16 %v1284, %v1277
    %v1810 = vpack.c.b16 %v1285, %v1278
    %v1811 = vpack.c.b16 %v1286, %v1279
    %v1812 = vpack.c.b16 %v1287, %v1280
    %v1813 = vpack.c.b16 %v1288, %v1281
    %v1814 = vpack.c.b16 %v1296, %v1289
    %v1815 = vpack.c.b16 %v1297, %v1290
    %v1816 = vpack.c.b16 %v1298, %v1291
    %v1817 = vpack.c.b16 %v1299, %v1292
    %v1818 = vpack.c.b16 %v1300, %v1293
    %v1819 = vpack.c.b16 %v1301, %v1294
    %v1820 = vpack.c.b16 %v1302, %v1295
    %v1821 = vpack.c.b16 %v1310, %v1303
    %v1822 = vpack.c.b16 %v1311, %v1304
    %v1823 = vpack.c.b16 %v1312, %v1305
    %v1824 = vpack.c.b16 %v1313, %v1306
    %v1825 = vpack.c.b16 %v1314, %v1307
    %v1826 = vpack.c.b16 %v1315, %v1308
    %v1827 = vpack.c.b16 %v1316, %v1309
    %v1828 = vpack.c.b16 %v1324, %v1317
    %v1829 = vpack.c.b16 %v1325, %v1318
    %v1830 = vpack.c.b16 %v1326, %v1319
    %v1831 = vpack.c.b16 %v1327, %v1320
    %v1832 = vpack.c.b16 %v1328, %v1321
    %v1833 = vpack.c.b16 %v1329, %v1322
    %v1834 = vpack.c.b16 %v1330, %v1323
    %v1835 = vpack.c.b16 %v1338, %v1331
    %v1836 = vpack.c.b16 %v1339, %v1332
    %v1837 = vpack.c.b16 %v1340, %v1333
    %v1838 = vpack.c.b16 %v1341, %v1334
    %v1839 = vpack.c.b16 %v1342, %v1335
    %v1840 = vpack.c.b16 %v1343, %v1336
    %v1841 = vpack.c.b16 %v1344, %v1337
    %v1842 = vpack.c.b16 %v1352, %v1345
    %v1843 = vpack.c.b16 %v1353, %v1346
    %v1844 = vpack.c.b16 %v1354, %v1347
    %v1845 = vpack.c.b16 %v1355, %v1348
    %v1846 = vpack.c.b16 %v1356, %v1349
    %v1847 = vpack.c.b16 %v1357, %v1350
    %v1848 = vpack.c.b16 %v1358, %v1351
    %v1849 = vpack.c.b16 %v1366, %v1359
    %v1850 = vpack.c.b16 %v1367, %v1360
    %v1851 = vpack.c.b16 %v1368, %v1361
    %v1852 = vpack.c.b16 %v1369, %v1362
    %v1853 = vpack.c.b16 %v1370, %v1363
    %v1854 = vpack.c.b16 %v1371, %v1364
    %v1855 = vpack.c.b16 %v1372, %v1365
    %v1856 = vpack.c.b16 %v1380, %v1373
    %v1857 = vpack.c.b16 %v1381, %v1374
    %v1858 = vpack.c.b16 %v1382, %v1375
    %v1859 = vpack.c.b16 %v1383, %v1376
    %v1860 = vpack.c.b16 %v1384, %v1377
    %v1861 = vpack.c.b16 %v1385, %v1378
    %v1862 = vpack.c.b16 %v1386, %v1379
    %v1863 = vpack.c.b16 %v1394, %v1387
    %v1864 = vpack.c.b16 %v1395, %v1388
    %v1865 = vpack.c.b16 %v1396, %v1389
    %v1866 = vpack.c.b16 %v1397, %v1390
    %v1867 = vpack.c.b16 %v1398, %v1391
    %v1868 = vpack.c.b16 %v1399, %v1392
    %v1869 = vpack.c.b16 %v1400, %v1393
    %v1870 = vpack.c.b16 %v1408, %v1401
    %v1871 = vpack.c.b16 %v1409, %v1402
    %v1872 = vpack.c.b16 %v1410, %v1403
    %v1873 = vpack.c.b16 %v1411, %v1404
    %v1874 = vpack.c.b16 %v1412, %v1405
    %v1875 = vpack.c.b16 %v1413, %v1406
    %v1876 = vpack.c.b16 %v1414, %v1407
    %v1877 = vpack.c.b16 %v1422, %v1415
    %v1878 = vpack.c.b16 %v1423, %v1416
    %v1879 = vpack.c.b16 %v1424, %v1417
    %v1880 = vpack.c.b16 %v1425, %v1418
    %v1881 = vpack.c.b16 %v1426, %v1419
    %v1882 = vpack.c.b16 %v1427, %v1420
    %v1883 = vpack.c.b16 %v1428, %v1421
    %v1884 = vpack.c.b16 %v1436, %v1429
    %v1885 = vpack.c.b16 %v1437, %v1430
    %v1886 = vpack.c.b16 %v1438, %v1431
    %v1887 = vpack.c.b16 %v1439, %v1432
    %v1888 = vpack.c.b16 %v1440, %v1433
    %v1889 = vpack.c.b16 %v1441, %v1434
    %v1890 = vpack.c.b16 %v1442, %v1435
    %v1891 = vpack.c.b16 %v1450, %v1443
    %v1892 = vpack.c.b16 %v1451, %v1444
    %v1893 = vpack.c.b16 %v1452, %v1445
    %v1894 = vpack.c.b16 %v1453, %v1446
    %v1895 = vpack.c.b16 %v1454, %v1447
    %v1896 = vpack.c.b16 %v1455, %v1448
    %v1897 = vpack.c.b16 %v1456, %v1449
    %v1898 = vpack.c.b16 %v1464, %v1457
    %v1899 = vpack.c.b16 %v1465, %v1458
    %v1900 = vpack.c.b16 %v1466, %v1459
    %v1901 = vpack.c.b16 %v1467, %v1460
    %v1902 = vpack.c.b16 %v1468, %v1461
    %v1903 = vpack.c.b16 %v1469, %v1462
    %v1904 = vpack.c.b16 %v1470, %v1463
    %v1905 = vpack.c.b16 %v1478, %v1471
    %v1906 = vpack.c.b16 %v1479, %v1472
    %v1907 = vpack.c.b16 %v1480, %v1473
    %v1908 = vpack.c.b16 %v1481, %v1474
    %v1909 = vpack.c.b16 %v1482, %v1475
    %v1910 = vpack.c.b16 %v1483, %v1476
    %v1911 = vpack.c.b16 %v1484, %v1477
    %v1912 = vpack.c.b16 %v1492, %v1485
    %v1913 = vpack.c.b16 %v1493, %v1486
    %v1914 = vpack.c.b16 %v1494, %v1487
    %v1915 = vpack.c.b16 %v1495, %v1488
    %v1916 = vpack.c.b16 %v1496, %v1489
    %v1917 = vpack.c.b16 %v1497, %v1490
    %v1918 = vpack.c.b16 %v1498, %v1491
    %v1919 = vpack.c.b16 %v1506, %v1499
    %v1920 = vpack.c.b16 %v1507, %v1500
    %v1921 = vpack.c.b16 %v1508, %v1501
    %v1922 = vpack.c.b16 %v1509, %v1502
    %v1923 = vpack.c.b16 %v1510, %v1503
    %v1924 = vpack.c.b16 %v1511, %v1504
    %v1925 = vpack.c.b16 %v1512, %v1505
    %v1926 = vpack.c.b16 %v1520, %v1513
    %v1927 = vpack.c.b16 %v1521, %v1514
    %v1928 = vpack.c.b16 %v1522, %v1515
    %v1929 = vpack.c.b16 %v1523, %v1516
    %v1930 = vpack.c.b16 %v1524, %v1517
    %v1931 = vpack.c.b16 %v1525, %v1518
    %v1932 = vpack.c.b16 %v1526, %v1519
    %v1933 = vpack.c.b16 %v1534, %v1527
    %v1934 = vpack.c.b16 %v1535, %v1528
    %v1935 = vpack.c.b16 %v1536, %v1529
    %v1936 = vpack.c.b16 %v1537, %v1530
    %v1937 = vpack.c.b16 %v1538, %v1531
    %v1938 = vpack.c.b16 %v1539, %v1532
    %v1939 = vpack.c.b16 %v1540, %v1533
    %v1940 = vpack.c.b16 %v1548, %v1541
    %v1941 = vpack.c.b16 %v1549, %v1542
    %v1942 = vpack.c.b16 %v1550, %v1543
    %v1943 = vpack.c.b16 %v1551, %v1544
    %v1944 = vpack.c.b16 %v1552, %v1545
    %v1945 = vpack.c.b16 %v1553, %v1546
    %v1946 = vpack.c.b16 %v1554, %v1547
    %v1947 = vpack.c.b16 %v1562, %v1555
    %v1948 = vpack.c.b16 %v1563, %v1556
    %v1949 = vpack.c.b16 %v1564, %v1557
    %v1950 = vpack.c.b16 %v1565, %v1558
    %v1951 = vpack.c.b16 %v1566, %v1559
    %v1952 = vpack.c.b16 %v1567, %v1560
    %v1953 = vpack.c.b16 %v1568, %v1561
    %v1954 = vpack.c.b16 %v1576, %v1569
    %v1955 = vpack.c.b16 %v1577, %v1570
    %v1956 = vpack.c.b16 %v1578, %v1571
    %v1957 = vpack.c.b16 %v1579, %v1572
    %v1958 = vpack.c.b16 %v1580, %v1573
    %v1959 = vpack.c.b16 %v1581, %v1574
    %v1960 = vpack.c.b16 %v1582, %v1575
    %v1961 = vpack.c.b16 %v1590, %v1583
    %v1962 = vpack.c.b16 %v1591, %v1584
    %v1963 = vpack.c.b16 %v1592, %v1585
    %v1964 = vpack.c.b16 %v1593, %v1586
    %v1965 = vpack.c.b16 %v1594, %v1587
    %v1966 = vpack.c.b16 %v1595, %v1588
    %v1967 = vpack.c.b16 %v1596, %v1589
    %v1968 = vpack.c.b16 %v1604, %v1597
    %v1969 = vpack.c.b16 %v1605, %v1598
    %v1970 = vpack.c.b16 %v1606, %v1599
    %v1971 = vpack.c.b16 %v1607, %v1600
    %v1972 = vpack.c.b16 %v1608, %v1601
    %v1973 = vpack.c.b16 %v1609, %v1602
    %v1974 = vpack.c.b16 %v1610, %v1603
    %v1975 = vpack.c.b16 %v1618, %v1611
    %v1976 = vpack.c.b16 %v1619, %v1612
    %v1977 = vpack.c.b16 %v1620, %v1613
    %v1978 = vpack.c.b16 %v1621, %v1614
    %v1979 = vpack.c.b16 %v1622, %v1615
    %v1980 = vpack.c.b16 %v1623, %v1616
    %v1981 = vpack.c.b16 %v1624, %v1617
    %v1982 = vpack.c.b16 %v1632, %v1625
    %v1983 = vpack.c.b16 %v1633, %v1626
    %v1984 = vpack.c.b16 %v1634, %v1627
    %v1985 = vpack.c.b16 %v1635, %v1628
    %v1986 = vpack.c.b16 %v1636, %v1629
    %v1987 = vpack.c.b16 %v1637, %v1630
    %v1988 = vpack.c.b16 %v1638, %v1631
    %v1989 = vpack.c.b16 %v1646, %v1639
    %v1990 = vpack.c.b16 %v1647, %v1640
    %v1991 = vpack.c.b16 %v1648, %v1641
    %v1992 = vpack.c.b16 %v1649, %v1642
    %v1993 = vpack.c.b16 %v1650, %v1643
    %v1994 = vpack.c.b16 %v1651, %v1644
    %v1995 = vpack.c.b16 %v1652, %v1645
    %vm2339 = vcmask 130048
    %v2341 = vsel %vm2339, %v145, 0
    %2343 = vmatprep.subr.bf16.mxu0 %v1703
    %2344 = vmatpush1.bf16.msra.mxu0 %v1702
    %2345 = vmatprep.subr.bf16.mxu0 %v1696
    %2346 = vmatpush1.bf16.msra.mxu0 %v1695
    %2347 = vmatprep.subr.bf16.mxu0 %v1689
    %2348 = vmatpush1.bf16.msra.mxu0 %v1688
    %2349 = vmatprep.subr.bf16.mxu0 %v1682
    %2350 = vmatpush1.bf16.msra.mxu0 %v1681
    %2351 = vmatprep.subr.bf16.mxu0 %v1675
    %2352 = vmatpush1.bf16.msra.mxu0 %v1674
    %2353 = vmatprep.subr.bf16.mxu0 %v1668
    %2354 = vmatpush1.bf16.msra.mxu0 %v1667
    %2355 = vmatprep.subr.bf16.mxu0 %v1661
    %2356 = vmatpush1.bf16.msra.mxu0 %v1660
    %2357 = vmatprep.subr.bf16.mxu0 %v1654
    %2358 = vmatpush1.bf16.msra.mxu0 %v1653
    %2359 = vmatprep.subr.bf16.mxu0 %v1759
    %2360 = vmatpush2.bf16.msra.mxu0 %v1758
    %2361 = vmatprep.subr.bf16.mxu0 %v1752
    %2362 = vmatpush2.bf16.msra.mxu0 %v1751
    %2363 = vmatprep.subr.bf16.mxu0 %v1745
    %2364 = vmatpush2.bf16.msra.mxu0 %v1744
    %2365 = vmatprep.subr.bf16.mxu0 %v1738
    %2366 = vmatpush2.bf16.msra.mxu0 %v1737
    %2367 = vmatprep.subr.bf16.mxu0 %v1731
    %2368 = vmatpush2.bf16.msra.mxu0 %v1730
    %2369 = vmatprep.subr.bf16.mxu0 %v1724
    %2370 = vmatpush2.bf16.msra.mxu0 %v1723
    %2371 = vmatprep.subr.bf16.mxu0 %v1717
    %2372 = vmatpush2.bf16.msra.mxu0 %v1716
    %2373 = vmatprep.subr.bf16.mxu0 %v1710
    %2374 = vmatpush2.bf16.msra.mxu0 %v1709
    %2375 = vmatprep.mubr.bf16.mxu0 %v140
    %2376 = vmatmul.mubr.bf16.gmra.mxu0 %v139
    %v2377 = vpop.f32.mrf.mxu0
    %v2378 = vadd.f32 %v543, %v2377
    %v2379 = vpop.f32.mrf.mxu0
    %v2380 = vadd.f32 %v547, %v2379
    %v2381 = vpop.f32.mrf.mxu0
    %v2382 = vpop.f32.mrf.mxu0
    %2383 = vdwg.mxu0
    %2384 = vmatprep.subr.bf16.mxu0 %v1815
    %2385 = vmatpush1.bf16.msra.mxu0 %v1814
    %2386 = vmatprep.subr.bf16.mxu0 %v1808
    %2387 = vmatpush1.bf16.msra.mxu0 %v1807
    %2388 = vmatprep.subr.bf16.mxu0 %v1801
    %2389 = vmatpush1.bf16.msra.mxu0 %v1800
    %2390 = vmatprep.subr.bf16.mxu0 %v1794
    %2391 = vmatpush1.bf16.msra.mxu0 %v1793
    %2392 = vmatprep.subr.bf16.mxu0 %v1787
    %2393 = vmatpush1.bf16.msra.mxu0 %v1786
    %2394 = vmatprep.subr.bf16.mxu0 %v1780
    %2395 = vmatpush1.bf16.msra.mxu0 %v1779
    %2396 = vmatprep.subr.bf16.mxu0 %v1773
    %2397 = vmatpush1.bf16.msra.mxu0 %v1772
    %2398 = vmatprep.subr.bf16.mxu0 %v1766
    %2399 = vmatpush1.bf16.msra.mxu0 %v1765
    %2400 = vmatprep.subr.bf16.mxu0 %v1871
    %2401 = vmatpush2.bf16.msra.mxu0 %v1870
    %2402 = vmatprep.subr.bf16.mxu0 %v1864
    %2403 = vmatpush2.bf16.msra.mxu0 %v1863
    %2404 = vmatprep.subr.bf16.mxu0 %v1857
    %2405 = vmatpush2.bf16.msra.mxu0 %v1856
    %2406 = vmatprep.subr.bf16.mxu0 %v1850
    %2407 = vmatpush2.bf16.msra.mxu0 %v1849
    %2408 = vmatprep.subr.bf16.mxu0 %v1843
    %2409 = vmatpush2.bf16.msra.mxu0 %v1842
    %2410 = vmatprep.subr.bf16.mxu0 %v1836
    %2411 = vmatpush2.bf16.msra.mxu0 %v1835
    %2412 = vmatprep.subr.bf16.mxu0 %v1829
    %2413 = vmatpush2.bf16.msra.mxu0 %v1828
    %2414 = vmatprep.subr.bf16.mxu0 %v1822
    %2415 = vmatpush2.bf16.msra.mxu0 %v1821
    %2416 = vmatprep.mubr.bf16.mxu0 %v142
    %2417 = vmatmul.mubr.bf16.gmra.mxu0 %v141
    %v2418 = vpop.f32.mrf.mxu0
    %v2419 = vadd.f32 %v2378, %v2418
    %v2420 = vpop.f32.mrf.mxu0
    %v2421 = vadd.f32 %v2380, %v2420
    %v2422 = vpop.f32.mrf.mxu0
    %v2423 = vpop.f32.mrf.mxu0
    %2424 = vdwg.mxu0
    %2425 = vmatprep.subr.bf16.mxu0 %v1927
    %2426 = vmatpush1.bf16.msra.mxu0 %v1926
    %2427 = vmatprep.subr.bf16.mxu0 %v1920
    %2428 = vmatpush1.bf16.msra.mxu0 %v1919
    %2429 = vmatprep.subr.bf16.mxu0 %v1913
    %2430 = vmatpush1.bf16.msra.mxu0 %v1912
    %2431 = vmatprep.subr.bf16.mxu0 %v1906
    %2432 = vmatpush1.bf16.msra.mxu0 %v1905
    %2433 = vmatprep.subr.bf16.mxu0 %v1899
    %2434 = vmatpush1.bf16.msra.mxu0 %v1898
    %2435 = vmatprep.subr.bf16.mxu0 %v1892
    %2436 = vmatpush1.bf16.msra.mxu0 %v1891
    %2437 = vmatprep.subr.bf16.mxu0 %v1885
    %2438 = vmatpush1.bf16.msra.mxu0 %v1884
    %2439 = vmatprep.subr.bf16.mxu0 %v1878
    %2440 = vmatpush1.bf16.msra.mxu0 %v1877
    %2441 = vmatprep.subr.bf16.mxu0 %v1983
    %2442 = vmatpush2.bf16.msra.mxu0 %v1982
    %2443 = vmatprep.subr.bf16.mxu0 %v1976
    %2444 = vmatpush2.bf16.msra.mxu0 %v1975
    %2445 = vmatprep.subr.bf16.mxu0 %v1969
    %2446 = vmatpush2.bf16.msra.mxu0 %v1968
    %2447 = vmatprep.subr.bf16.mxu0 %v1962
    %2448 = vmatpush2.bf16.msra.mxu0 %v1961
    %2449 = vmatprep.subr.bf16.mxu0 %v1955
    %2450 = vmatpush2.bf16.msra.mxu0 %v1954
    %2451 = vmatprep.subr.bf16.mxu0 %v1948
    %2452 = vmatpush2.bf16.msra.mxu0 %v1947
    %2453 = vmatprep.subr.bf16.mxu0 %v1941
    %2454 = vmatpush2.bf16.msra.mxu0 %v1940
    %2455 = vmatprep.subr.bf16.mxu0 %v1934
    %2456 = vmatpush2.bf16.msra.mxu0 %v1933
    %2457 = vmatprep.mubr.bf16.mxu0 %v144
    %2458 = vmatmul.mubr.bf16.gmra.mxu0 %v143
    %v2459 = vpop.f32.mrf.mxu0
    %v2460 = vadd.f32 %v2419, %v2459
    %v2461 = vpop.f32.mrf.mxu0
    %v2462 = vadd.f32 %v2421, %v2461
    %v2463 = vpop.f32.mrf.mxu0
    %v2464 = vpop.f32.mrf.mxu0
    %2465 = vdwg.mxu0
    %2466 = vmatprep.subr.bf16.mxu0 0
    %2467 = vmatpush1.bf16.msra.mxu0 0
    %2468 = vmatprep.subr.bf16.mxu0 0
    %2469 = vmatpush1.bf16.msra.mxu0 0
    %2470 = vmatprep.subr.bf16.mxu0 0
    %2471 = vmatpush1.bf16.msra.mxu0 0
    %2472 = vmatprep.subr.bf16.mxu0 0
    %2473 = vmatpush1.bf16.msra.mxu0 0
    %2474 = vmatprep.subr.bf16.mxu0 0
    %2475 = vmatpush1.bf16.msra.mxu0 0
    %2476 = vmatprep.subr.bf16.mxu0 0
    %2477 = vmatpush1.bf16.msra.mxu0 0
    %2478 = vmatprep.subr.bf16.mxu0 0
    %2479 = vmatpush1.bf16.msra.mxu0 0
    %2480 = vmatprep.subr.bf16.mxu0 %v1990
    %2481 = vmatpush1.bf16.msra.mxu0 %v1989
    %2482 = vmatprep.subr.bf16.mxu0 0
    %2483 = vmatpush2.bf16.msra.mxu0 0
    %2484 = vmatprep.subr.bf16.mxu0 0
    %2485 = vmatpush2.bf16.msra.mxu0 0
    %2486 = vmatprep.subr.bf16.mxu0 0
    %2487 = vmatpush2.bf16.msra.mxu0 0
    %2488 = vmatprep.subr.bf16.mxu0 0
    %2489 = vmatpush2.bf16.msra.mxu0 0
    %2490 = vmatprep.subr.bf16.mxu0 0
    %2491 = vmatpush2.bf16.msra.mxu0 0
    %2492 = vmatprep.subr.bf16.mxu0 0
    %2493 = vmatpush2.bf16.msra.mxu0 0
    %2494 = vmatprep.subr.bf16.mxu0 0
    %2495 = vmatpush2.bf16.msra.mxu0 0
    %2496 = vmatprep.subr.bf16.mxu0 0
    %2497 = vmatpush2.bf16.msra.mxu0 0
    %2498 = vmatprep.mubr.bf16.mxu0 0
    %2499 = vmatmul.mubr.bf16.gmra.mxu0 %v2341
    %v2500 = vpop.f32.mrf.mxu0
    %v2501 = vadd.f32 %v2460, %v2500
    %v2502 = vpop.f32.mrf.mxu0
    %v2503 = vadd.f32 %v2462, %v2502
    %v2504 = vpop.f32.mrf.mxu0
    %v2505 = vpop.f32.mrf.mxu0
    %2506 = vdwg.mxu0
    %2507 = vmatprep.subr.bf16.mxu0 %v1705
    %2508 = vmatpush1.bf16.msra.mxu0 %v1704
    %2509 = vmatprep.subr.bf16.mxu0 %v1698
    %2510 = vmatpush1.bf16.msra.mxu0 %v1697
    %2511 = vmatprep.subr.bf16.mxu0 %v1691
    %2512 = vmatpush1.bf16.msra.mxu0 %v1690
    %2513 = vmatprep.subr.bf16.mxu0 %v1684
    %2514 = vmatpush1.bf16.msra.mxu0 %v1683
    %2515 = vmatprep.subr.bf16.mxu0 %v1677
    %2516 = vmatpush1.bf16.msra.mxu0 %v1676
    %2517 = vmatprep.subr.bf16.mxu0 %v1670
    %2518 = vmatpush1.bf16.msra.mxu0 %v1669
    %2519 = vmatprep.subr.bf16.mxu0 %v1663
    %2520 = vmatpush1.bf16.msra.mxu0 %v1662
    %2521 = vmatprep.subr.bf16.mxu0 %v1656
    %2522 = vmatpush1.bf16.msra.mxu0 %v1655
    %2523 = vmatprep.subr.bf16.mxu0 %v1761
    %2524 = vmatpush2.bf16.msra.mxu0 %v1760
    %2525 = vmatprep.subr.bf16.mxu0 %v1754
    %2526 = vmatpush2.bf16.msra.mxu0 %v1753
    %2527 = vmatprep.subr.bf16.mxu0 %v1747
    %2528 = vmatpush2.bf16.msra.mxu0 %v1746
    %2529 = vmatprep.subr.bf16.mxu0 %v1740
    %2530 = vmatpush2.bf16.msra.mxu0 %v1739
    %2531 = vmatprep.subr.bf16.mxu0 %v1733
    %2532 = vmatpush2.bf16.msra.mxu0 %v1732
    %2533 = vmatprep.subr.bf16.mxu0 %v1726
    %2534 = vmatpush2.bf16.msra.mxu0 %v1725
    %2535 = vmatprep.subr.bf16.mxu0 %v1719
    %2536 = vmatpush2.bf16.msra.mxu0 %v1718
    %2537 = vmatprep.subr.bf16.mxu0 %v1712
    %2538 = vmatpush2.bf16.msra.mxu0 %v1711
    %2539 = vmatprep.mubr.bf16.mxu0 %v140
    %2540 = vmatmul.mubr.bf16.gmra.mxu0 %v139
    %v2541 = vpop.f32.mrf.mxu0
    %v2542 = vadd.f32 %v551, %v2541
    %v2543 = vpop.f32.mrf.mxu0
    %v2544 = vadd.f32 %v555, %v2543
    %v2545 = vpop.f32.mrf.mxu0
    %v2546 = vpop.f32.mrf.mxu0
    %2547 = vdwg.mxu0
    %2548 = vmatprep.subr.bf16.mxu0 %v1817
    %2549 = vmatpush1.bf16.msra.mxu0 %v1816
    %2550 = vmatprep.subr.bf16.mxu0 %v1810
    %2551 = vmatpush1.bf16.msra.mxu0 %v1809
    %2552 = vmatprep.subr.bf16.mxu0 %v1803
    %2553 = vmatpush1.bf16.msra.mxu0 %v1802
    %2554 = vmatprep.subr.bf16.mxu0 %v1796
    %2555 = vmatpush1.bf16.msra.mxu0 %v1795
    %2556 = vmatprep.subr.bf16.mxu0 %v1789
    %2557 = vmatpush1.bf16.msra.mxu0 %v1788
    %2558 = vmatprep.subr.bf16.mxu0 %v1782
    %2559 = vmatpush1.bf16.msra.mxu0 %v1781
    %2560 = vmatprep.subr.bf16.mxu0 %v1775
    %2561 = vmatpush1.bf16.msra.mxu0 %v1774
    %2562 = vmatprep.subr.bf16.mxu0 %v1768
    %2563 = vmatpush1.bf16.msra.mxu0 %v1767
    %2564 = vmatprep.subr.bf16.mxu0 %v1873
    %2565 = vmatpush2.bf16.msra.mxu0 %v1872
    %2566 = vmatprep.subr.bf16.mxu0 %v1866
    %2567 = vmatpush2.bf16.msra.mxu0 %v1865
    %2568 = vmatprep.subr.bf16.mxu0 %v1859
    %2569 = vmatpush2.bf16.msra.mxu0 %v1858
    %2570 = vmatprep.subr.bf16.mxu0 %v1852
    %2571 = vmatpush2.bf16.msra.mxu0 %v1851
    %2572 = vmatprep.subr.bf16.mxu0 %v1845
    %2573 = vmatpush2.bf16.msra.mxu0 %v1844
    %2574 = vmatprep.subr.bf16.mxu0 %v1838
    %2575 = vmatpush2.bf16.msra.mxu0 %v1837
    %2576 = vmatprep.subr.bf16.mxu0 %v1831
    %2577 = vmatpush2.bf16.msra.mxu0 %v1830
    %2578 = vmatprep.subr.bf16.mxu0 %v1824
    %2579 = vmatpush2.bf16.msra.mxu0 %v1823
    %2580 = vmatprep.mubr.bf16.mxu0 %v142
    %2581 = vmatmul.mubr.bf16.gmra.mxu0 %v141
    %v2582 = vpop.f32.mrf.mxu0
    %v2583 = vadd.f32 %v2542, %v2582
    %v2584 = vpop.f32.mrf.mxu0
    %v2585 = vadd.f32 %v2544, %v2584
    %v2586 = vpop.f32.mrf.mxu0
    %v2587 = vpop.f32.mrf.mxu0
    %2588 = vdwg.mxu0
    %2589 = vmatprep.subr.bf16.mxu0 %v1929
    %2590 = vmatpush1.bf16.msra.mxu0 %v1928
    %2591 = vmatprep.subr.bf16.mxu0 %v1922
    %2592 = vmatpush1.bf16.msra.mxu0 %v1921
    %2593 = vmatprep.subr.bf16.mxu0 %v1915
    %2594 = vmatpush1.bf16.msra.mxu0 %v1914
    %2595 = vmatprep.subr.bf16.mxu0 %v1908
    %2596 = vmatpush1.bf16.msra.mxu0 %v1907
    %2597 = vmatprep.subr.bf16.mxu0 %v1901
    %2598 = vmatpush1.bf16.msra.mxu0 %v1900
    %2599 = vmatprep.subr.bf16.mxu0 %v1894
    %2600 = vmatpush1.bf16.msra.mxu0 %v1893
    %2601 = vmatprep.subr.bf16.mxu0 %v1887
    %2602 = vmatpush1.bf16.msra.mxu0 %v1886
    %2603 = vmatprep.subr.bf16.mxu0 %v1880
    %2604 = vmatpush1.bf16.msra.mxu0 %v1879
    %2605 = vmatprep.subr.bf16.mxu0 %v1985
    %2606 = vmatpush2.bf16.msra.mxu0 %v1984
    %2607 = vmatprep.subr.bf16.mxu0 %v1978
    %2608 = vmatpush2.bf16.msra.mxu0 %v1977
    %2609 = vmatprep.subr.bf16.mxu0 %v1971
    %2610 = vmatpush2.bf16.msra.mxu0 %v1970
    %2611 = vmatprep.subr.bf16.mxu0 %v1964
    %2612 = vmatpush2.bf16.msra.mxu0 %v1963
    %2613 = vmatprep.subr.bf16.mxu0 %v1957
    %2614 = vmatpush2.bf16.msra.mxu0 %v1956
    %2615 = vmatprep.subr.bf16.mxu0 %v1950
    %2616 = vmatpush2.bf16.msra.mxu0 %v1949
    %2617 = vmatprep.subr.bf16.mxu0 %v1943
    %2618 = vmatpush2.bf16.msra.mxu0 %v1942
    %2619 = vmatprep.subr.bf16.mxu0 %v1936
    %2620 = vmatpush2.bf16.msra.mxu0 %v1935
    %2621 = vmatprep.mubr.bf16.mxu0 %v144
    %2622 = vmatmul.mubr.bf16.gmra.mxu0 %v143
    %v2623 = vpop.f32.mrf.mxu0
    %v2624 = vadd.f32 %v2583, %v2623
    %v2625 = vpop.f32.mrf.mxu0
    %v2626 = vadd.f32 %v2585, %v2625
    %v2627 = vpop.f32.mrf.mxu0
    %v2628 = vpop.f32.mrf.mxu0
    %2629 = vdwg.mxu0
    %2630 = vmatprep.subr.bf16.mxu0 0
    %2631 = vmatpush1.bf16.msra.mxu0 0
    %2632 = vmatprep.subr.bf16.mxu0 0
    %2633 = vmatpush1.bf16.msra.mxu0 0
    %2634 = vmatprep.subr.bf16.mxu0 0
    %2635 = vmatpush1.bf16.msra.mxu0 0
    %2636 = vmatprep.subr.bf16.mxu0 0
    %2637 = vmatpush1.bf16.msra.mxu0 0
    %2638 = vmatprep.subr.bf16.mxu0 0
    %2639 = vmatpush1.bf16.msra.mxu0 0
    %2640 = vmatprep.subr.bf16.mxu0 0
    %2641 = vmatpush1.bf16.msra.mxu0 0
    %2642 = vmatprep.subr.bf16.mxu0 0
    %2643 = vmatpush1.bf16.msra.mxu0 0
    %2644 = vmatprep.subr.bf16.mxu0 %v1992
    %2645 = vmatpush1.bf16.msra.mxu0 %v1991
    %2646 = vmatprep.subr.bf16.mxu0 0
    %2647 = vmatpush2.bf16.msra.mxu0 0
    %2648 = vmatprep.subr.bf16.mxu0 0
    %2649 = vmatpush2.bf16.msra.mxu0 0
    %2650 = vmatprep.subr.bf16.mxu0 0
    %2651 = vmatpush2.bf16.msra.mxu0 0
    %2652 = vmatprep.subr.bf16.mxu0 0
    %2653 = vmatpush2.bf16.msra.mxu0 0
    %2654 = vmatprep.subr.bf16.mxu0 0
    %2655 = vmatpush2.bf16.msra.mxu0 0
    %2656 = vmatprep.subr.bf16.mxu0 0
    %2657 = vmatpush2.bf16.msra.mxu0 0
    %2658 = vmatprep.subr.bf16.mxu0 0
    %2659 = vmatpush2.bf16.msra.mxu0 0
    %2660 = vmatprep.subr.bf16.mxu0 0
    %2661 = vmatpush2.bf16.msra.mxu0 0
    %2662 = vmatprep.mubr.bf16.mxu0 0
    %2663 = vmatmul.mubr.bf16.gmra.mxu0 %v2341
    %v2664 = vpop.f32.mrf.mxu0
    %v2665 = vadd.f32 %v2624, %v2664
    %v2666 = vpop.f32.mrf.mxu0
    %v2667 = vadd.f32 %v2626, %v2666
    %v2668 = vpop.f32.mrf.mxu0
    %v2669 = vpop.f32.mrf.mxu0
    %2670 = vdwg.mxu0
    %2671 = vmatprep.subr.bf16.mxu0 %v1707
    %2672 = vmatpush1.bf16.msra.mxu0 %v1706
    %2673 = vmatprep.subr.bf16.mxu0 %v1700
    %2674 = vmatpush1.bf16.msra.mxu0 %v1699
    %2675 = vmatprep.subr.bf16.mxu0 %v1693
    %2676 = vmatpush1.bf16.msra.mxu0 %v1692
    %2677 = vmatprep.subr.bf16.mxu0 %v1686
    %2678 = vmatpush1.bf16.msra.mxu0 %v1685
    %2679 = vmatprep.subr.bf16.mxu0 %v1679
    %2680 = vmatpush1.bf16.msra.mxu0 %v1678
    %2681 = vmatprep.subr.bf16.mxu0 %v1672
    %2682 = vmatpush1.bf16.msra.mxu0 %v1671
    %2683 = vmatprep.subr.bf16.mxu0 %v1665
    %2684 = vmatpush1.bf16.msra.mxu0 %v1664
    %2685 = vmatprep.subr.bf16.mxu0 %v1658
    %2686 = vmatpush1.bf16.msra.mxu0 %v1657
    %2687 = vmatprep.subr.bf16.mxu0 %v1763
    %2688 = vmatpush2.bf16.msra.mxu0 %v1762
    %2689 = vmatprep.subr.bf16.mxu0 %v1756
    %2690 = vmatpush2.bf16.msra.mxu0 %v1755
    %2691 = vmatprep.subr.bf16.mxu0 %v1749
    %2692 = vmatpush2.bf16.msra.mxu0 %v1748
    %2693 = vmatprep.subr.bf16.mxu0 %v1742
    %2694 = vmatpush2.bf16.msra.mxu0 %v1741
    %2695 = vmatprep.subr.bf16.mxu0 %v1735
    %2696 = vmatpush2.bf16.msra.mxu0 %v1734
    %2697 = vmatprep.subr.bf16.mxu0 %v1728
    %2698 = vmatpush2.bf16.msra.mxu0 %v1727
    %2699 = vmatprep.subr.bf16.mxu0 %v1721
    %2700 = vmatpush2.bf16.msra.mxu0 %v1720
    %2701 = vmatprep.subr.bf16.mxu0 %v1714
    %2702 = vmatpush2.bf16.msra.mxu0 %v1713
    %2703 = vmatprep.mubr.bf16.mxu0 %v140
    %2704 = vmatmul.mubr.bf16.gmra.mxu0 %v139
    %v2705 = vpop.f32.mrf.mxu0
    %v2706 = vadd.f32 %v559, %v2705
    %v2707 = vpop.f32.mrf.mxu0
    %v2708 = vadd.f32 %v563, %v2707
    %v2709 = vpop.f32.mrf.mxu0
    %v2710 = vpop.f32.mrf.mxu0
    %2711 = vdwg.mxu0
    %2712 = vmatprep.subr.bf16.mxu0 %v1819
    %2713 = vmatpush1.bf16.msra.mxu0 %v1818
    %2714 = vmatprep.subr.bf16.mxu0 %v1812
    %2715 = vmatpush1.bf16.msra.mxu0 %v1811
    %2716 = vmatprep.subr.bf16.mxu0 %v1805
    %2717 = vmatpush1.bf16.msra.mxu0 %v1804
    %2718 = vmatprep.subr.bf16.mxu0 %v1798
    %2719 = vmatpush1.bf16.msra.mxu0 %v1797
    %2720 = vmatprep.subr.bf16.mxu0 %v1791
    %2721 = vmatpush1.bf16.msra.mxu0 %v1790
    %2722 = vmatprep.subr.bf16.mxu0 %v1784
    %2723 = vmatpush1.bf16.msra.mxu0 %v1783
    %2724 = vmatprep.subr.bf16.mxu0 %v1777
    %2725 = vmatpush1.bf16.msra.mxu0 %v1776
    %2726 = vmatprep.subr.bf16.mxu0 %v1770
    %2727 = vmatpush1.bf16.msra.mxu0 %v1769
    %2728 = vmatprep.subr.bf16.mxu0 %v1875
    %2729 = vmatpush2.bf16.msra.mxu0 %v1874
    %2730 = vmatprep.subr.bf16.mxu0 %v1868
    %2731 = vmatpush2.bf16.msra.mxu0 %v1867
    %2732 = vmatprep.subr.bf16.mxu0 %v1861
    %2733 = vmatpush2.bf16.msra.mxu0 %v1860
    %2734 = vmatprep.subr.bf16.mxu0 %v1854
    %2735 = vmatpush2.bf16.msra.mxu0 %v1853
    %2736 = vmatprep.subr.bf16.mxu0 %v1847
    %2737 = vmatpush2.bf16.msra.mxu0 %v1846
    %2738 = vmatprep.subr.bf16.mxu0 %v1840
    %2739 = vmatpush2.bf16.msra.mxu0 %v1839
    %2740 = vmatprep.subr.bf16.mxu0 %v1833
    %2741 = vmatpush2.bf16.msra.mxu0 %v1832
    %2742 = vmatprep.subr.bf16.mxu0 %v1826
    %2743 = vmatpush2.bf16.msra.mxu0 %v1825
    %2744 = vmatprep.mubr.bf16.mxu0 %v142
    %2745 = vmatmul.mubr.bf16.gmra.mxu0 %v141
    %v2746 = vpop.f32.mrf.mxu0
    %v2747 = vadd.f32 %v2706, %v2746
    %v2748 = vpop.f32.mrf.mxu0
    %v2749 = vadd.f32 %v2708, %v2748
    %v2750 = vpop.f32.mrf.mxu0
    %v2751 = vpop.f32.mrf.mxu0
    %2752 = vdwg.mxu0
    %2753 = vmatprep.subr.bf16.mxu0 %v1931
    %2754 = vmatpush1.bf16.msra.mxu0 %v1930
    %2755 = vmatprep.subr.bf16.mxu0 %v1924
    %2756 = vmatpush1.bf16.msra.mxu0 %v1923
    %2757 = vmatprep.subr.bf16.mxu0 %v1917
    %2758 = vmatpush1.bf16.msra.mxu0 %v1916
    %2759 = vmatprep.subr.bf16.mxu0 %v1910
    %2760 = vmatpush1.bf16.msra.mxu0 %v1909
    %2761 = vmatprep.subr.bf16.mxu0 %v1903
    %2762 = vmatpush1.bf16.msra.mxu0 %v1902
    %2763 = vmatprep.subr.bf16.mxu0 %v1896
    %2764 = vmatpush1.bf16.msra.mxu0 %v1895
    %2765 = vmatprep.subr.bf16.mxu0 %v1889
    %2766 = vmatpush1.bf16.msra.mxu0 %v1888
    %2767 = vmatprep.subr.bf16.mxu0 %v1882
    %2768 = vmatpush1.bf16.msra.mxu0 %v1881
    %2769 = vmatprep.subr.bf16.mxu0 %v1987
    %2770 = vmatpush2.bf16.msra.mxu0 %v1986
    %2771 = vmatprep.subr.bf16.mxu0 %v1980
    %2772 = vmatpush2.bf16.msra.mxu0 %v1979
    %2773 = vmatprep.subr.bf16.mxu0 %v1973
    %2774 = vmatpush2.bf16.msra.mxu0 %v1972
    %2775 = vmatprep.subr.bf16.mxu0 %v1966
    %2776 = vmatpush2.bf16.msra.mxu0 %v1965
    %2777 = vmatprep.subr.bf16.mxu0 %v1959
    %2778 = vmatpush2.bf16.msra.mxu0 %v1958
    %2779 = vmatprep.subr.bf16.mxu0 %v1952
    %2780 = vmatpush2.bf16.msra.mxu0 %v1951
    %2781 = vmatprep.subr.bf16.mxu0 %v1945
    %2782 = vmatpush2.bf16.msra.mxu0 %v1944
    %2783 = vmatprep.subr.bf16.mxu0 %v1938
    %2784 = vmatpush2.bf16.msra.mxu0 %v1937
    %2785 = vmatprep.mubr.bf16.mxu0 %v144
    %2786 = vmatmul.mubr.bf16.gmra.mxu0 %v143
    %v2787 = vpop.f32.mrf.mxu0
    %v2788 = vadd.f32 %v2747, %v2787
    %v2789 = vpop.f32.mrf.mxu0
    %v2790 = vadd.f32 %v2749, %v2789
    %v2791 = vpop.f32.mrf.mxu0
    %v2792 = vpop.f32.mrf.mxu0
    %2793 = vdwg.mxu0
    %2794 = vmatprep.subr.bf16.mxu0 0
    %2795 = vmatpush1.bf16.msra.mxu0 0
    %2796 = vmatprep.subr.bf16.mxu0 0
    %2797 = vmatpush1.bf16.msra.mxu0 0
    %2798 = vmatprep.subr.bf16.mxu0 0
    %2799 = vmatpush1.bf16.msra.mxu0 0
    %2800 = vmatprep.subr.bf16.mxu0 0
    %2801 = vmatpush1.bf16.msra.mxu0 0
    %2802 = vmatprep.subr.bf16.mxu0 0
    %2803 = vmatpush1.bf16.msra.mxu0 0
    %2804 = vmatprep.subr.bf16.mxu0 0
    %2805 = vmatpush1.bf16.msra.mxu0 0
    %2806 = vmatprep.subr.bf16.mxu0 0
    %2807 = vmatpush1.bf16.msra.mxu0 0
    %2808 = vmatprep.subr.bf16.mxu0 %v1994
    %2809 = vmatpush1.bf16.msra.mxu0 %v1993
    %2810 = vmatprep.subr.bf16.mxu0 0
    %2811 = vmatpush2.bf16.msra.mxu0 0
    %2812 = vmatprep.subr.bf16.mxu0 0
    %2813 = vmatpush2.bf16.msra.mxu0 0
    %2814 = vmatprep.subr.bf16.mxu0 0
    %2815 = vmatpush2.bf16.msra.mxu0 0
    %2816 = vmatprep.subr.bf16.mxu0 0
    %2817 = vmatpush2.bf16.msra.mxu0 0
    %2818 = vmatprep.subr.bf16.mxu0 0
    %2819 = vmatpush2.bf16.msra.mxu0 0
    %2820 = vmatprep.subr.bf16.mxu0 0
    %2821 = vmatpush2.bf16.msra.mxu0 0
    %2822 = vmatprep.subr.bf16.mxu0 0
    %2823 = vmatpush2.bf16.msra.mxu0 0
    %2824 = vmatprep.subr.bf16.mxu0 0
    %2825 = vmatpush2.bf16.msra.mxu0 0
    %2826 = vmatprep.mubr.bf16.mxu0 0
    %2827 = vmatmul.mubr.bf16.gmra.mxu0 %v2341
    %v2828 = vpop.f32.mrf.mxu0
    %v2829 = vadd.f32 %v2788, %v2828
    %v2830 = vpop.f32.mrf.mxu0
    %v2831 = vadd.f32 %v2790, %v2830
    %v2832 = vpop.f32.mrf.mxu0
    %v2833 = vpop.f32.mrf.mxu0
    %2834 = vdwg.mxu0
    %2835 = vmatprep.subr.bf16.mxu0 0
    %2836 = vmatpush1.bf16.msra.mxu0 %v1708
    %2837 = vmatprep.subr.bf16.mxu0 0
    %2838 = vmatpush1.bf16.msra.mxu0 %v1701
    %2839 = vmatprep.subr.bf16.mxu0 0
    %2840 = vmatpush1.bf16.msra.mxu0 %v1694
    %2841 = vmatprep.subr.bf16.mxu0 0
    %2842 = vmatpush1.bf16.msra.mxu0 %v1687
    %2843 = vmatprep.subr.bf16.mxu0 0
    %2844 = vmatpush1.bf16.msra.mxu0 %v1680
    %2845 = vmatprep.subr.bf16.mxu0 0
    %2846 = vmatpush1.bf16.msra.mxu0 %v1673
    %2847 = vmatprep.subr.bf16.mxu0 0
    %2848 = vmatpush1.bf16.msra.mxu0 %v1666
    %2849 = vmatprep.subr.bf16.mxu0 0
    %2850 = vmatpush1.bf16.msra.mxu0 %v1659
    %2851 = vmatprep.subr.bf16.mxu0 0
    %2852 = vmatpush2.bf16.msra.mxu0 %v1764
    %2853 = vmatprep.subr.bf16.mxu0 0
    %2854 = vmatpush2.bf16.msra.mxu0 %v1757
    %2855 = vmatprep.subr.bf16.mxu0 0
    %2856 = vmatpush2.bf16.msra.mxu0 %v1750
    %2857 = vmatprep.subr.bf16.mxu0 0
    %2858 = vmatpush2.bf16.msra.mxu0 %v1743
    %2859 = vmatprep.subr.bf16.mxu0 0
    %2860 = vmatpush2.bf16.msra.mxu0 %v1736
    %2861 = vmatprep.subr.bf16.mxu0 0
    %2862 = vmatpush2.bf16.msra.mxu0 %v1729
    %2863 = vmatprep.subr.bf16.mxu0 0
    %2864 = vmatpush2.bf16.msra.mxu0 %v1722
    %2865 = vmatprep.subr.bf16.mxu0 0
    %2866 = vmatpush2.bf16.msra.mxu0 %v1715
    %2867 = vmatprep.mubr.bf16.mxu0 %v140
    %2868 = vmatmul.mubr.bf16.gmra.mxu0 %v139
    %v2869 = vpop.f32.mrf.mxu0
    %v2870 = vadd.f32 %v567, %v2869
    %v2871 = vpop.f32.mrf.mxu0
    %v2872 = vpop.f32.mrf.mxu0
    %v2873 = vpop.f32.mrf.mxu0
    %2874 = vdwg.mxu0
    %2875 = vmatprep.subr.bf16.mxu0 0
    %2876 = vmatpush1.bf16.msra.mxu0 %v1820
    %2877 = vmatprep.subr.bf16.mxu0 0
    %2878 = vmatpush1.bf16.msra.mxu0 %v1813
    %2879 = vmatprep.subr.bf16.mxu0 0
    %2880 = vmatpush1.bf16.msra.mxu0 %v1806
    %2881 = vmatprep.subr.bf16.mxu0 0
    %2882 = vmatpush1.bf16.msra.mxu0 %v1799
    %2883 = vmatprep.subr.bf16.mxu0 0
    %2884 = vmatpush1.bf16.msra.mxu0 %v1792
    %2885 = vmatprep.subr.bf16.mxu0 0
    %2886 = vmatpush1.bf16.msra.mxu0 %v1785
    %2887 = vmatprep.subr.bf16.mxu0 0
    %2888 = vmatpush1.bf16.msra.mxu0 %v1778
    %2889 = vmatprep.subr.bf16.mxu0 0
    %2890 = vmatpush1.bf16.msra.mxu0 %v1771
    %2891 = vmatprep.subr.bf16.mxu0 0
    %2892 = vmatpush2.bf16.msra.mxu0 %v1876
    %2893 = vmatprep.subr.bf16.mxu0 0
    %2894 = vmatpush2.bf16.msra.mxu0 %v1869
    %2895 = vmatprep.subr.bf16.mxu0 0
    %2896 = vmatpush2.bf16.msra.mxu0 %v1862
    %2897 = vmatprep.subr.bf16.mxu0 0
    %2898 = vmatpush2.bf16.msra.mxu0 %v1855
    %2899 = vmatprep.subr.bf16.mxu0 0
    %2900 = vmatpush2.bf16.msra.mxu0 %v1848
    %2901 = vmatprep.subr.bf16.mxu0 0
    %2902 = vmatpush2.bf16.msra.mxu0 %v1841
    %2903 = vmatprep.subr.bf16.mxu0 0
    %2904 = vmatpush2.bf16.msra.mxu0 %v1834
    %2905 = vmatprep.subr.bf16.mxu0 0
    %2906 = vmatpush2.bf16.msra.mxu0 %v1827
    %2907 = vmatprep.mubr.bf16.mxu0 %v142
    %2908 = vmatmul.mubr.bf16.gmra.mxu0 %v141
    %v2909 = vpop.f32.mrf.mxu0
    %v2910 = vadd.f32 %v2870, %v2909
    %v2911 = vpop.f32.mrf.mxu0
    %v2912 = vpop.f32.mrf.mxu0
    %v2913 = vpop.f32.mrf.mxu0
    %2914 = vdwg.mxu0
    %2915 = vmatprep.subr.bf16.mxu0 0
    %2916 = vmatpush1.bf16.msra.mxu0 %v1932
    %2917 = vmatprep.subr.bf16.mxu0 0
    %2918 = vmatpush1.bf16.msra.mxu0 %v1925
    %2919 = vmatprep.subr.bf16.mxu0 0
    %2920 = vmatpush1.bf16.msra.mxu0 %v1918
    %2921 = vmatprep.subr.bf16.mxu0 0
    %2922 = vmatpush1.bf16.msra.mxu0 %v1911
    %2923 = vmatprep.subr.bf16.mxu0 0
    %2924 = vmatpush1.bf16.msra.mxu0 %v1904
    %2925 = vmatprep.subr.bf16.mxu0 0
    %2926 = vmatpush1.bf16.msra.mxu0 %v1897
    %2927 = vmatprep.subr.bf16.mxu0 0
    %2928 = vmatpush1.bf16.msra.mxu0 %v1890
    %2929 = vmatprep.subr.bf16.mxu0 0
    %2930 = vmatpush1.bf16.msra.mxu0 %v1883
    %2931 = vmatprep.subr.bf16.mxu0 0
    %2932 = vmatpush2.bf16.msra.mxu0 %v1988
    %2933 = vmatprep.subr.bf16.mxu0 0
    %2934 = vmatpush2.bf16.msra.mxu0 %v1981
    %2935 = vmatprep.subr.bf16.mxu0 0
    %2936 = vmatpush2.bf16.msra.mxu0 %v1974
    %2937 = vmatprep.subr.bf16.mxu0 0
    %2938 = vmatpush2.bf16.msra.mxu0 %v1967
    %2939 = vmatprep.subr.bf16.mxu0 0
    %2940 = vmatpush2.bf16.msra.mxu0 %v1960
    %2941 = vmatprep.subr.bf16.mxu0 0
    %2942 = vmatpush2.bf16.msra.mxu0 %v1953
    %2943 = vmatprep.subr.bf16.mxu0 0
    %2944 = vmatpush2.bf16.msra.mxu0 %v1946
    %2945 = vmatprep.subr.bf16.mxu0 0
    %2946 = vmatpush2.bf16.msra.mxu0 %v1939
    %2947 = vmatprep.mubr.bf16.mxu0 %v144
    %2948 = vmatmul.mubr.bf16.gmra.mxu0 %v143
    %v2949 = vpop.f32.mrf.mxu0
    %v2950 = vadd.f32 %v2910, %v2949
    %v2951 = vpop.f32.mrf.mxu0
    %v2952 = vpop.f32.mrf.mxu0
    %v2953 = vpop.f32.mrf.mxu0
    %2954 = vdwg.mxu0
    %2955 = vmatprep.subr.bf16.mxu0 0
    %2956 = vmatpush1.bf16.msra.mxu0 0
    %2957 = vmatprep.subr.bf16.mxu0 0
    %2958 = vmatpush1.bf16.msra.mxu0 0
    %2959 = vmatprep.subr.bf16.mxu0 0
    %2960 = vmatpush1.bf16.msra.mxu0 0
    %2961 = vmatprep.subr.bf16.mxu0 0
    %2962 = vmatpush1.bf16.msra.mxu0 0
    %2963 = vmatprep.subr.bf16.mxu0 0
    %2964 = vmatpush1.bf16.msra.mxu0 0
    %2965 = vmatprep.subr.bf16.mxu0 0
    %2966 = vmatpush1.bf16.msra.mxu0 0
    %2967 = vmatprep.subr.bf16.mxu0 0
    %2968 = vmatpush1.bf16.msra.mxu0 0
    %2969 = vmatprep.subr.bf16.mxu0 0
    %2970 = vmatpush1.bf16.msra.mxu0 %v1995
    %2971 = vmatprep.subr.bf16.mxu0 0
    %2972 = vmatpush2.bf16.msra.mxu0 0
    %2973 = vmatprep.subr.bf16.mxu0 0
    %2974 = vmatpush2.bf16.msra.mxu0 0
    %2975 = vmatprep.subr.bf16.mxu0 0
    %2976 = vmatpush2.bf16.msra.mxu0 0
    %2977 = vmatprep.subr.bf16.mxu0 0
    %2978 = vmatpush2.bf16.msra.mxu0 0
    %2979 = vmatprep.subr.bf16.mxu0 0
    %2980 = vmatpush2.bf16.msra.mxu0 0
    %2981 = vmatprep.subr.bf16.mxu0 0
    %2982 = vmatpush2.bf16.msra.mxu0 0
    %2983 = vmatprep.subr.bf16.mxu0 0
    %2984 = vmatpush2.bf16.msra.mxu0 0
    %2985 = vmatprep.subr.bf16.mxu0 0
    %2986 = vmatpush2.bf16.msra.mxu0 0
    %2987 = vmatprep.mubr.bf16.mxu0 0
    %2988 = vmatmul.mubr.bf16.gmra.mxu0 %v2341
    %v2989 = vpop.f32.mrf.mxu0
    %v2990 = vadd.f32 %v2950, %v2989
    %v2991 = vpop.f32.mrf.mxu0
    %v2992 = vpop.f32.mrf.mxu0
    %v2993 = vpop.f32.mrf.mxu0
    %2994 = vdwg.mxu0
    %v2995 = vmax.f32 %v2501, 0.0
    %v2996 = vmax.f32 %v2503, 0.0
    %v2997 = vmax.f32 %v2665, 0.0
    %v2998 = vmax.f32 %v2667, 0.0
    %v2999 = vmax.f32 %v2829, 0.0
    %v3000 = vmax.f32 %v2831, 0.0
    %v3001 = vmax.f32 %v2990, 0.0
    %v3002 = vpack.c.bf16 %v2995, %v2995
    %v3003 = vpack.c.bf16 %v2996, %v2996
    %v3004 = vpack.c.bf16 %v2997, %v2997
    %v3005 = vpack.c.bf16 %v2998, %v2998
    %v3006 = vpack.c.bf16 %v2999, %v2999
    %v3007 = vpack.c.bf16 %v3000, %v3000
    %v3008 = vpack.c.bf16 %v3001, %v3001
    %v3009 = vld [vmem:[#allocation8] sm:$0xff]
    %v3010 = vld [vmem:[#allocation8 + $0x8] sm:$0xff]
    %v3011 = vld [vmem:[#allocation8 + $0x10] sm:$0xff]
    %v3012 = vld [vmem:[#allocation8 + $0x18] sm:$0xf]
    %v3013 = vld [vmem:[#allocation8 + $0x1c] sm:$0xff]
    %v3014 = vld [vmem:[#allocation8 + $0x24] sm:$0xff]
    %v3015 = vld [vmem:[#allocation8 + $0x2c] sm:$0xff]
    %v3016 = vld [vmem:[#allocation8 + $0x34] sm:$0xf]
    %v3017 = vld [vmem:[#allocation8 + $0x38] sm:$0xff]
    %v3018 = vld [vmem:[#allocation8 + $0x40] sm:$0xff]
    %v3019 = vld [vmem:[#allocation8 + $0x48] sm:$0xff]
    %v3020 = vld [vmem:[#allocation8 + $0x50] sm:$0xf]
    %v3021 = vld [vmem:[#allocation8 + $0x54] sm:$0xff]
    %v3022 = vld [vmem:[#allocation8 + $0x5c] sm:$0xff]
    %v3023 = vld [vmem:[#allocation8 + $0x64] sm:$0xff]
    %v3024 = vld [vmem:[#allocation8 + $0x6c] sm:$0xf]
    %v3025 = vld [vmem:[#allocation8 + $0x70] sm:$0xff]
    %v3026 = vld [vmem:[#allocation8 + $0x78] sm:$0xff]
    %v3027 = vld [vmem:[#allocation8 + $0x80] sm:$0xff]
    %v3028 = vld [vmem:[#allocation8 + $0x88] sm:$0xf]
    %v3029 = vld [vmem:[#allocation8 + $0x8c] sm:$0xff]
    %v3030 = vld [vmem:[#allocation8 + $0x94] sm:$0xff]
    %v3031 = vld [vmem:[#allocation8 + $0x9c] sm:$0xff]
    %v3032 = vld [vmem:[#allocation8 + $0xa4] sm:$0xf]
    %v3033 = vld [vmem:[#allocation8 + $0xa8] sm:$0xff]
    %v3034 = vld [vmem:[#allocation8 + $0xb0] sm:$0xff]
    %v3035 = vld [vmem:[#allocation8 + $0xb8] sm:$0xff]
    %v3036 = vld [vmem:[#allocation8 + $0xc0] sm:$0xf]
    %v3037 = vld [vmem:[#allocation8 + $0xc4] sm:$0xff]
    %v3038 = vld [vmem:[#allocation8 + $0xcc] sm:$0xff]
    %v3039 = vld [vmem:[#allocation8 + $0xd4] sm:$0xff]
    %v3040 = vld [vmem:[#allocation8 + $0xdc] sm:$0xf]
    %v3041 = vld [vmem:[#allocation8 + $0xe0] sm:$0xff]
    %v3042 = vld [vmem:[#allocation8 + $0xe8] sm:$0xff]
    %v3043 = vld [vmem:[#allocation8 + $0xf0] sm:$0xff]
    %v3044 = vld [vmem:[#allocation8 + $0xf8] sm:$0xf]
    %v3045 = vld [vmem:[#allocation8 + $0xfc] sm:$0xff]
    %v3046 = vld [vmem:[#allocation8 + $0x104] sm:$0xff]
    %v3047 = vld [vmem:[#allocation8 + $0x10c] sm:$0xff]
    %v3048 = vld [vmem:[#allocation8 + $0x114] sm:$0xf]
    %v3049 = vld [vmem:[#allocation8 + $0x118] sm:$0xff]
    %v3050 = vld [vmem:[#allocation8 + $0x120] sm:$0xff]
    %v3051 = vld [vmem:[#allocation8 + $0x128] sm:$0xff]
    %v3052 = vld [vmem:[#allocation8 + $0x130] sm:$0xf]
    %v3053 = vld [vmem:[#allocation8 + $0x134] sm:$0xff]
    %v3054 = vld [vmem:[#allocation8 + $0x13c] sm:$0xff]
    %v3055 = vld [vmem:[#allocation8 + $0x144] sm:$0xff]
    %v3056 = vld [vmem:[#allocation8 + $0x14c] sm:$0xf]
    %v3057 = vld [vmem:[#allocation8 + $0x150] sm:$0xff]
    %v3058 = vld [vmem:[#allocation8 + $0x158] sm:$0xff]
    %v3059 = vld [vmem:[#allocation8 + $0x160] sm:$0xff]
    %v3060 = vld [vmem:[#allocation8 + $0x168] sm:$0xf]
    %v3061 = vld [vmem:[#allocation8 + $0x16c] sm:$0xff]
    %v3062 = vld [vmem:[#allocation8 + $0x174] sm:$0xff]
    %v3063 = vld [vmem:[#allocation8 + $0x17c] sm:$0xff]
    %v3064 = vld [vmem:[#allocation8 + $0x184] sm:$0xf]
    %v3065 = vld [vmem:[#allocation8 + $0x188] sm:$0xff]
    %v3066 = vld [vmem:[#allocation8 + $0x190] sm:$0xff]
    %v3067 = vld [vmem:[#allocation8 + $0x198] sm:$0xff]
    %v3068 = vld [vmem:[#allocation8 + $0x1a0] sm:$0xf]
    %v3069 = vld [vmem:[#allocation8 + $0x1a4] sm:$0xff]
    %v3070 = vld [vmem:[#allocation8 + $0x1ac] sm:$0xff]
    %v3071 = vld [vmem:[#allocation8 + $0x1b4] sm:$0xff]
    %v3072 = vld [vmem:[#allocation8 + $0x1bc] sm:$0xf]
    %v3073 = vld [vmem:[#allocation8 + $0x1c0] sm:$0xff]
    %v3074 = vld [vmem:[#allocation8 + $0x1c8] sm:$0xff]
    %v3075 = vld [vmem:[#allocation8 + $0x1d0] sm:$0xff]
    %v3076 = vld [vmem:[#allocation8 + $0x1d8] sm:$0xf]
    %v3077 = vld [vmem:[#allocation8 + $0x1dc] sm:$0xff]
    %v3078 = vld [vmem:[#allocation8 + $0x1e4] sm:$0xff]
    %v3079 = vld [vmem:[#allocation8 + $0x1ec] sm:$0xff]
    %v3080 = vld [vmem:[#allocation8 + $0x1f4] sm:$0xf]
    %v3081 = vld [vmem:[#allocation8 + $0x1f8] sm:$0xff]
    %v3082 = vld [vmem:[#allocation8 + $0x200] sm:$0xff]
    %v3083 = vld [vmem:[#allocation8 + $0x208] sm:$0xff]
    %v3084 = vld [vmem:[#allocation8 + $0x210] sm:$0xf]
    %v3085 = vld [vmem:[#allocation8 + $0x214] sm:$0xff]
    %v3086 = vld [vmem:[#allocation8 + $0x21c] sm:$0xff]
    %v3087 = vld [vmem:[#allocation8 + $0x224] sm:$0xff]
    %v3088 = vld [vmem:[#allocation8 + $0x22c] sm:$0xf]
    %v3089 = vld [vmem:[#allocation8 + $0x230] sm:$0xff]
    %v3090 = vld [vmem:[#allocation8 + $0x238] sm:$0xff]
    %v3091 = vld [vmem:[#allocation8 + $0x240] sm:$0xff]
    %v3092 = vld [vmem:[#allocation8 + $0x248] sm:$0xf]
    %v3093 = vld [vmem:[#allocation8 + $0x24c] sm:$0xff]
    %v3094 = vld [vmem:[#allocation8 + $0x254] sm:$0xff]
    %v3095 = vld [vmem:[#allocation8 + $0x25c] sm:$0xff]
    %v3096 = vld [vmem:[#allocation8 + $0x264] sm:$0xf]
    %v3097 = vld [vmem:[#allocation8 + $0x268] sm:$0xff]
    %v3098 = vld [vmem:[#allocation8 + $0x270] sm:$0xff]
    %v3099 = vld [vmem:[#allocation8 + $0x278] sm:$0xff]
    %v3100 = vld [vmem:[#allocation8 + $0x280] sm:$0xf]
    %v3101 = vld [vmem:[#allocation8 + $0x284] sm:$0xff]
    %v3102 = vld [vmem:[#allocation8 + $0x28c] sm:$0xff]
    %v3103 = vld [vmem:[#allocation8 + $0x294] sm:$0xff]
    %v3104 = vld [vmem:[#allocation8 + $0x29c] sm:$0xf]
    %v3105 = vld [vmem:[#allocation8 + $0x2a0] sm:$0xff]
    %v3106 = vld [vmem:[#allocation8 + $0x2a8] sm:$0xff]
    %v3107 = vld [vmem:[#allocation8 + $0x2b0] sm:$0xff]
    %v3108 = vld [vmem:[#allocation8 + $0x2b8] sm:$0xf]
    %v3109 = vld [vmem:[#allocation8 + $0x2bc] sm:$0xff]
    %v3110 = vld [vmem:[#allocation8 + $0x2c4] sm:$0xff]
    %v3111 = vld [vmem:[#allocation8 + $0x2cc] sm:$0xff]
    %v3112 = vld [vmem:[#allocation8 + $0x2d4] sm:$0xf]
    %v3113 = vld [vmem:[#allocation8 + $0x2d8] sm:$0xff]
    %v3114 = vld [vmem:[#allocation8 + $0x2e0] sm:$0xff]
    %v3115 = vld [vmem:[#allocation8 + $0x2e8] sm:$0xff]
    %v3116 = vld [vmem:[#allocation8 + $0x2f0] sm:$0xf]
    %v3117 = vld [vmem:[#allocation8 + $0x2f4] sm:$0xff]
    %v3118 = vld [vmem:[#allocation8 + $0x2fc] sm:$0xff]
    %v3119 = vld [vmem:[#allocation8 + $0x304] sm:$0xff]
    %v3120 = vld [vmem:[#allocation8 + $0x30c] sm:$0xf]
    %v3121 = vld [vmem:[#allocation8 + $0x310] sm:$0xff]
    %v3122 = vld [vmem:[#allocation8 + $0x318] sm:$0xff]
    %v3123 = vld [vmem:[#allocation8 + $0x320] sm:$0xff]
    %v3124 = vld [vmem:[#allocation8 + $0x328] sm:$0xf]
    %v3125 = vld [vmem:[#allocation8 + $0x32c] sm:$0xff]
    %v3126 = vld [vmem:[#allocation8 + $0x334] sm:$0xff]
    %v3127 = vld [vmem:[#allocation8 + $0x33c] sm:$0xff]
    %v3128 = vld [vmem:[#allocation8 + $0x344] sm:$0xf]
    %v3129 = vld [vmem:[#allocation8 + $0x348] sm:$0xff]
    %v3130 = vld [vmem:[#allocation8 + $0x350] sm:$0xff]
    %v3131 = vld [vmem:[#allocation8 + $0x358] sm:$0xff]
    %v3132 = vld [vmem:[#allocation8 + $0x360] sm:$0xf]
    %v3133 = vld [vmem:[#allocation8 + $0x364] sm:$0xff]
    %v3134 = vld [vmem:[#allocation8 + $0x36c] sm:$0xff]
    %v3135 = vld [vmem:[#allocation8 + $0x374] sm:$0xff]
    %v3136 = vld [vmem:[#allocation8 + $0x37c] sm:$0xf]
    %v3137 = vld [vmem:[#allocation8 + $0x380] sm:$0xff]
    %v3138 = vld [vmem:[#allocation8 + $0x388] sm:$0xff]
    %v3139 = vld [vmem:[#allocation8 + $0x390] sm:$0xff]
    %v3140 = vld [vmem:[#allocation8 + $0x398] sm:$0xf]
    %v3141 = vld [vmem:[#allocation8 + $0x39c] sm:$0xff]
    %v3142 = vld [vmem:[#allocation8 + $0x3a4] sm:$0xff]
    %v3143 = vld [vmem:[#allocation8 + $0x3ac] sm:$0xff]
    %v3144 = vld [vmem:[#allocation8 + $0x3b4] sm:$0xf]
    %v3145 = vld [vmem:[#allocation8 + $0x3b8] sm:$0xff]
    %v3146 = vld [vmem:[#allocation8 + $0x3c0] sm:$0xff]
    %v3147 = vld [vmem:[#allocation8 + $0x3c8] sm:$0xff]
    %v3148 = vld [vmem:[#allocation8 + $0x3d0] sm:$0xf]
    %v3149 = vld [vmem:[#allocation8 + $0x3d4] sm:$0xff]
    %v3150 = vld [vmem:[#allocation8 + $0x3dc] sm:$0xff]
    %v3151 = vld [vmem:[#allocation8 + $0x3e4] sm:$0xff]
    %v3152 = vld [vmem:[#allocation8 + $0x3ec] sm:$0xf]
    %v3153 = vld [vmem:[#allocation8 + $0x3f0] sm:$0xff]
    %v3154 = vld [vmem:[#allocation8 + $0x3f8] sm:$0xff]
    %v3155 = vld [vmem:[#allocation8 + $0x400] sm:$0xff]
    %v3156 = vld [vmem:[#allocation8 + $0x408] sm:$0xf]
    %v3157 = vld [vmem:[#allocation8 + $0x40c] sm:$0xff]
    %v3158 = vld [vmem:[#allocation8 + $0x414] sm:$0xff]
    %v3159 = vld [vmem:[#allocation8 + $0x41c] sm:$0xff]
    %v3160 = vld [vmem:[#allocation8 + $0x424] sm:$0xf]
    %v3161 = vld [vmem:[#allocation8 + $0x428] sm:$0xff]
    %v3162 = vld [vmem:[#allocation8 + $0x430] sm:$0xff]
    %v3163 = vld [vmem:[#allocation8 + $0x438] sm:$0xff]
    %v3164 = vld [vmem:[#allocation8 + $0x440] sm:$0xf]
    %v3165 = vld [vmem:[#allocation8 + $0x444] sm:$0xff]
    %v3166 = vld [vmem:[#allocation8 + $0x44c] sm:$0xff]
    %v3167 = vld [vmem:[#allocation8 + $0x454] sm:$0xff]
    %v3168 = vld [vmem:[#allocation8 + $0x45c] sm:$0xf]
    %v3169 = vld [vmem:[#allocation8 + $0x460] sm:$0xff]
    %v3170 = vld [vmem:[#allocation8 + $0x468] sm:$0xff]
    %v3171 = vld [vmem:[#allocation8 + $0x470] sm:$0xff]
    %v3172 = vld [vmem:[#allocation8 + $0x478] sm:$0xf]
    %v3173 = vld [vmem:[#allocation8 + $0x47c] sm:$0xff]
    %v3174 = vld [vmem:[#allocation8 + $0x484] sm:$0xff]
    %v3175 = vld [vmem:[#allocation8 + $0x48c] sm:$0xff]
    %v3176 = vld [vmem:[#allocation8 + $0x494] sm:$0xf]
    %v3177 = vld [vmem:[#allocation8 + $0x498] sm:$0xff]
    %v3178 = vld [vmem:[#allocation8 + $0x4a0] sm:$0xff]
    %v3179 = vld [vmem:[#allocation8 + $0x4a8] sm:$0xff]
    %v3180 = vld [vmem:[#allocation8 + $0x4b0] sm:$0xf]
    %v3181 = vld [vmem:[#allocation8 + $0x4b4] sm:$0xff]
    %v3182 = vld [vmem:[#allocation8 + $0x4bc] sm:$0xff]
    %v3183 = vld [vmem:[#allocation8 + $0x4c4] sm:$0xff]
    %v3184 = vld [vmem:[#allocation8 + $0x4cc] sm:$0xf]
    %v3185 = vld [vmem:[#allocation8 + $0x4d0] sm:$0xff]
    %v3186 = vld [vmem:[#allocation8 + $0x4d8] sm:$0xff]
    %v3187 = vld [vmem:[#allocation8 + $0x4e0] sm:$0xff]
    %v3188 = vld [vmem:[#allocation8 + $0x4e8] sm:$0xf]
    %v3189 = vld [vmem:[#allocation8 + $0x4ec] sm:$0xff]
    %v3190 = vld [vmem:[#allocation8 + $0x4f4] sm:$0xff]
    %v3191 = vld [vmem:[#allocation8 + $0x4fc] sm:$0xff]
    %v3192 = vld [vmem:[#allocation8 + $0x504] sm:$0xf]
    %v3193 = vld [vmem:[#allocation8 + $0x508] sm:$0xff]
    %v3194 = vld [vmem:[#allocation8 + $0x510] sm:$0xff]
    %v3195 = vld [vmem:[#allocation8 + $0x518] sm:$0xff]
    %v3196 = vld [vmem:[#allocation8 + $0x520] sm:$0xf]
    %v3197 = vld [vmem:[#allocation8 + $0x524] sm:$0xff]
    %v3198 = vld [vmem:[#allocation8 + $0x52c] sm:$0xff]
    %v3199 = vld [vmem:[#allocation8 + $0x534] sm:$0xff]
    %v3200 = vld [vmem:[#allocation8 + $0x53c] sm:$0xf]
    %v3201 = vld [vmem:[#allocation8 + $0x540] sm:$0xff]
    %v3202 = vld [vmem:[#allocation8 + $0x548] sm:$0xff]
    %v3203 = vld [vmem:[#allocation8 + $0x550] sm:$0xff]
    %v3204 = vld [vmem:[#allocation8 + $0x558] sm:$0xf]
    %v3205 = vld [vmem:[#allocation8 + $0x55c] sm:$0xff]
    %v3206 = vld [vmem:[#allocation8 + $0x564] sm:$0xff]
    %v3207 = vld [vmem:[#allocation8 + $0x56c] sm:$0xff]
    %v3208 = vld [vmem:[#allocation8 + $0x574] sm:$0xf]
    %v3209 = vld [vmem:[#allocation8 + $0x578] sm:$0xff]
    %v3210 = vld [vmem:[#allocation8 + $0x580] sm:$0xff]
    %v3211 = vld [vmem:[#allocation8 + $0x588] sm:$0xff]
    %v3212 = vld [vmem:[#allocation8 + $0x590] sm:$0xf]
    %v3213 = vld [vmem:[#allocation8 + $0x594] sm:$0xff]
    %v3214 = vld [vmem:[#allocation8 + $0x59c] sm:$0xff]
    %v3215 = vld [vmem:[#allocation8 + $0x5a4] sm:$0xff]
    %v3216 = vld [vmem:[#allocation8 + $0x5ac] sm:$0xf]
    %v3217 = vld [vmem:[#allocation8 + $0x5b0] sm:$0xff]
    %v3218 = vld [vmem:[#allocation8 + $0x5b8] sm:$0xff]
    %v3219 = vld [vmem:[#allocation8 + $0x5c0] sm:$0xff]
    %v3220 = vld [vmem:[#allocation8 + $0x5c8] sm:$0xf]
    %v3221 = vld [vmem:[#allocation8 + $0x5cc] sm:$0xff]
    %v3222 = vld [vmem:[#allocation8 + $0x5d4] sm:$0xff]
    %v3223 = vld [vmem:[#allocation8 + $0x5dc] sm:$0xff]
    %v3224 = vld [vmem:[#allocation8 + $0x5e4] sm:$0xf]
    %v3225 = vld [vmem:[#allocation8 + $0x5e8] sm:$0xff]
    %v3226 = vld [vmem:[#allocation8 + $0x5f0] sm:$0xff]
    %v3227 = vld [vmem:[#allocation8 + $0x5f8] sm:$0xff]
    %v3228 = vld [vmem:[#allocation8 + $0x600] sm:$0xf]
    %v3229 = vld [vmem:[#allocation8 + $0x604] sm:$0xff]
    %v3230 = vld [vmem:[#allocation8 + $0x60c] sm:$0xff]
    %v3231 = vld [vmem:[#allocation8 + $0x614] sm:$0xff]
    %v3232 = vld [vmem:[#allocation8 + $0x61c] sm:$0xf]
    %v3233 = vld [vmem:[#allocation8 + $0x620] sm:$0xff]
    %v3234 = vld [vmem:[#allocation8 + $0x628] sm:$0xff]
    %v3235 = vld [vmem:[#allocation8 + $0x630] sm:$0xff]
    %v3236 = vld [vmem:[#allocation8 + $0x638] sm:$0xf]
    %v3237 = vld [vmem:[#allocation8 + $0x63c] sm:$0xff]
    %v3238 = vld [vmem:[#allocation8 + $0x644] sm:$0xff]
    %v3239 = vld [vmem:[#allocation8 + $0x64c] sm:$0xff]
    %v3240 = vld [vmem:[#allocation8 + $0x654] sm:$0xf]
    %v3241 = vld [vmem:[#allocation8 + $0x658] sm:$0xff]
    %v3242 = vld [vmem:[#allocation8 + $0x660] sm:$0xff]
    %v3243 = vld [vmem:[#allocation8 + $0x668] sm:$0xff]
    %v3244 = vld [vmem:[#allocation8 + $0x670] sm:$0xf]
    %v3245 = vld [vmem:[#allocation8 + $0x674] sm:$0xff]
    %v3246 = vld [vmem:[#allocation8 + $0x67c] sm:$0xff]
    %v3247 = vld [vmem:[#allocation8 + $0x684] sm:$0xff]
    %v3248 = vld [vmem:[#allocation8 + $0x68c] sm:$0xf]
    %v3249 = vld [vmem:[#allocation8 + $0x690] sm:$0xff]
    %v3250 = vld [vmem:[#allocation8 + $0x698] sm:$0xff]
    %v3251 = vld [vmem:[#allocation8 + $0x6a0] sm:$0xff]
    %v3252 = vld [vmem:[#allocation8 + $0x6a8] sm:$0xf]
    %v3253 = vld [vmem:[#allocation8 + $0x6ac] sm:$0xff]
    %v3254 = vld [vmem:[#allocation8 + $0x6b4] sm:$0xff]
    %v3255 = vld [vmem:[#allocation8 + $0x6bc] sm:$0xff]
    %v3256 = vld [vmem:[#allocation8 + $0x6c4] sm:$0xf]
    %v3257 = vld [vmem:[#allocation8 + $0x6c8] sm:$0xff]
    %v3258 = vld [vmem:[#allocation8 + $0x6d0] sm:$0xff]
    %v3259 = vld [vmem:[#allocation8 + $0x6d8] sm:$0xff]
    %v3260 = vld [vmem:[#allocation8 + $0x6e0] sm:$0xf]
    %v3261 = vld [vmem:[#allocation8 + $0x6e4] sm:$0xff]
    %v3262 = vld [vmem:[#allocation8 + $0x6ec] sm:$0xff]
    %v3263 = vld [vmem:[#allocation8 + $0x6f4] sm:$0xff]
    %v3264 = vld [vmem:[#allocation8 + $0x6fc] sm:$0xf]
    %v3265 = vld [vmem:[#allocation8 + $0x700] sm:$0xff]
    %v3266 = vld [vmem:[#allocation8 + $0x708] sm:$0xff]
    %v3267 = vld [vmem:[#allocation8 + $0x710] sm:$0xff]
    %v3268 = vld [vmem:[#allocation8 + $0x718] sm:$0xf]
    %v3269 = vld [vmem:[#allocation8 + $0x71c] sm:$0xff]
    %v3270 = vld [vmem:[#allocation8 + $0x724] sm:$0xff]
    %v3271 = vld [vmem:[#allocation8 + $0x72c] sm:$0xff]
    %v3272 = vld [vmem:[#allocation8 + $0x734] sm:$0xf]
    %v3273 = vld [vmem:[#allocation8 + $0x738] sm:$0xff]
    %v3274 = vld [vmem:[#allocation8 + $0x740] sm:$0xff]
    %v3275 = vld [vmem:[#allocation8 + $0x748] sm:$0xff]
    %v3276 = vld [vmem:[#allocation8 + $0x750] sm:$0xf]
    %v3277 = vld [vmem:[#allocation8 + $0x754] sm:$0xff]
    %v3278 = vld [vmem:[#allocation8 + $0x75c] sm:$0xff]
    %v3279 = vld [vmem:[#allocation8 + $0x764] sm:$0xff]
    %v3280 = vld [vmem:[#allocation8 + $0x76c] sm:$0xf]
    %v3281 = vld [vmem:[#allocation8 + $0x770] sm:$0xff]
    %v3282 = vld [vmem:[#allocation8 + $0x778] sm:$0xff]
    %v3283 = vld [vmem:[#allocation8 + $0x780] sm:$0xff]
    %v3284 = vld [vmem:[#allocation8 + $0x788] sm:$0xf]
    %v3285 = vld [vmem:[#allocation8 + $0x78c] sm:$0xff]
    %v3286 = vld [vmem:[#allocation8 + $0x794] sm:$0xff]
    %v3287 = vld [vmem:[#allocation8 + $0x79c] sm:$0xff]
    %v3288 = vld [vmem:[#allocation8 + $0x7a4] sm:$0xf]
    %v3289 = vld [vmem:[#allocation8 + $0x7a8] sm:$0xff]
    %v3290 = vld [vmem:[#allocation8 + $0x7b0] sm:$0xff]
    %v3291 = vld [vmem:[#allocation8 + $0x7b8] sm:$0xff]
    %v3292 = vld [vmem:[#allocation8 + $0x7c0] sm:$0xf]
    %v3293 = vld [vmem:[#allocation8 + $0x7c4] sm:$0xff]
    %v3294 = vld [vmem:[#allocation8 + $0x7cc] sm:$0xff]
    %v3295 = vld [vmem:[#allocation8 + $0x7d4] sm:$0xff]
    %v3296 = vld [vmem:[#allocation8 + $0x7dc] sm:$0xf]
    %v3297 = vld [vmem:[#allocation8 + $0x7e0] sm:$0xff]
    %v3298 = vld [vmem:[#allocation8 + $0x7e8] sm:$0xff]
    %v3299 = vld [vmem:[#allocation8 + $0x7f0] sm:$0xff]
    %v3300 = vld [vmem:[#allocation8 + $0x7f8] sm:$0xf]
    %v3301 = vld [vmem:[#allocation8 + $0x7fc] sm:$0xff]
    %v3302 = vld [vmem:[#allocation8 + $0x804] sm:$0xff]
    %v3303 = vld [vmem:[#allocation8 + $0x80c] sm:$0xff]
    %v3304 = vld [vmem:[#allocation8 + $0x814] sm:$0xf]
    %v3305 = vld [vmem:[#allocation8 + $0x818] sm:$0xff]
    %v3306 = vld [vmem:[#allocation8 + $0x820] sm:$0xff]
    %v3307 = vld [vmem:[#allocation8 + $0x828] sm:$0xff]
    %v3308 = vld [vmem:[#allocation8 + $0x830] sm:$0xf]
    %v3309 = vld [vmem:[#allocation8 + $0x834] sm:$0xff]
    %v3310 = vld [vmem:[#allocation8 + $0x83c] sm:$0xff]
    %v3311 = vld [vmem:[#allocation8 + $0x844] sm:$0xff]
    %v3312 = vld [vmem:[#allocation8 + $0x84c] sm:$0xf]
    %v3313 = vld [vmem:[#allocation8 + $0x850] sm:$0xff]
    %v3314 = vld [vmem:[#allocation8 + $0x858] sm:$0xff]
    %v3315 = vld [vmem:[#allocation8 + $0x860] sm:$0xff]
    %v3316 = vld [vmem:[#allocation8 + $0x868] sm:$0xf]
    %v3317 = vld [vmem:[#allocation8 + $0x86c] sm:$0xff]
    %v3318 = vld [vmem:[#allocation8 + $0x874] sm:$0xff]
    %v3319 = vld [vmem:[#allocation8 + $0x87c] sm:$0xff]
    %v3320 = vld [vmem:[#allocation8 + $0x884] sm:$0xf]
    %v3321 = vld [vmem:[#allocation8 + $0x888] sm:$0xff]
    %v3322 = vld [vmem:[#allocation8 + $0x890] sm:$0xff]
    %v3323 = vld [vmem:[#allocation8 + $0x898] sm:$0xff]
    %v3324 = vld [vmem:[#allocation8 + $0x8a0] sm:$0xf]
    %v3325 = vld [vmem:[#allocation8 + $0x8a4] sm:$0xff]
    %v3326 = vld [vmem:[#allocation8 + $0x8ac] sm:$0xff]
    %v3327 = vld [vmem:[#allocation8 + $0x8b4] sm:$0xff]
    %v3328 = vld [vmem:[#allocation8 + $0x8bc] sm:$0xf]
    %v3329 = vld [vmem:[#allocation8 + $0x8c0] sm:$0xff]
    %v3330 = vld [vmem:[#allocation8 + $0x8c8] sm:$0xff]
    %v3331 = vld [vmem:[#allocation8 + $0x8d0] sm:$0xff]
    %v3332 = vld [vmem:[#allocation8 + $0x8d8] sm:$0xf]
    %v3333 = vld [vmem:[#allocation8 + $0x8dc] sm:$0xff]
    %v3334 = vld [vmem:[#allocation8 + $0x8e4] sm:$0xff]
    %v3335 = vld [vmem:[#allocation8 + $0x8ec] sm:$0xff]
    %v3336 = vld [vmem:[#allocation8 + $0x8f4] sm:$0xf]
    %v3337 = vld [vmem:[#allocation8 + $0x8f8] sm:$0xff]
    %v3338 = vld [vmem:[#allocation8 + $0x900] sm:$0xff]
    %v3339 = vld [vmem:[#allocation8 + $0x908] sm:$0xff]
    %v3340 = vld [vmem:[#allocation8 + $0x910] sm:$0xf]
    %v3341 = vld [vmem:[#allocation8 + $0x914] sm:$0xff]
    %v3342 = vld [vmem:[#allocation8 + $0x91c] sm:$0xff]
    %v3343 = vld [vmem:[#allocation8 + $0x924] sm:$0xff]
    %v3344 = vld [vmem:[#allocation8 + $0x92c] sm:$0xf]
    %v3345 = vld [vmem:[#allocation8 + $0x930] sm:$0xff]
    %v3346 = vld [vmem:[#allocation8 + $0x938] sm:$0xff]
    %v3347 = vld [vmem:[#allocation8 + $0x940] sm:$0xff]
    %v3348 = vld [vmem:[#allocation8 + $0x948] sm:$0xf]
    %v3349 = vld [vmem:[#allocation8 + $0x94c] sm:$0xff]
    %v3350 = vld [vmem:[#allocation8 + $0x954] sm:$0xff]
    %v3351 = vld [vmem:[#allocation8 + $0x95c] sm:$0xff]
    %v3352 = vld [vmem:[#allocation8 + $0x964] sm:$0xf]
    %v3353 = vld [vmem:[#allocation8 + $0x968] sm:$0xff]
    %v3354 = vld [vmem:[#allocation8 + $0x970] sm:$0xff]
    %v3355 = vld [vmem:[#allocation8 + $0x978] sm:$0xff]
    %v3356 = vld [vmem:[#allocation8 + $0x980] sm:$0xf]
    %v3357 = vld [vmem:[#allocation8 + $0x984] sm:$0xff]
    %v3358 = vld [vmem:[#allocation8 + $0x98c] sm:$0xff]
    %v3359 = vld [vmem:[#allocation8 + $0x994] sm:$0xff]
    %v3360 = vld [vmem:[#allocation8 + $0x99c] sm:$0xf]
    %v3361 = vld [vmem:[#allocation8 + $0x9a0] sm:$0xff]
    %v3362 = vld [vmem:[#allocation8 + $0x9a8] sm:$0xff]
    %v3363 = vld [vmem:[#allocation8 + $0x9b0] sm:$0xff]
    %v3364 = vld [vmem:[#allocation8 + $0x9b8] sm:$0xf]
    %v3365 = vld [vmem:[#allocation8 + $0x9bc] sm:$0xff]
    %v3366 = vld [vmem:[#allocation8 + $0x9c4] sm:$0xff]
    %v3367 = vld [vmem:[#allocation8 + $0x9cc] sm:$0xff]
    %v3368 = vld [vmem:[#allocation8 + $0x9d4] sm:$0xf]
    %v3369 = vld [vmem:[#allocation8 + $0x9d8] sm:$0xff]
    %v3370 = vld [vmem:[#allocation8 + $0x9e0] sm:$0xff]
    %v3371 = vld [vmem:[#allocation8 + $0x9e8] sm:$0xff]
    %v3372 = vld [vmem:[#allocation8 + $0x9f0] sm:$0xf]
    %v3373 = vld [vmem:[#allocation8 + $0x9f4] sm:$0xff]
    %v3374 = vld [vmem:[#allocation8 + $0x9fc] sm:$0xff]
    %v3375 = vld [vmem:[#allocation8 + $0xa04] sm:$0xff]
    %v3376 = vld [vmem:[#allocation8 + $0xa0c] sm:$0xf]
    %v3377 = vld [vmem:[#allocation8 + $0xa10] sm:$0xff]
    %v3378 = vld [vmem:[#allocation8 + $0xa18] sm:$0xff]
    %v3379 = vld [vmem:[#allocation8 + $0xa20] sm:$0xff]
    %v3380 = vld [vmem:[#allocation8 + $0xa28] sm:$0xf]
    %v3381 = vld [vmem:[#allocation8 + $0xa2c] sm:$0xff]
    %v3382 = vld [vmem:[#allocation8 + $0xa34] sm:$0xff]
    %v3383 = vld [vmem:[#allocation8 + $0xa3c] sm:$0xff]
    %v3384 = vld [vmem:[#allocation8 + $0xa44] sm:$0xf]
    %v3385 = vld [vmem:[#allocation8 + $0xa48] sm:$0xff]
    %v3386 = vld [vmem:[#allocation8 + $0xa50] sm:$0xff]
    %v3387 = vld [vmem:[#allocation8 + $0xa58] sm:$0xff]
    %v3388 = vld [vmem:[#allocation8 + $0xa60] sm:$0xf]
    %v3389 = vld [vmem:[#allocation8 + $0xa64] sm:$0xff]
    %v3390 = vld [vmem:[#allocation8 + $0xa6c] sm:$0xff]
    %v3391 = vld [vmem:[#allocation8 + $0xa74] sm:$0xff]
    %v3392 = vld [vmem:[#allocation8 + $0xa7c] sm:$0xf]
    %v3393 = vld [vmem:[#allocation8 + $0xa80] sm:$0xff]
    %v3394 = vld [vmem:[#allocation8 + $0xa88] sm:$0xff]
    %v3395 = vld [vmem:[#allocation8 + $0xa90] sm:$0xff]
    %v3396 = vld [vmem:[#allocation8 + $0xa98] sm:$0xf]
    %v3397 = vld [vmem:[#allocation8 + $0xa9c] sm:$0xff]
    %v3398 = vld [vmem:[#allocation8 + $0xaa4] sm:$0xff]
    %v3399 = vld [vmem:[#allocation8 + $0xaac] sm:$0xff]
    %v3400 = vld [vmem:[#allocation8 + $0xab4] sm:$0xf]
    %v3401 = vld [vmem:[#allocation10] sm:$0x7f]
    %v3403 = vlaneseq
    %v3404 = vshrl.u32 %v3403, 7
    %v3405 = vsub.s32 0, %v3404
    %v3406 = vrot.slane %v3401, %v3405
    %v3407 = vlaneseq
    %v3408 = vshrl.u32 %v3407, 7
    %v3409 = vsub.s32 1, %v3408
    %v3410 = vrot.slane %v3401, %v3409
    %v3411 = vlaneseq
    %v3412 = vshrl.u32 %v3411, 7
    %v3413 = vsub.s32 2, %v3412
    %v3414 = vrot.slane %v3401, %v3413
    %v3415 = vlaneseq
    %v3416 = vshrl.u32 %v3415, 7
    %v3417 = vsub.s32 3, %v3416
    %v3418 = vrot.slane %v3401, %v3417
    %v3419 = vlaneseq
    %v3420 = vshrl.u32 %v3419, 7
    %v3421 = vsub.s32 4, %v3420
    %v3422 = vrot.slane %v3401, %v3421
    %v3423 = vlaneseq
    %v3424 = vshrl.u32 %v3423, 7
    %v3425 = vsub.s32 5, %v3424
    %v3426 = vrot.slane %v3401, %v3425
    %v3427 = vlaneseq
    %v3428 = vshrl.u32 %v3427, 7
    %v3429 = vsub.s32 6, %v3428
    %v3430 = vrot.slane %v3401, %v3429
    %v3830 = vunpack.c.l.b16 %v3009
    %v3831 = vunpack.c.h.b16 %v3009
    %v3832 = vunpack.c.l.b16 %v3010
    %v3833 = vunpack.c.h.b16 %v3010
    %v3834 = vunpack.c.l.b16 %v3011
    %v3835 = vunpack.c.h.b16 %v3011
    %v3836 = vunpack.c.l.b16 %v3012
    %v3837 = vunpack.c.l.b16 %v3013
    %v3838 = vunpack.c.h.b16 %v3013
    %v3839 = vunpack.c.l.b16 %v3014
    %v3840 = vunpack.c.h.b16 %v3014
    %v3841 = vunpack.c.l.b16 %v3015
    %v3842 = vunpack.c.h.b16 %v3015
    %v3843 = vunpack.c.l.b16 %v3016
    %v3844 = vunpack.c.l.b16 %v3017
    %v3845 = vunpack.c.h.b16 %v3017
    %v3846 = vunpack.c.l.b16 %v3018
    %v3847 = vunpack.c.h.b16 %v3018
    %v3848 = vunpack.c.l.b16 %v3019
    %v3849 = vunpack.c.h.b16 %v3019
    %v3850 = vunpack.c.l.b16 %v3020
    %v3851 = vunpack.c.l.b16 %v3021
    %v3852 = vunpack.c.h.b16 %v3021
    %v3853 = vunpack.c.l.b16 %v3022
    %v3854 = vunpack.c.h.b16 %v3022
    %v3855 = vunpack.c.l.b16 %v3023
    %v3856 = vunpack.c.h.b16 %v3023
    %v3857 = vunpack.c.l.b16 %v3024
    %v3858 = vunpack.c.l.b16 %v3025
    %v3859 = vunpack.c.h.b16 %v3025
    %v3860 = vunpack.c.l.b16 %v3026
    %v3861 = vunpack.c.h.b16 %v3026
    %v3862 = vunpack.c.l.b16 %v3027
    %v3863 = vunpack.c.h.b16 %v3027
    %v3864 = vunpack.c.l.b16 %v3028
    %v3865 = vunpack.c.l.b16 %v3029
    %v3866 = vunpack.c.h.b16 %v3029
    %v3867 = vunpack.c.l.b16 %v3030
    %v3868 = vunpack.c.h.b16 %v3030
    %v3869 = vunpack.c.l.b16 %v3031
    %v3870 = vunpack.c.h.b16 %v3031
    %v3871 = vunpack.c.l.b16 %v3032
    %v3872 = vunpack.c.l.b16 %v3033
    %v3873 = vunpack.c.h.b16 %v3033
    %v3874 = vunpack.c.l.b16 %v3034
    %v3875 = vunpack.c.h.b16 %v3034
    %v3876 = vunpack.c.l.b16 %v3035
    %v3877 = vunpack.c.h.b16 %v3035
    %v3878 = vunpack.c.l.b16 %v3036
    %v3879 = vunpack.c.l.b16 %v3037
    %v3880 = vunpack.c.h.b16 %v3037
    %v3881 = vunpack.c.l.b16 %v3038
    %v3882 = vunpack.c.h.b16 %v3038
    %v3883 = vunpack.c.l.b16 %v3039
    %v3884 = vunpack.c.h.b16 %v3039
    %v3885 = vunpack.c.l.b16 %v3040
    %v3886 = vunpack.c.l.b16 %v3041
    %v3887 = vunpack.c.h.b16 %v3041
    %v3888 = vunpack.c.l.b16 %v3042
    %v3889 = vunpack.c.h.b16 %v3042
    %v3890 = vunpack.c.l.b16 %v3043
    %v3891 = vunpack.c.h.b16 %v3043
    %v3892 = vunpack.c.l.b16 %v3044
    %v3893 = vunpack.c.l.b16 %v3045
    %v3894 = vunpack.c.h.b16 %v3045
    %v3895 = vunpack.c.l.b16 %v3046
    %v3896 = vunpack.c.h.b16 %v3046
    %v3897 = vunpack.c.l.b16 %v3047
    %v3898 = vunpack.c.h.b16 %v3047
    %v3899 = vunpack.c.l.b16 %v3048
    %v3900 = vunpack.c.l.b16 %v3049
    %v3901 = vunpack.c.h.b16 %v3049
    %v3902 = vunpack.c.l.b16 %v3050
    %v3903 = vunpack.c.h.b16 %v3050
    %v3904 = vunpack.c.l.b16 %v3051
    %v3905 = vunpack.c.h.b16 %v3051
    %v3906 = vunpack.c.l.b16 %v3052
    %v3907 = vunpack.c.l.b16 %v3053
    %v3908 = vunpack.c.h.b16 %v3053
    %v3909 = vunpack.c.l.b16 %v3054
    %v3910 = vunpack.c.h.b16 %v3054
    %v3911 = vunpack.c.l.b16 %v3055
    %v3912 = vunpack.c.h.b16 %v3055
    %v3913 = vunpack.c.l.b16 %v3056
    %v3914 = vunpack.c.l.b16 %v3057
    %v3915 = vunpack.c.h.b16 %v3057
    %v3916 = vunpack.c.l.b16 %v3058
    %v3917 = vunpack.c.h.b16 %v3058
    %v3918 = vunpack.c.l.b16 %v3059
    %v3919 = vunpack.c.h.b16 %v3059
    %v3920 = vunpack.c.l.b16 %v3060
    %v3921 = vunpack.c.l.b16 %v3061
    %v3922 = vunpack.c.h.b16 %v3061
    %v3923 = vunpack.c.l.b16 %v3062
    %v3924 = vunpack.c.h.b16 %v3062
    %v3925 = vunpack.c.l.b16 %v3063
    %v3926 = vunpack.c.h.b16 %v3063
    %v3927 = vunpack.c.l.b16 %v3064
    %v3928 = vunpack.c.l.b16 %v3065
    %v3929 = vunpack.c.h.b16 %v3065
    %v3930 = vunpack.c.l.b16 %v3066
    %v3931 = vunpack.c.h.b16 %v3066
    %v3932 = vunpack.c.l.b16 %v3067
    %v3933 = vunpack.c.h.b16 %v3067
    %v3934 = vunpack.c.l.b16 %v3068
    %v3935 = vunpack.c.l.b16 %v3069
    %v3936 = vunpack.c.h.b16 %v3069
    %v3937 = vunpack.c.l.b16 %v3070
    %v3938 = vunpack.c.h.b16 %v3070
    %v3939 = vunpack.c.l.b16 %v3071
    %v3940 = vunpack.c.h.b16 %v3071
    %v3941 = vunpack.c.l.b16 %v3072
    %v3942 = vunpack.c.l.b16 %v3073
    %v3943 = vunpack.c.h.b16 %v3073
    %v3944 = vunpack.c.l.b16 %v3074
    %v3945 = vunpack.c.h.b16 %v3074
    %v3946 = vunpack.c.l.b16 %v3075
    %v3947 = vunpack.c.h.b16 %v3075
    %v3948 = vunpack.c.l.b16 %v3076
    %v3949 = vunpack.c.l.b16 %v3077
    %v3950 = vunpack.c.h.b16 %v3077
    %v3951 = vunpack.c.l.b16 %v3078
    %v3952 = vunpack.c.h.b16 %v3078
    %v3953 = vunpack.c.l.b16 %v3079
    %v3954 = vunpack.c.h.b16 %v3079
    %v3955 = vunpack.c.l.b16 %v3080
    %v3956 = vunpack.c.l.b16 %v3081
    %v3957 = vunpack.c.h.b16 %v3081
    %v3958 = vunpack.c.l.b16 %v3082
    %v3959 = vunpack.c.h.b16 %v3082
    %v3960 = vunpack.c.l.b16 %v3083
    %v3961 = vunpack.c.h.b16 %v3083
    %v3962 = vunpack.c.l.b16 %v3084
    %v3963 = vunpack.c.l.b16 %v3085
    %v3964 = vunpack.c.h.b16 %v3085
    %v3965 = vunpack.c.l.b16 %v3086
    %v3966 = vunpack.c.h.b16 %v3086
    %v3967 = vunpack.c.l.b16 %v3087
    %v3968 = vunpack.c.h.b16 %v3087
    %v3969 = vunpack.c.l.b16 %v3088
    %v3970 = vunpack.c.l.b16 %v3089
    %v3971 = vunpack.c.h.b16 %v3089
    %v3972 = vunpack.c.l.b16 %v3090
    %v3973 = vunpack.c.h.b16 %v3090
    %v3974 = vunpack.c.l.b16 %v3091
    %v3975 = vunpack.c.h.b16 %v3091
    %v3976 = vunpack.c.l.b16 %v3092
    %v3977 = vunpack.c.l.b16 %v3093
    %v3978 = vunpack.c.h.b16 %v3093
    %v3979 = vunpack.c.l.b16 %v3094
    %v3980 = vunpack.c.h.b16 %v3094
    %v3981 = vunpack.c.l.b16 %v3095
    %v3982 = vunpack.c.h.b16 %v3095
    %v3983 = vunpack.c.l.b16 %v3096
    %v3984 = vunpack.c.l.b16 %v3097
    %v3985 = vunpack.c.h.b16 %v3097
    %v3986 = vunpack.c.l.b16 %v3098
    %v3987 = vunpack.c.h.b16 %v3098
    %v3988 = vunpack.c.l.b16 %v3099
    %v3989 = vunpack.c.h.b16 %v3099
    %v3990 = vunpack.c.l.b16 %v3100
    %v3991 = vunpack.c.l.b16 %v3101
    %v3992 = vunpack.c.h.b16 %v3101
    %v3993 = vunpack.c.l.b16 %v3102
    %v3994 = vunpack.c.h.b16 %v3102
    %v3995 = vunpack.c.l.b16 %v3103
    %v3996 = vunpack.c.h.b16 %v3103
    %v3997 = vunpack.c.l.b16 %v3104
    %v3998 = vunpack.c.l.b16 %v3105
    %v3999 = vunpack.c.h.b16 %v3105
    %v4000 = vunpack.c.l.b16 %v3106
    %v4001 = vunpack.c.h.b16 %v3106
    %v4002 = vunpack.c.l.b16 %v3107
    %v4003 = vunpack.c.h.b16 %v3107
    %v4004 = vunpack.c.l.b16 %v3108
    %v4005 = vunpack.c.l.b16 %v3109
    %v4006 = vunpack.c.h.b16 %v3109
    %v4007 = vunpack.c.l.b16 %v3110
    %v4008 = vunpack.c.h.b16 %v3110
    %v4009 = vunpack.c.l.b16 %v3111
    %v4010 = vunpack.c.h.b16 %v3111
    %v4011 = vunpack.c.l.b16 %v3112
    %v4012 = vunpack.c.l.b16 %v3113
    %v4013 = vunpack.c.h.b16 %v3113
    %v4014 = vunpack.c.l.b16 %v3114
    %v4015 = vunpack.c.h.b16 %v3114
    %v4016 = vunpack.c.l.b16 %v3115
    %v4017 = vunpack.c.h.b16 %v3115
    %v4018 = vunpack.c.l.b16 %v3116
    %v4019 = vunpack.c.l.b16 %v3117
    %v4020 = vunpack.c.h.b16 %v3117
    %v4021 = vunpack.c.l.b16 %v3118
    %v4022 = vunpack.c.h.b16 %v3118
    %v4023 = vunpack.c.l.b16 %v3119
    %v4024 = vunpack.c.h.b16 %v3119
    %v4025 = vunpack.c.l.b16 %v3120
    %v4026 = vunpack.c.l.b16 %v3121
    %v4027 = vunpack.c.h.b16 %v3121
    %v4028 = vunpack.c.l.b16 %v3122
    %v4029 = vunpack.c.h.b16 %v3122
    %v4030 = vunpack.c.l.b16 %v3123
    %v4031 = vunpack.c.h.b16 %v3123
    %v4032 = vunpack.c.l.b16 %v3124
    %v4033 = vunpack.c.l.b16 %v3125
    %v4034 = vunpack.c.h.b16 %v3125
    %v4035 = vunpack.c.l.b16 %v3126
    %v4036 = vunpack.c.h.b16 %v3126
    %v4037 = vunpack.c.l.b16 %v3127
    %v4038 = vunpack.c.h.b16 %v3127
    %v4039 = vunpack.c.l.b16 %v3128
    %v4040 = vunpack.c.l.b16 %v3129
    %v4041 = vunpack.c.h.b16 %v3129
    %v4042 = vunpack.c.l.b16 %v3130
    %v4043 = vunpack.c.h.b16 %v3130
    %v4044 = vunpack.c.l.b16 %v3131
    %v4045 = vunpack.c.h.b16 %v3131
    %v4046 = vunpack.c.l.b16 %v3132
    %v4047 = vunpack.c.l.b16 %v3133
    %v4048 = vunpack.c.h.b16 %v3133
    %v4049 = vunpack.c.l.b16 %v3134
    %v4050 = vunpack.c.h.b16 %v3134
    %v4051 = vunpack.c.l.b16 %v3135
    %v4052 = vunpack.c.h.b16 %v3135
    %v4053 = vunpack.c.l.b16 %v3136
    %v4054 = vunpack.c.l.b16 %v3137
    %v4055 = vunpack.c.h.b16 %v3137
    %v4056 = vunpack.c.l.b16 %v3138
    %v4057 = vunpack.c.h.b16 %v3138
    %v4058 = vunpack.c.l.b16 %v3139
    %v4059 = vunpack.c.h.b16 %v3139
    %v4060 = vunpack.c.l.b16 %v3140
    %v4061 = vunpack.c.l.b16 %v3141
    %v4062 = vunpack.c.h.b16 %v3141
    %v4063 = vunpack.c.l.b16 %v3142
    %v4064 = vunpack.c.h.b16 %v3142
    %v4065 = vunpack.c.l.b16 %v3143
    %v4066 = vunpack.c.h.b16 %v3143
    %v4067 = vunpack.c.l.b16 %v3144
    %v4068 = vunpack.c.l.b16 %v3145
    %v4069 = vunpack.c.h.b16 %v3145
    %v4070 = vunpack.c.l.b16 %v3146
    %v4071 = vunpack.c.h.b16 %v3146
    %v4072 = vunpack.c.l.b16 %v3147
    %v4073 = vunpack.c.h.b16 %v3147
    %v4074 = vunpack.c.l.b16 %v3148
    %v4075 = vunpack.c.l.b16 %v3149
    %v4076 = vunpack.c.h.b16 %v3149
    %v4077 = vunpack.c.l.b16 %v3150
    %v4078 = vunpack.c.h.b16 %v3150
    %v4079 = vunpack.c.l.b16 %v3151
    %v4080 = vunpack.c.h.b16 %v3151
    %v4081 = vunpack.c.l.b16 %v3152
    %v4082 = vunpack.c.l.b16 %v3153
    %v4083 = vunpack.c.h.b16 %v3153
    %v4084 = vunpack.c.l.b16 %v3154
    %v4085 = vunpack.c.h.b16 %v3154
    %v4086 = vunpack.c.l.b16 %v3155
    %v4087 = vunpack.c.h.b16 %v3155
    %v4088 = vunpack.c.l.b16 %v3156
    %v4089 = vunpack.c.l.b16 %v3157
    %v4090 = vunpack.c.h.b16 %v3157
    %v4091 = vunpack.c.l.b16 %v3158
    %v4092 = vunpack.c.h.b16 %v3158
    %v4093 = vunpack.c.l.b16 %v3159
    %v4094 = vunpack.c.h.b16 %v3159
    %v4095 = vunpack.c.l.b16 %v3160
    %v4096 = vunpack.c.l.b16 %v3161
    %v4097 = vunpack.c.h.b16 %v3161
    %v4098 = vunpack.c.l.b16 %v3162
    %v4099 = vunpack.c.h.b16 %v3162
    %v4100 = vunpack.c.l.b16 %v3163
    %v4101 = vunpack.c.h.b16 %v3163
    %v4102 = vunpack.c.l.b16 %v3164
    %v4103 = vunpack.c.l.b16 %v3165
    %v4104 = vunpack.c.h.b16 %v3165
    %v4105 = vunpack.c.l.b16 %v3166
    %v4106 = vunpack.c.h.b16 %v3166
    %v4107 = vunpack.c.l.b16 %v3167
    %v4108 = vunpack.c.h.b16 %v3167
    %v4109 = vunpack.c.l.b16 %v3168
    %v4110 = vunpack.c.l.b16 %v3169
    %v4111 = vunpack.c.h.b16 %v3169
    %v4112 = vunpack.c.l.b16 %v3170
    %v4113 = vunpack.c.h.b16 %v3170
    %v4114 = vunpack.c.l.b16 %v3171
    %v4115 = vunpack.c.h.b16 %v3171
    %v4116 = vunpack.c.l.b16 %v3172
    %v4117 = vunpack.c.l.b16 %v3173
    %v4118 = vunpack.c.h.b16 %v3173
    %v4119 = vunpack.c.l.b16 %v3174
    %v4120 = vunpack.c.h.b16 %v3174
    %v4121 = vunpack.c.l.b16 %v3175
    %v4122 = vunpack.c.h.b16 %v3175
    %v4123 = vunpack.c.l.b16 %v3176
    %v4124 = vunpack.c.l.b16 %v3177
    %v4125 = vunpack.c.h.b16 %v3177
    %v4126 = vunpack.c.l.b16 %v3178
    %v4127 = vunpack.c.h.b16 %v3178
    %v4128 = vunpack.c.l.b16 %v3179
    %v4129 = vunpack.c.h.b16 %v3179
    %v4130 = vunpack.c.l.b16 %v3180
    %v4131 = vunpack.c.l.b16 %v3181
    %v4132 = vunpack.c.h.b16 %v3181
    %v4133 = vunpack.c.l.b16 %v3182
    %v4134 = vunpack.c.h.b16 %v3182
    %v4135 = vunpack.c.l.b16 %v3183
    %v4136 = vunpack.c.h.b16 %v3183
    %v4137 = vunpack.c.l.b16 %v3184
    %v4138 = vunpack.c.l.b16 %v3185
    %v4139 = vunpack.c.h.b16 %v3185
    %v4140 = vunpack.c.l.b16 %v3186
    %v4141 = vunpack.c.h.b16 %v3186
    %v4142 = vunpack.c.l.b16 %v3187
    %v4143 = vunpack.c.h.b16 %v3187
    %v4144 = vunpack.c.l.b16 %v3188
    %v4145 = vunpack.c.l.b16 %v3189
    %v4146 = vunpack.c.h.b16 %v3189
    %v4147 = vunpack.c.l.b16 %v3190
    %v4148 = vunpack.c.h.b16 %v3190
    %v4149 = vunpack.c.l.b16 %v3191
    %v4150 = vunpack.c.h.b16 %v3191
    %v4151 = vunpack.c.l.b16 %v3192
    %v4152 = vunpack.c.l.b16 %v3193
    %v4153 = vunpack.c.h.b16 %v3193
    %v4154 = vunpack.c.l.b16 %v3194
    %v4155 = vunpack.c.h.b16 %v3194
    %v4156 = vunpack.c.l.b16 %v3195
    %v4157 = vunpack.c.h.b16 %v3195
    %v4158 = vunpack.c.l.b16 %v3196
    %v4159 = vunpack.c.l.b16 %v3197
    %v4160 = vunpack.c.h.b16 %v3197
    %v4161 = vunpack.c.l.b16 %v3198
    %v4162 = vunpack.c.h.b16 %v3198
    %v4163 = vunpack.c.l.b16 %v3199
    %v4164 = vunpack.c.h.b16 %v3199
    %v4165 = vunpack.c.l.b16 %v3200
    %v4166 = vunpack.c.l.b16 %v3201
    %v4167 = vunpack.c.h.b16 %v3201
    %v4168 = vunpack.c.l.b16 %v3202
    %v4169 = vunpack.c.h.b16 %v3202
    %v4170 = vunpack.c.l.b16 %v3203
    %v4171 = vunpack.c.h.b16 %v3203
    %v4172 = vunpack.c.l.b16 %v3204
    %v4173 = vunpack.c.l.b16 %v3205
    %v4174 = vunpack.c.h.b16 %v3205
    %v4175 = vunpack.c.l.b16 %v3206
    %v4176 = vunpack.c.h.b16 %v3206
    %v4177 = vunpack.c.l.b16 %v3207
    %v4178 = vunpack.c.h.b16 %v3207
    %v4179 = vunpack.c.l.b16 %v3208
    %v4180 = vunpack.c.l.b16 %v3209
    %v4181 = vunpack.c.h.b16 %v3209
    %v4182 = vunpack.c.l.b16 %v3210
    %v4183 = vunpack.c.h.b16 %v3210
    %v4184 = vunpack.c.l.b16 %v3211
    %v4185 = vunpack.c.h.b16 %v3211
    %v4186 = vunpack.c.l.b16 %v3212
    %v4187 = vunpack.c.l.b16 %v3213
    %v4188 = vunpack.c.h.b16 %v3213
    %v4189 = vunpack.c.l.b16 %v3214
    %v4190 = vunpack.c.h.b16 %v3214
    %v4191 = vunpack.c.l.b16 %v3215
    %v4192 = vunpack.c.h.b16 %v3215
    %v4193 = vunpack.c.l.b16 %v3216
    %v4194 = vunpack.c.l.b16 %v3217
    %v4195 = vunpack.c.h.b16 %v3217
    %v4196 = vunpack.c.l.b16 %v3218
    %v4197 = vunpack.c.h.b16 %v3218
    %v4198 = vunpack.c.l.b16 %v3219
    %v4199 = vunpack.c.h.b16 %v3219
    %v4200 = vunpack.c.l.b16 %v3220
    %v4201 = vunpack.c.l.b16 %v3221
    %v4202 = vunpack.c.h.b16 %v3221
    %v4203 = vunpack.c.l.b16 %v3222
    %v4204 = vunpack.c.h.b16 %v3222
    %v4205 = vunpack.c.l.b16 %v3223
    %v4206 = vunpack.c.h.b16 %v3223
    %v4207 = vunpack.c.l.b16 %v3224
    %v4208 = vunpack.c.l.b16 %v3225
    %v4209 = vunpack.c.h.b16 %v3225
    %v4210 = vunpack.c.l.b16 %v3226
    %v4211 = vunpack.c.h.b16 %v3226
    %v4212 = vunpack.c.l.b16 %v3227
    %v4213 = vunpack.c.h.b16 %v3227
    %v4214 = vunpack.c.l.b16 %v3228
    %v4215 = vunpack.c.l.b16 %v3229
    %v4216 = vunpack.c.h.b16 %v3229
    %v4217 = vunpack.c.l.b16 %v3230
    %v4218 = vunpack.c.h.b16 %v3230
    %v4219 = vunpack.c.l.b16 %v3231
    %v4220 = vunpack.c.h.b16 %v3231
    %v4221 = vunpack.c.l.b16 %v3232
    %v4222 = vunpack.c.l.b16 %v3233
    %v4223 = vunpack.c.h.b16 %v3233
    %v4224 = vunpack.c.l.b16 %v3234
    %v4225 = vunpack.c.h.b16 %v3234
    %v4226 = vunpack.c.l.b16 %v3235
    %v4227 = vunpack.c.h.b16 %v3235
    %v4228 = vunpack.c.l.b16 %v3236
    %v4229 = vunpack.c.l.b16 %v3237
    %v4230 = vunpack.c.h.b16 %v3237
    %v4231 = vunpack.c.l.b16 %v3238
    %v4232 = vunpack.c.h.b16 %v3238
    %v4233 = vunpack.c.l.b16 %v3239
    %v4234 = vunpack.c.h.b16 %v3239
    %v4235 = vunpack.c.l.b16 %v3240
    %v4236 = vunpack.c.l.b16 %v3241
    %v4237 = vunpack.c.h.b16 %v3241
    %v4238 = vunpack.c.l.b16 %v3242
    %v4239 = vunpack.c.h.b16 %v3242
    %v4240 = vunpack.c.l.b16 %v3243
    %v4241 = vunpack.c.h.b16 %v3243
    %v4242 = vunpack.c.l.b16 %v3244
    %v4243 = vunpack.c.l.b16 %v3245
    %v4244 = vunpack.c.h.b16 %v3245
    %v4245 = vunpack.c.l.b16 %v3246
    %v4246 = vunpack.c.h.b16 %v3246
    %v4247 = vunpack.c.l.b16 %v3247
    %v4248 = vunpack.c.h.b16 %v3247
    %v4249 = vunpack.c.l.b16 %v3248
    %v4250 = vunpack.c.l.b16 %v3249
    %v4251 = vunpack.c.h.b16 %v3249
    %v4252 = vunpack.c.l.b16 %v3250
    %v4253 = vunpack.c.h.b16 %v3250
    %v4254 = vunpack.c.l.b16 %v3251
    %v4255 = vunpack.c.h.b16 %v3251
    %v4256 = vunpack.c.l.b16 %v3252
    %v4257 = vunpack.c.l.b16 %v3253
    %v4258 = vunpack.c.h.b16 %v3253
    %v4259 = vunpack.c.l.b16 %v3254
    %v4260 = vunpack.c.h.b16 %v3254
    %v4261 = vunpack.c.l.b16 %v3255
    %v4262 = vunpack.c.h.b16 %v3255
    %v4263 = vunpack.c.l.b16 %v3256
    %v4264 = vunpack.c.l.b16 %v3257
    %v4265 = vunpack.c.h.b16 %v3257
    %v4266 = vunpack.c.l.b16 %v3258
    %v4267 = vunpack.c.h.b16 %v3258
    %v4268 = vunpack.c.l.b16 %v3259
    %v4269 = vunpack.c.h.b16 %v3259
    %v4270 = vunpack.c.l.b16 %v3260
    %v4271 = vunpack.c.l.b16 %v3261
    %v4272 = vunpack.c.h.b16 %v3261
    %v4273 = vunpack.c.l.b16 %v3262
    %v4274 = vunpack.c.h.b16 %v3262
    %v4275 = vunpack.c.l.b16 %v3263
    %v4276 = vunpack.c.h.b16 %v3263
    %v4277 = vunpack.c.l.b16 %v3264
    %v4278 = vunpack.c.l.b16 %v3265
    %v4279 = vunpack.c.h.b16 %v3265
    %v4280 = vunpack.c.l.b16 %v3266
    %v4281 = vunpack.c.h.b16 %v3266
    %v4282 = vunpack.c.l.b16 %v3267
    %v4283 = vunpack.c.h.b16 %v3267
    %v4284 = vunpack.c.l.b16 %v3268
    %v4285 = vunpack.c.l.b16 %v3269
    %v4286 = vunpack.c.h.b16 %v3269
    %v4287 = vunpack.c.l.b16 %v3270
    %v4288 = vunpack.c.h.b16 %v3270
    %v4289 = vunpack.c.l.b16 %v3271
    %v4290 = vunpack.c.h.b16 %v3271
    %v4291 = vunpack.c.l.b16 %v3272
    %v4292 = vunpack.c.l.b16 %v3273
    %v4293 = vunpack.c.h.b16 %v3273
    %v4294 = vunpack.c.l.b16 %v3274
    %v4295 = vunpack.c.h.b16 %v3274
    %v4296 = vunpack.c.l.b16 %v3275
    %v4297 = vunpack.c.h.b16 %v3275
    %v4298 = vunpack.c.l.b16 %v3276
    %v4299 = vunpack.c.l.b16 %v3277
    %v4300 = vunpack.c.h.b16 %v3277
    %v4301 = vunpack.c.l.b16 %v3278
    %v4302 = vunpack.c.h.b16 %v3278
    %v4303 = vunpack.c.l.b16 %v3279
    %v4304 = vunpack.c.h.b16 %v3279
    %v4305 = vunpack.c.l.b16 %v3280
    %v4306 = vunpack.c.l.b16 %v3281
    %v4307 = vunpack.c.h.b16 %v3281
    %v4308 = vunpack.c.l.b16 %v3282
    %v4309 = vunpack.c.h.b16 %v3282
    %v4310 = vunpack.c.l.b16 %v3283
    %v4311 = vunpack.c.h.b16 %v3283
    %v4312 = vunpack.c.l.b16 %v3284
    %v4313 = vunpack.c.l.b16 %v3285
    %v4314 = vunpack.c.h.b16 %v3285
    %v4315 = vunpack.c.l.b16 %v3286
    %v4316 = vunpack.c.h.b16 %v3286
    %v4317 = vunpack.c.l.b16 %v3287
    %v4318 = vunpack.c.h.b16 %v3287
    %v4319 = vunpack.c.l.b16 %v3288
    %v4320 = vunpack.c.l.b16 %v3289
    %v4321 = vunpack.c.h.b16 %v3289
    %v4322 = vunpack.c.l.b16 %v3290
    %v4323 = vunpack.c.h.b16 %v3290
    %v4324 = vunpack.c.l.b16 %v3291
    %v4325 = vunpack.c.h.b16 %v3291
    %v4326 = vunpack.c.l.b16 %v3292
    %v4327 = vunpack.c.l.b16 %v3293
    %v4328 = vunpack.c.h.b16 %v3293
    %v4329 = vunpack.c.l.b16 %v3294
    %v4330 = vunpack.c.h.b16 %v3294
    %v4331 = vunpack.c.l.b16 %v3295
    %v4332 = vunpack.c.h.b16 %v3295
    %v4333 = vunpack.c.l.b16 %v3296
    %v4334 = vunpack.c.l.b16 %v3297
    %v4335 = vunpack.c.h.b16 %v3297
    %v4336 = vunpack.c.l.b16 %v3298
    %v4337 = vunpack.c.h.b16 %v3298
    %v4338 = vunpack.c.l.b16 %v3299
    %v4339 = vunpack.c.h.b16 %v3299
    %v4340 = vunpack.c.l.b16 %v3300
    %v4341 = vunpack.c.l.b16 %v3301
    %v4342 = vunpack.c.h.b16 %v3301
    %v4343 = vunpack.c.l.b16 %v3302
    %v4344 = vunpack.c.h.b16 %v3302
    %v4345 = vunpack.c.l.b16 %v3303
    %v4346 = vunpack.c.h.b16 %v3303
    %v4347 = vunpack.c.l.b16 %v3304
    %v4348 = vunpack.c.l.b16 %v3305
    %v4349 = vunpack.c.h.b16 %v3305
    %v4350 = vunpack.c.l.b16 %v3306
    %v4351 = vunpack.c.h.b16 %v3306
    %v4352 = vunpack.c.l.b16 %v3307
    %v4353 = vunpack.c.h.b16 %v3307
    %v4354 = vunpack.c.l.b16 %v3308
    %v4355 = vunpack.c.l.b16 %v3309
    %v4356 = vunpack.c.h.b16 %v3309
    %v4357 = vunpack.c.l.b16 %v3310
    %v4358 = vunpack.c.h.b16 %v3310
    %v4359 = vunpack.c.l.b16 %v3311
    %v4360 = vunpack.c.h.b16 %v3311
    %v4361 = vunpack.c.l.b16 %v3312
    %v4362 = vunpack.c.l.b16 %v3313
    %v4363 = vunpack.c.h.b16 %v3313
    %v4364 = vunpack.c.l.b16 %v3314
    %v4365 = vunpack.c.h.b16 %v3314
    %v4366 = vunpack.c.l.b16 %v3315
    %v4367 = vunpack.c.h.b16 %v3315
    %v4368 = vunpack.c.l.b16 %v3316
    %v4369 = vunpack.c.l.b16 %v3317
    %v4370 = vunpack.c.h.b16 %v3317
    %v4371 = vunpack.c.l.b16 %v3318
    %v4372 = vunpack.c.h.b16 %v3318
    %v4373 = vunpack.c.l.b16 %v3319
    %v4374 = vunpack.c.h.b16 %v3319
    %v4375 = vunpack.c.l.b16 %v3320
    %v4376 = vunpack.c.l.b16 %v3321
    %v4377 = vunpack.c.h.b16 %v3321
    %v4378 = vunpack.c.l.b16 %v3322
    %v4379 = vunpack.c.h.b16 %v3322
    %v4380 = vunpack.c.l.b16 %v3323
    %v4381 = vunpack.c.h.b16 %v3323
    %v4382 = vunpack.c.l.b16 %v3324
    %v4383 = vunpack.c.l.b16 %v3325
    %v4384 = vunpack.c.h.b16 %v3325
    %v4385 = vunpack.c.l.b16 %v3326
    %v4386 = vunpack.c.h.b16 %v3326
    %v4387 = vunpack.c.l.b16 %v3327
    %v4388 = vunpack.c.h.b16 %v3327
    %v4389 = vunpack.c.l.b16 %v3328
    %v4390 = vunpack.c.l.b16 %v3329
    %v4391 = vunpack.c.h.b16 %v3329
    %v4392 = vunpack.c.l.b16 %v3330
    %v4393 = vunpack.c.h.b16 %v3330
    %v4394 = vunpack.c.l.b16 %v3331
    %v4395 = vunpack.c.h.b16 %v3331
    %v4396 = vunpack.c.l.b16 %v3332
    %v4397 = vunpack.c.l.b16 %v3333
    %v4398 = vunpack.c.h.b16 %v3333
    %v4399 = vunpack.c.l.b16 %v3334
    %v4400 = vunpack.c.h.b16 %v3334
    %v4401 = vunpack.c.l.b16 %v3335
    %v4402 = vunpack.c.h.b16 %v3335
    %v4403 = vunpack.c.l.b16 %v3336
    %v4404 = vunpack.c.l.b16 %v3337
    %v4405 = vunpack.c.h.b16 %v3337
    %v4406 = vunpack.c.l.b16 %v3338
    %v4407 = vunpack.c.h.b16 %v3338
    %v4408 = vunpack.c.l.b16 %v3339
    %v4409 = vunpack.c.h.b16 %v3339
    %v4410 = vunpack.c.l.b16 %v3340
    %v4411 = vunpack.c.l.b16 %v3341
    %v4412 = vunpack.c.h.b16 %v3341
    %v4413 = vunpack.c.l.b16 %v3342
    %v4414 = vunpack.c.h.b16 %v3342
    %v4415 = vunpack.c.l.b16 %v3343
    %v4416 = vunpack.c.h.b16 %v3343
    %v4417 = vunpack.c.l.b16 %v3344
    %v4418 = vunpack.c.l.b16 %v3345
    %v4419 = vunpack.c.h.b16 %v3345
    %v4420 = vunpack.c.l.b16 %v3346
    %v4421 = vunpack.c.h.b16 %v3346
    %v4422 = vunpack.c.l.b16 %v3347
    %v4423 = vunpack.c.h.b16 %v3347
    %v4424 = vunpack.c.l.b16 %v3348
    %v4425 = vunpack.c.l.b16 %v3349
    %v4426 = vunpack.c.h.b16 %v3349
    %v4427 = vunpack.c.l.b16 %v3350
    %v4428 = vunpack.c.h.b16 %v3350
    %v4429 = vunpack.c.l.b16 %v3351
    %v4430 = vunpack.c.h.b16 %v3351
    %v4431 = vunpack.c.l.b16 %v3352
    %v4432 = vunpack.c.l.b16 %v3353
    %v4433 = vunpack.c.h.b16 %v3353
    %v4434 = vunpack.c.l.b16 %v3354
    %v4435 = vunpack.c.h.b16 %v3354
    %v4436 = vunpack.c.l.b16 %v3355
    %v4437 = vunpack.c.h.b16 %v3355
    %v4438 = vunpack.c.l.b16 %v3356
    %v4439 = vunpack.c.l.b16 %v3357
    %v4440 = vunpack.c.h.b16 %v3357
    %v4441 = vunpack.c.l.b16 %v3358
    %v4442 = vunpack.c.h.b16 %v3358
    %v4443 = vunpack.c.l.b16 %v3359
    %v4444 = vunpack.c.h.b16 %v3359
    %v4445 = vunpack.c.l.b16 %v3360
    %v4446 = vunpack.c.l.b16 %v3361
    %v4447 = vunpack.c.h.b16 %v3361
    %v4448 = vunpack.c.l.b16 %v3362
    %v4449 = vunpack.c.h.b16 %v3362
    %v4450 = vunpack.c.l.b16 %v3363
    %v4451 = vunpack.c.h.b16 %v3363
    %v4452 = vunpack.c.l.b16 %v3364
    %v4453 = vunpack.c.l.b16 %v3365
    %v4454 = vunpack.c.h.b16 %v3365
    %v4455 = vunpack.c.l.b16 %v3366
    %v4456 = vunpack.c.h.b16 %v3366
    %v4457 = vunpack.c.l.b16 %v3367
    %v4458 = vunpack.c.h.b16 %v3367
    %v4459 = vunpack.c.l.b16 %v3368
    %v4460 = vunpack.c.l.b16 %v3369
    %v4461 = vunpack.c.h.b16 %v3369
    %v4462 = vunpack.c.l.b16 %v3370
    %v4463 = vunpack.c.h.b16 %v3370
    %v4464 = vunpack.c.l.b16 %v3371
    %v4465 = vunpack.c.h.b16 %v3371
    %v4466 = vunpack.c.l.b16 %v3372
    %v4467 = vunpack.c.l.b16 %v3373
    %v4468 = vunpack.c.h.b16 %v3373
    %v4469 = vunpack.c.l.b16 %v3374
    %v4470 = vunpack.c.h.b16 %v3374
    %v4471 = vunpack.c.l.b16 %v3375
    %v4472 = vunpack.c.h.b16 %v3375
    %v4473 = vunpack.c.l.b16 %v3376
    %v4474 = vunpack.c.l.b16 %v3377
    %v4475 = vunpack.c.h.b16 %v3377
    %v4476 = vunpack.c.l.b16 %v3378
    %v4477 = vunpack.c.h.b16 %v3378
    %v4478 = vunpack.c.l.b16 %v3379
    %v4479 = vunpack.c.h.b16 %v3379
    %v4480 = vunpack.c.l.b16 %v3380
    %v4481 = vunpack.c.l.b16 %v3381
    %v4482 = vunpack.c.h.b16 %v3381
    %v4483 = vunpack.c.l.b16 %v3382
    %v4484 = vunpack.c.h.b16 %v3382
    %v4485 = vunpack.c.l.b16 %v3383
    %v4486 = vunpack.c.h.b16 %v3383
    %v4487 = vunpack.c.l.b16 %v3384
    %v4488 = vunpack.c.l.b16 %v3385
    %v4489 = vunpack.c.h.b16 %v3385
    %v4490 = vunpack.c.l.b16 %v3386
    %v4491 = vunpack.c.h.b16 %v3386
    %v4492 = vunpack.c.l.b16 %v3387
    %v4493 = vunpack.c.h.b16 %v3387
    %v4494 = vunpack.c.l.b16 %v3388
    %v4495 = vunpack.c.l.b16 %v3389
    %v4496 = vunpack.c.h.b16 %v3389
    %v4497 = vunpack.c.l.b16 %v3390
    %v4498 = vunpack.c.h.b16 %v3390
    %v4499 = vunpack.c.l.b16 %v3391
    %v4500 = vunpack.c.h.b16 %v3391
    %v4501 = vunpack.c.l.b16 %v3392
    %v4502 = vunpack.c.l.b16 %v3393
    %v4503 = vunpack.c.h.b16 %v3393
    %v4504 = vunpack.c.l.b16 %v3394
    %v4505 = vunpack.c.h.b16 %v3394
    %v4506 = vunpack.c.l.b16 %v3395
    %v4507 = vunpack.c.h.b16 %v3395
    %v4508 = vunpack.c.l.b16 %v3396
    %v4509 = vunpack.c.l.b16 %v3397
    %v4510 = vunpack.c.h.b16 %v3397
    %v4511 = vunpack.c.l.b16 %v3398
    %v4512 = vunpack.c.h.b16 %v3398
    %v4513 = vunpack.c.l.b16 %v3399
    %v4514 = vunpack.c.h.b16 %v3399
    %v4515 = vunpack.c.l.b16 %v3400
    %v4516 = vpack.c.b16 %v3837, %v3830
    %v4517 = vpack.c.b16 %v3838, %v3831
    %v4518 = vpack.c.b16 %v3839, %v3832
    %v4519 = vpack.c.b16 %v3840, %v3833
    %v4520 = vpack.c.b16 %v3841, %v3834
    %v4521 = vpack.c.b16 %v3842, %v3835
    %v4522 = vpack.c.b16 %v3843, %v3836
    %v4523 = vpack.c.b16 %v3851, %v3844
    %v4524 = vpack.c.b16 %v3852, %v3845
    %v4525 = vpack.c.b16 %v3853, %v3846
    %v4526 = vpack.c.b16 %v3854, %v3847
    %v4527 = vpack.c.b16 %v3855, %v3848
    %v4528 = vpack.c.b16 %v3856, %v3849
    %v4529 = vpack.c.b16 %v3857, %v3850
    %v4530 = vpack.c.b16 %v3865, %v3858
    %v4531 = vpack.c.b16 %v3866, %v3859
    %v4532 = vpack.c.b16 %v3867, %v3860
    %v4533 = vpack.c.b16 %v3868, %v3861
    %v4534 = vpack.c.b16 %v3869, %v3862
    %v4535 = vpack.c.b16 %v3870, %v3863
    %v4536 = vpack.c.b16 %v3871, %v3864
    %v4537 = vpack.c.b16 %v3879, %v3872
    %v4538 = vpack.c.b16 %v3880, %v3873
    %v4539 = vpack.c.b16 %v3881, %v3874
    %v4540 = vpack.c.b16 %v3882, %v3875
    %v4541 = vpack.c.b16 %v3883, %v3876
    %v4542 = vpack.c.b16 %v3884, %v3877
    %v4543 = vpack.c.b16 %v3885, %v3878
    %v4544 = vpack.c.b16 %v3893, %v3886
    %v4545 = vpack.c.b16 %v3894, %v3887
    %v4546 = vpack.c.b16 %v3895, %v3888
    %v4547 = vpack.c.b16 %v3896, %v3889
    %v4548 = vpack.c.b16 %v3897, %v3890
    %v4549 = vpack.c.b16 %v3898, %v3891
    %v4550 = vpack.c.b16 %v3899, %v3892
    %v4551 = vpack.c.b16 %v3907, %v3900
    %v4552 = vpack.c.b16 %v3908, %v3901
    %v4553 = vpack.c.b16 %v3909, %v3902
    %v4554 = vpack.c.b16 %v3910, %v3903
    %v4555 = vpack.c.b16 %v3911, %v3904
    %v4556 = vpack.c.b16 %v3912, %v3905
    %v4557 = vpack.c.b16 %v3913, %v3906
    %v4558 = vpack.c.b16 %v3921, %v3914
    %v4559 = vpack.c.b16 %v3922, %v3915
    %v4560 = vpack.c.b16 %v3923, %v3916
    %v4561 = vpack.c.b16 %v3924, %v3917
    %v4562 = vpack.c.b16 %v3925, %v3918
    %v4563 = vpack.c.b16 %v3926, %v3919
    %v4564 = vpack.c.b16 %v3927, %v3920
    %v4565 = vpack.c.b16 %v3935, %v3928
    %v4566 = vpack.c.b16 %v3936, %v3929
    %v4567 = vpack.c.b16 %v3937, %v3930
    %v4568 = vpack.c.b16 %v3938, %v3931
    %v4569 = vpack.c.b16 %v3939, %v3932
    %v4570 = vpack.c.b16 %v3940, %v3933
    %v4571 = vpack.c.b16 %v3941, %v3934
    %v4572 = vpack.c.b16 %v3949, %v3942
    %v4573 = vpack.c.b16 %v3950, %v3943
    %v4574 = vpack.c.b16 %v3951, %v3944
    %v4575 = vpack.c.b16 %v3952, %v3945
    %v4576 = vpack.c.b16 %v3953, %v3946
    %v4577 = vpack.c.b16 %v3954, %v3947
    %v4578 = vpack.c.b16 %v3955, %v3948
    %v4579 = vpack.c.b16 %v3963, %v3956
    %v4580 = vpack.c.b16 %v3964, %v3957
    %v4581 = vpack.c.b16 %v3965, %v3958
    %v4582 = vpack.c.b16 %v3966, %v3959
    %v4583 = vpack.c.b16 %v3967, %v3960
    %v4584 = vpack.c.b16 %v3968, %v3961
    %v4585 = vpack.c.b16 %v3969, %v3962
    %v4586 = vpack.c.b16 %v3977, %v3970
    %v4587 = vpack.c.b16 %v3978, %v3971
    %v4588 = vpack.c.b16 %v3979, %v3972
    %v4589 = vpack.c.b16 %v3980, %v3973
    %v4590 = vpack.c.b16 %v3981, %v3974
    %v4591 = vpack.c.b16 %v3982, %v3975
    %v4592 = vpack.c.b16 %v3983, %v3976
    %v4593 = vpack.c.b16 %v3991, %v3984
    %v4594 = vpack.c.b16 %v3992, %v3985
    %v4595 = vpack.c.b16 %v3993, %v3986
    %v4596 = vpack.c.b16 %v3994, %v3987
    %v4597 = vpack.c.b16 %v3995, %v3988
    %v4598 = vpack.c.b16 %v3996, %v3989
    %v4599 = vpack.c.b16 %v3997, %v3990
    %v4600 = vpack.c.b16 %v4005, %v3998
    %v4601 = vpack.c.b16 %v4006, %v3999
    %v4602 = vpack.c.b16 %v4007, %v4000
    %v4603 = vpack.c.b16 %v4008, %v4001
    %v4604 = vpack.c.b16 %v4009, %v4002
    %v4605 = vpack.c.b16 %v4010, %v4003
    %v4606 = vpack.c.b16 %v4011, %v4004
    %v4607 = vpack.c.b16 %v4019, %v4012
    %v4608 = vpack.c.b16 %v4020, %v4013
    %v4609 = vpack.c.b16 %v4021, %v4014
    %v4610 = vpack.c.b16 %v4022, %v4015
    %v4611 = vpack.c.b16 %v4023, %v4016
    %v4612 = vpack.c.b16 %v4024, %v4017
    %v4613 = vpack.c.b16 %v4025, %v4018
    %v4614 = vpack.c.b16 %v4033, %v4026
    %v4615 = vpack.c.b16 %v4034, %v4027
    %v4616 = vpack.c.b16 %v4035, %v4028
    %v4617 = vpack.c.b16 %v4036, %v4029
    %v4618 = vpack.c.b16 %v4037, %v4030
    %v4619 = vpack.c.b16 %v4038, %v4031
    %v4620 = vpack.c.b16 %v4039, %v4032
    %v4621 = vpack.c.b16 %v4047, %v4040
    %v4622 = vpack.c.b16 %v4048, %v4041
    %v4623 = vpack.c.b16 %v4049, %v4042
    %v4624 = vpack.c.b16 %v4050, %v4043
    %v4625 = vpack.c.b16 %v4051, %v4044
    %v4626 = vpack.c.b16 %v4052, %v4045
    %v4627 = vpack.c.b16 %v4053, %v4046
    %v4628 = vpack.c.b16 %v4061, %v4054
    %v4629 = vpack.c.b16 %v4062, %v4055
    %v4630 = vpack.c.b16 %v4063, %v4056
    %v4631 = vpack.c.b16 %v4064, %v4057
    %v4632 = vpack.c.b16 %v4065, %v4058
    %v4633 = vpack.c.b16 %v4066, %v4059
    %v4634 = vpack.c.b16 %v4067, %v4060
    %v4635 = vpack.c.b16 %v4075, %v4068
    %v4636 = vpack.c.b16 %v4076, %v4069
    %v4637 = vpack.c.b16 %v4077, %v4070
    %v4638 = vpack.c.b16 %v4078, %v4071
    %v4639 = vpack.c.b16 %v4079, %v4072
    %v4640 = vpack.c.b16 %v4080, %v4073
    %v4641 = vpack.c.b16 %v4081, %v4074
    %v4642 = vpack.c.b16 %v4089, %v4082
    %v4643 = vpack.c.b16 %v4090, %v4083
    %v4644 = vpack.c.b16 %v4091, %v4084
    %v4645 = vpack.c.b16 %v4092, %v4085
    %v4646 = vpack.c.b16 %v4093, %v4086
    %v4647 = vpack.c.b16 %v4094, %v4087
    %v4648 = vpack.c.b16 %v4095, %v4088
    %v4649 = vpack.c.b16 %v4103, %v4096
    %v4650 = vpack.c.b16 %v4104, %v4097
    %v4651 = vpack.c.b16 %v4105, %v4098
    %v4652 = vpack.c.b16 %v4106, %v4099
    %v4653 = vpack.c.b16 %v4107, %v4100
    %v4654 = vpack.c.b16 %v4108, %v4101
    %v4655 = vpack.c.b16 %v4109, %v4102
    %v4656 = vpack.c.b16 %v4117, %v4110
    %v4657 = vpack.c.b16 %v4118, %v4111
    %v4658 = vpack.c.b16 %v4119, %v4112
    %v4659 = vpack.c.b16 %v4120, %v4113
    %v4660 = vpack.c.b16 %v4121, %v4114
    %v4661 = vpack.c.b16 %v4122, %v4115
    %v4662 = vpack.c.b16 %v4123, %v4116
    %v4663 = vpack.c.b16 %v4131, %v4124
    %v4664 = vpack.c.b16 %v4132, %v4125
    %v4665 = vpack.c.b16 %v4133, %v4126
    %v4666 = vpack.c.b16 %v4134, %v4127
    %v4667 = vpack.c.b16 %v4135, %v4128
    %v4668 = vpack.c.b16 %v4136, %v4129
    %v4669 = vpack.c.b16 %v4137, %v4130
    %v4670 = vpack.c.b16 %v4145, %v4138
    %v4671 = vpack.c.b16 %v4146, %v4139
    %v4672 = vpack.c.b16 %v4147, %v4140
    %v4673 = vpack.c.b16 %v4148, %v4141
    %v4674 = vpack.c.b16 %v4149, %v4142
    %v4675 = vpack.c.b16 %v4150, %v4143
    %v4676 = vpack.c.b16 %v4151, %v4144
    %v4677 = vpack.c.b16 %v4159, %v4152
    %v4678 = vpack.c.b16 %v4160, %v4153
    %v4679 = vpack.c.b16 %v4161, %v4154
    %v4680 = vpack.c.b16 %v4162, %v4155
    %v4681 = vpack.c.b16 %v4163, %v4156
    %v4682 = vpack.c.b16 %v4164, %v4157
    %v4683 = vpack.c.b16 %v4165, %v4158
    %v4684 = vpack.c.b16 %v4173, %v4166
    %v4685 = vpack.c.b16 %v4174, %v4167
    %v4686 = vpack.c.b16 %v4175, %v4168
    %v4687 = vpack.c.b16 %v4176, %v4169
    %v4688 = vpack.c.b16 %v4177, %v4170
    %v4689 = vpack.c.b16 %v4178, %v4171
    %v4690 = vpack.c.b16 %v4179, %v4172
    %v4691 = vpack.c.b16 %v4187, %v4180
    %v4692 = vpack.c.b16 %v4188, %v4181
    %v4693 = vpack.c.b16 %v4189, %v4182
    %v4694 = vpack.c.b16 %v4190, %v4183
    %v4695 = vpack.c.b16 %v4191, %v4184
    %v4696 = vpack.c.b16 %v4192, %v4185
    %v4697 = vpack.c.b16 %v4193, %v4186
    %v4698 = vpack.c.b16 %v4201, %v4194
    %v4699 = vpack.c.b16 %v4202, %v4195
    %v4700 = vpack.c.b16 %v4203, %v4196
    %v4701 = vpack.c.b16 %v4204, %v4197
    %v4702 = vpack.c.b16 %v4205, %v4198
    %v4703 = vpack.c.b16 %v4206, %v4199
    %v4704 = vpack.c.b16 %v4207, %v4200
    %v4705 = vpack.c.b16 %v4215, %v4208
    %v4706 = vpack.c.b16 %v4216, %v4209
    %v4707 = vpack.c.b16 %v4217, %v4210
    %v4708 = vpack.c.b16 %v4218, %v4211
    %v4709 = vpack.c.b16 %v4219, %v4212
    %v4710 = vpack.c.b16 %v4220, %v4213
    %v4711 = vpack.c.b16 %v4221, %v4214
    %v4712 = vpack.c.b16 %v4229, %v4222
    %v4713 = vpack.c.b16 %v4230, %v4223
    %v4714 = vpack.c.b16 %v4231, %v4224
    %v4715 = vpack.c.b16 %v4232, %v4225
    %v4716 = vpack.c.b16 %v4233, %v4226
    %v4717 = vpack.c.b16 %v4234, %v4227
    %v4718 = vpack.c.b16 %v4235, %v4228
    %v4719 = vpack.c.b16 %v4243, %v4236
    %v4720 = vpack.c.b16 %v4244, %v4237
    %v4721 = vpack.c.b16 %v4245, %v4238
    %v4722 = vpack.c.b16 %v4246, %v4239
    %v4723 = vpack.c.b16 %v4247, %v4240
    %v4724 = vpack.c.b16 %v4248, %v4241
    %v4725 = vpack.c.b16 %v4249, %v4242
    %v4726 = vpack.c.b16 %v4257, %v4250
    %v4727 = vpack.c.b16 %v4258, %v4251
    %v4728 = vpack.c.b16 %v4259, %v4252
    %v4729 = vpack.c.b16 %v4260, %v4253
    %v4730 = vpack.c.b16 %v4261, %v4254
    %v4731 = vpack.c.b16 %v4262, %v4255
    %v4732 = vpack.c.b16 %v4263, %v4256
    %v4733 = vpack.c.b16 %v4271, %v4264
    %v4734 = vpack.c.b16 %v4272, %v4265
    %v4735 = vpack.c.b16 %v4273, %v4266
    %v4736 = vpack.c.b16 %v4274, %v4267
    %v4737 = vpack.c.b16 %v4275, %v4268
    %v4738 = vpack.c.b16 %v4276, %v4269
    %v4739 = vpack.c.b16 %v4277, %v4270
    %v4740 = vpack.c.b16 %v4285, %v4278
    %v4741 = vpack.c.b16 %v4286, %v4279
    %v4742 = vpack.c.b16 %v4287, %v4280
    %v4743 = vpack.c.b16 %v4288, %v4281
    %v4744 = vpack.c.b16 %v4289, %v4282
    %v4745 = vpack.c.b16 %v4290, %v4283
    %v4746 = vpack.c.b16 %v4291, %v4284
    %v4747 = vpack.c.b16 %v4299, %v4292
    %v4748 = vpack.c.b16 %v4300, %v4293
    %v4749 = vpack.c.b16 %v4301, %v4294
    %v4750 = vpack.c.b16 %v4302, %v4295
    %v4751 = vpack.c.b16 %v4303, %v4296
    %v4752 = vpack.c.b16 %v4304, %v4297
    %v4753 = vpack.c.b16 %v4305, %v4298
    %v4754 = vpack.c.b16 %v4313, %v4306
    %v4755 = vpack.c.b16 %v4314, %v4307
    %v4756 = vpack.c.b16 %v4315, %v4308
    %v4757 = vpack.c.b16 %v4316, %v4309
    %v4758 = vpack.c.b16 %v4317, %v4310
    %v4759 = vpack.c.b16 %v4318, %v4311
    %v4760 = vpack.c.b16 %v4319, %v4312
    %v4761 = vpack.c.b16 %v4327, %v4320
    %v4762 = vpack.c.b16 %v4328, %v4321
    %v4763 = vpack.c.b16 %v4329, %v4322
    %v4764 = vpack.c.b16 %v4330, %v4323
    %v4765 = vpack.c.b16 %v4331, %v4324
    %v4766 = vpack.c.b16 %v4332, %v4325
    %v4767 = vpack.c.b16 %v4333, %v4326
    %v4768 = vpack.c.b16 %v4341, %v4334
    %v4769 = vpack.c.b16 %v4342, %v4335
    %v4770 = vpack.c.b16 %v4343, %v4336
    %v4771 = vpack.c.b16 %v4344, %v4337
    %v4772 = vpack.c.b16 %v4345, %v4338
    %v4773 = vpack.c.b16 %v4346, %v4339
    %v4774 = vpack.c.b16 %v4347, %v4340
    %v4775 = vpack.c.b16 %v4355, %v4348
    %v4776 = vpack.c.b16 %v4356, %v4349
    %v4777 = vpack.c.b16 %v4357, %v4350
    %v4778 = vpack.c.b16 %v4358, %v4351
    %v4779 = vpack.c.b16 %v4359, %v4352
    %v4780 = vpack.c.b16 %v4360, %v4353
    %v4781 = vpack.c.b16 %v4361, %v4354
    %v4782 = vpack.c.b16 %v4369, %v4362
    %v4783 = vpack.c.b16 %v4370, %v4363
    %v4784 = vpack.c.b16 %v4371, %v4364
    %v4785 = vpack.c.b16 %v4372, %v4365
    %v4786 = vpack.c.b16 %v4373, %v4366
    %v4787 = vpack.c.b16 %v4374, %v4367
    %v4788 = vpack.c.b16 %v4375, %v4368
    %v4789 = vpack.c.b16 %v4383, %v4376
    %v4790 = vpack.c.b16 %v4384, %v4377
    %v4791 = vpack.c.b16 %v4385, %v4378
    %v4792 = vpack.c.b16 %v4386, %v4379
    %v4793 = vpack.c.b16 %v4387, %v4380
    %v4794 = vpack.c.b16 %v4388, %v4381
    %v4795 = vpack.c.b16 %v4389, %v4382
    %v4796 = vpack.c.b16 %v4397, %v4390
    %v4797 = vpack.c.b16 %v4398, %v4391
    %v4798 = vpack.c.b16 %v4399, %v4392
    %v4799 = vpack.c.b16 %v4400, %v4393
    %v4800 = vpack.c.b16 %v4401, %v4394
    %v4801 = vpack.c.b16 %v4402, %v4395
    %v4802 = vpack.c.b16 %v4403, %v4396
    %v4803 = vpack.c.b16 %v4411, %v4404
    %v4804 = vpack.c.b16 %v4412, %v4405
    %v4805 = vpack.c.b16 %v4413, %v4406
    %v4806 = vpack.c.b16 %v4414, %v4407
    %v4807 = vpack.c.b16 %v4415, %v4408
    %v4808 = vpack.c.b16 %v4416, %v4409
    %v4809 = vpack.c.b16 %v4417, %v4410
    %v4810 = vpack.c.b16 %v4425, %v4418
    %v4811 = vpack.c.b16 %v4426, %v4419
    %v4812 = vpack.c.b16 %v4427, %v4420
    %v4813 = vpack.c.b16 %v4428, %v4421
    %v4814 = vpack.c.b16 %v4429, %v4422
    %v4815 = vpack.c.b16 %v4430, %v4423
    %v4816 = vpack.c.b16 %v4431, %v4424
    %v4817 = vpack.c.b16 %v4439, %v4432
    %v4818 = vpack.c.b16 %v4440, %v4433
    %v4819 = vpack.c.b16 %v4441, %v4434
    %v4820 = vpack.c.b16 %v4442, %v4435
    %v4821 = vpack.c.b16 %v4443, %v4436
    %v4822 = vpack.c.b16 %v4444, %v4437
    %v4823 = vpack.c.b16 %v4445, %v4438
    %v4824 = vpack.c.b16 %v4453, %v4446
    %v4825 = vpack.c.b16 %v4454, %v4447
    %v4826 = vpack.c.b16 %v4455, %v4448
    %v4827 = vpack.c.b16 %v4456, %v4449
    %v4828 = vpack.c.b16 %v4457, %v4450
    %v4829 = vpack.c.b16 %v4458, %v4451
    %v4830 = vpack.c.b16 %v4459, %v4452
    %v4831 = vpack.c.b16 %v4467, %v4460
    %v4832 = vpack.c.b16 %v4468, %v4461
    %v4833 = vpack.c.b16 %v4469, %v4462
    %v4834 = vpack.c.b16 %v4470, %v4463
    %v4835 = vpack.c.b16 %v4471, %v4464
    %v4836 = vpack.c.b16 %v4472, %v4465
    %v4837 = vpack.c.b16 %v4473, %v4466
    %v4838 = vpack.c.b16 %v4481, %v4474
    %v4839 = vpack.c.b16 %v4482, %v4475
    %v4840 = vpack.c.b16 %v4483, %v4476
    %v4841 = vpack.c.b16 %v4484, %v4477
    %v4842 = vpack.c.b16 %v4485, %v4478
    %v4843 = vpack.c.b16 %v4486, %v4479
    %v4844 = vpack.c.b16 %v4487, %v4480
    %v4845 = vpack.c.b16 %v4495, %v4488
    %v4846 = vpack.c.b16 %v4496, %v4489
    %v4847 = vpack.c.b16 %v4497, %v4490
    %v4848 = vpack.c.b16 %v4498, %v4491
    %v4849 = vpack.c.b16 %v4499, %v4492
    %v4850 = vpack.c.b16 %v4500, %v4493
    %v4851 = vpack.c.b16 %v4501, %v4494
    %v4852 = vpack.c.b16 %v4509, %v4502
    %v4853 = vpack.c.b16 %v4510, %v4503
    %v4854 = vpack.c.b16 %v4511, %v4504
    %v4855 = vpack.c.b16 %v4512, %v4505
    %v4856 = vpack.c.b16 %v4513, %v4506
    %v4857 = vpack.c.b16 %v4514, %v4507
    %v4858 = vpack.c.b16 %v4515, %v4508
    %v5203 = vsel %vm2339, %v3008, 0
    %5205 = vmatprep.subr.bf16.mxu0 %v4566
    %5206 = vmatpush1.bf16.msra.mxu0 %v4565
    %5207 = vmatprep.subr.bf16.mxu0 %v4559
    %5208 = vmatpush1.bf16.msra.mxu0 %v4558
    %5209 = vmatprep.subr.bf16.mxu0 %v4552
    %5210 = vmatpush1.bf16.msra.mxu0 %v4551
    %5211 = vmatprep.subr.bf16.mxu0 %v4545
    %5212 = vmatpush1.bf16.msra.mxu0 %v4544
    %5213 = vmatprep.subr.bf16.mxu0 %v4538
    %5214 = vmatpush1.bf16.msra.mxu0 %v4537
    %5215 = vmatprep.subr.bf16.mxu0 %v4531
    %5216 = vmatpush1.bf16.msra.mxu0 %v4530
    %5217 = vmatprep.subr.bf16.mxu0 %v4524
    %5218 = vmatpush1.bf16.msra.mxu0 %v4523
    %5219 = vmatprep.subr.bf16.mxu0 %v4517
    %5220 = vmatpush1.bf16.msra.mxu0 %v4516
    %5221 = vmatprep.subr.bf16.mxu0 %v4622
    %5222 = vmatpush2.bf16.msra.mxu0 %v4621
    %5223 = vmatprep.subr.bf16.mxu0 %v4615
    %5224 = vmatpush2.bf16.msra.mxu0 %v4614
    %5225 = vmatprep.subr.bf16.mxu0 %v4608
    %5226 = vmatpush2.bf16.msra.mxu0 %v4607
    %5227 = vmatprep.subr.bf16.mxu0 %v4601
    %5228 = vmatpush2.bf16.msra.mxu0 %v4600
    %5229 = vmatprep.subr.bf16.mxu0 %v4594
    %5230 = vmatpush2.bf16.msra.mxu0 %v4593
    %5231 = vmatprep.subr.bf16.mxu0 %v4587
    %5232 = vmatpush2.bf16.msra.mxu0 %v4586
    %5233 = vmatprep.subr.bf16.mxu0 %v4580
    %5234 = vmatpush2.bf16.msra.mxu0 %v4579
    %5235 = vmatprep.subr.bf16.mxu0 %v4573
    %5236 = vmatpush2.bf16.msra.mxu0 %v4572
    %5237 = vmatprep.mubr.bf16.mxu0 %v3003
    %5238 = vmatmul.mubr.bf16.gmra.mxu0 %v3002
    %v5239 = vpop.f32.mrf.mxu0
    %v5240 = vadd.f32 %v3406, %v5239
    %v5241 = vpop.f32.mrf.mxu0
    %v5242 = vadd.f32 %v3410, %v5241
    %v5243 = vpop.f32.mrf.mxu0
    %v5244 = vpop.f32.mrf.mxu0
    %5245 = vdwg.mxu0
    %5246 = vmatprep.subr.bf16.mxu0 %v4678
    %5247 = vmatpush1.bf16.msra.mxu0 %v4677
    %5248 = vmatprep.subr.bf16.mxu0 %v4671
    %5249 = vmatpush1.bf16.msra.mxu0 %v4670
    %5250 = vmatprep.subr.bf16.mxu0 %v4664
    %5251 = vmatpush1.bf16.msra.mxu0 %v4663
    %5252 = vmatprep.subr.bf16.mxu0 %v4657
    %5253 = vmatpush1.bf16.msra.mxu0 %v4656
    %5254 = vmatprep.subr.bf16.mxu0 %v4650
    %5255 = vmatpush1.bf16.msra.mxu0 %v4649
    %5256 = vmatprep.subr.bf16.mxu0 %v4643
    %5257 = vmatpush1.bf16.msra.mxu0 %v4642
    %5258 = vmatprep.subr.bf16.mxu0 %v4636
    %5259 = vmatpush1.bf16.msra.mxu0 %v4635
    %5260 = vmatprep.subr.bf16.mxu0 %v4629
    %5261 = vmatpush1.bf16.msra.mxu0 %v4628
    %5262 = vmatprep.subr.bf16.mxu0 %v4734
    %5263 = vmatpush2.bf16.msra.mxu0 %v4733
    %5264 = vmatprep.subr.bf16.mxu0 %v4727
    %5265 = vmatpush2.bf16.msra.mxu0 %v4726
    %5266 = vmatprep.subr.bf16.mxu0 %v4720
    %5267 = vmatpush2.bf16.msra.mxu0 %v4719
    %5268 = vmatprep.subr.bf16.mxu0 %v4713
    %5269 = vmatpush2.bf16.msra.mxu0 %v4712
    %5270 = vmatprep.subr.bf16.mxu0 %v4706
    %5271 = vmatpush2.bf16.msra.mxu0 %v4705
    %5272 = vmatprep.subr.bf16.mxu0 %v4699
    %5273 = vmatpush2.bf16.msra.mxu0 %v4698
    %5274 = vmatprep.subr.bf16.mxu0 %v4692
    %5275 = vmatpush2.bf16.msra.mxu0 %v4691
    %5276 = vmatprep.subr.bf16.mxu0 %v4685
    %5277 = vmatpush2.bf16.msra.mxu0 %v4684
    %5278 = vmatprep.mubr.bf16.mxu0 %v3005
    %5279 = vmatmul.mubr.bf16.gmra.mxu0 %v3004
    %v5280 = vpop.f32.mrf.mxu0
    %v5281 = vadd.f32 %v5240, %v5280
    %v5282 = vpop.f32.mrf.mxu0
    %v5283 = vadd.f32 %v5242, %v5282
    %v5284 = vpop.f32.mrf.mxu0
    %v5285 = vpop.f32.mrf.mxu0
    %5286 = vdwg.mxu0
    %5287 = vmatprep.subr.bf16.mxu0 %v4790
    %5288 = vmatpush1.bf16.msra.mxu0 %v4789
    %5289 = vmatprep.subr.bf16.mxu0 %v4783
    %5290 = vmatpush1.bf16.msra.mxu0 %v4782
    %5291 = vmatprep.subr.bf16.mxu0 %v4776
    %5292 = vmatpush1.bf16.msra.mxu0 %v4775
    %5293 = vmatprep.subr.bf16.mxu0 %v4769
    %5294 = vmatpush1.bf16.msra.mxu0 %v4768
    %5295 = vmatprep.subr.bf16.mxu0 %v4762
    %5296 = vmatpush1.bf16.msra.mxu0 %v4761
    %5297 = vmatprep.subr.bf16.mxu0 %v4755
    %5298 = vmatpush1.bf16.msra.mxu0 %v4754
    %5299 = vmatprep.subr.bf16.mxu0 %v4748
    %5300 = vmatpush1.bf16.msra.mxu0 %v4747
    %5301 = vmatprep.subr.bf16.mxu0 %v4741
    %5302 = vmatpush1.bf16.msra.mxu0 %v4740
    %5303 = vmatprep.subr.bf16.mxu0 %v4846
    %5304 = vmatpush2.bf16.msra.mxu0 %v4845
    %5305 = vmatprep.subr.bf16.mxu0 %v4839
    %5306 = vmatpush2.bf16.msra.mxu0 %v4838
    %5307 = vmatprep.subr.bf16.mxu0 %v4832
    %5308 = vmatpush2.bf16.msra.mxu0 %v4831
    %5309 = vmatprep.subr.bf16.mxu0 %v4825
    %5310 = vmatpush2.bf16.msra.mxu0 %v4824
    %5311 = vmatprep.subr.bf16.mxu0 %v4818
    %5312 = vmatpush2.bf16.msra.mxu0 %v4817
    %5313 = vmatprep.subr.bf16.mxu0 %v4811
    %5314 = vmatpush2.bf16.msra.mxu0 %v4810
    %5315 = vmatprep.subr.bf16.mxu0 %v4804
    %5316 = vmatpush2.bf16.msra.mxu0 %v4803
    %5317 = vmatprep.subr.bf16.mxu0 %v4797
    %5318 = vmatpush2.bf16.msra.mxu0 %v4796
    %5319 = vmatprep.mubr.bf16.mxu0 %v3007
    %5320 = vmatmul.mubr.bf16.gmra.mxu0 %v3006
    %v5321 = vpop.f32.mrf.mxu0
    %v5322 = vadd.f32 %v5281, %v5321
    %v5323 = vpop.f32.mrf.mxu0
    %v5324 = vadd.f32 %v5283, %v5323
    %v5325 = vpop.f32.mrf.mxu0
    %v5326 = vpop.f32.mrf.mxu0
    %5327 = vdwg.mxu0
    %5328 = vmatprep.subr.bf16.mxu0 0
    %5329 = vmatpush1.bf16.msra.mxu0 0
    %5330 = vmatprep.subr.bf16.mxu0 0
    %5331 = vmatpush1.bf16.msra.mxu0 0
    %5332 = vmatprep.subr.bf16.mxu0 0
    %5333 = vmatpush1.bf16.msra.mxu0 0
    %5334 = vmatprep.subr.bf16.mxu0 0
    %5335 = vmatpush1.bf16.msra.mxu0 0
    %5336 = vmatprep.subr.bf16.mxu0 0
    %5337 = vmatpush1.bf16.msra.mxu0 0
    %5338 = vmatprep.subr.bf16.mxu0 0
    %5339 = vmatpush1.bf16.msra.mxu0 0
    %5340 = vmatprep.subr.bf16.mxu0 0
    %5341 = vmatpush1.bf16.msra.mxu0 0
    %5342 = vmatprep.subr.bf16.mxu0 %v4853
    %5343 = vmatpush1.bf16.msra.mxu0 %v4852
    %5344 = vmatprep.subr.bf16.mxu0 0
    %5345 = vmatpush2.bf16.msra.mxu0 0
    %5346 = vmatprep.subr.bf16.mxu0 0
    %5347 = vmatpush2.bf16.msra.mxu0 0
    %5348 = vmatprep.subr.bf16.mxu0 0
    %5349 = vmatpush2.bf16.msra.mxu0 0
    %5350 = vmatprep.subr.bf16.mxu0 0
    %5351 = vmatpush2.bf16.msra.mxu0 0
    %5352 = vmatprep.subr.bf16.mxu0 0
    %5353 = vmatpush2.bf16.msra.mxu0 0
    %5354 = vmatprep.subr.bf16.mxu0 0
    %5355 = vmatpush2.bf16.msra.mxu0 0
    %5356 = vmatprep.subr.bf16.mxu0 0
    %5357 = vmatpush2.bf16.msra.mxu0 0
    %5358 = vmatprep.subr.bf16.mxu0 0
    %5359 = vmatpush2.bf16.msra.mxu0 0
    %5360 = vmatprep.mubr.bf16.mxu0 0
    %5361 = vmatmul.mubr.bf16.gmra.mxu0 %v5203
    %v5362 = vpop.f32.mrf.mxu0
    %v5363 = vadd.f32 %v5322, %v5362
    %v5364 = vpop.f32.mrf.mxu0
    %v5365 = vadd.f32 %v5324, %v5364
    %v5366 = vpop.f32.mrf.mxu0
    %v5367 = vpop.f32.mrf.mxu0
    %5368 = vdwg.mxu0
    %5369 = vmatprep.subr.bf16.mxu0 %v4568
    %5370 = vmatpush1.bf16.msra.mxu0 %v4567
    %5371 = vmatprep.subr.bf16.mxu0 %v4561
    %5372 = vmatpush1.bf16.msra.mxu0 %v4560
    %5373 = vmatprep.subr.bf16.mxu0 %v4554
    %5374 = vmatpush1.bf16.msra.mxu0 %v4553
    %5375 = vmatprep.subr.bf16.mxu0 %v4547
    %5376 = vmatpush1.bf16.msra.mxu0 %v4546
    %5377 = vmatprep.subr.bf16.mxu0 %v4540
    %5378 = vmatpush1.bf16.msra.mxu0 %v4539
    %5379 = vmatprep.subr.bf16.mxu0 %v4533
    %5380 = vmatpush1.bf16.msra.mxu0 %v4532
    %5381 = vmatprep.subr.bf16.mxu0 %v4526
    %5382 = vmatpush1.bf16.msra.mxu0 %v4525
    %5383 = vmatprep.subr.bf16.mxu0 %v4519
    %5384 = vmatpush1.bf16.msra.mxu0 %v4518
    %5385 = vmatprep.subr.bf16.mxu0 %v4624
    %5386 = vmatpush2.bf16.msra.mxu0 %v4623
    %5387 = vmatprep.subr.bf16.mxu0 %v4617
    %5388 = vmatpush2.bf16.msra.mxu0 %v4616
    %5389 = vmatprep.subr.bf16.mxu0 %v4610
    %5390 = vmatpush2.bf16.msra.mxu0 %v4609
    %5391 = vmatprep.subr.bf16.mxu0 %v4603
    %5392 = vmatpush2.bf16.msra.mxu0 %v4602
    %5393 = vmatprep.subr.bf16.mxu0 %v4596
    %5394 = vmatpush2.bf16.msra.mxu0 %v4595
    %5395 = vmatprep.subr.bf16.mxu0 %v4589
    %5396 = vmatpush2.bf16.msra.mxu0 %v4588
    %5397 = vmatprep.subr.bf16.mxu0 %v4582
    %5398 = vmatpush2.bf16.msra.mxu0 %v4581
    %5399 = vmatprep.subr.bf16.mxu0 %v4575
    %5400 = vmatpush2.bf16.msra.mxu0 %v4574
    %5401 = vmatprep.mubr.bf16.mxu0 %v3003
    %5402 = vmatmul.mubr.bf16.gmra.mxu0 %v3002
    %v5403 = vpop.f32.mrf.mxu0
    %v5404 = vadd.f32 %v3414, %v5403
    %v5405 = vpop.f32.mrf.mxu0
    %v5406 = vadd.f32 %v3418, %v5405
    %v5407 = vpop.f32.mrf.mxu0
    %v5408 = vpop.f32.mrf.mxu0
    %5409 = vdwg.mxu0
    %5410 = vmatprep.subr.bf16.mxu0 %v4680
    %5411 = vmatpush1.bf16.msra.mxu0 %v4679
    %5412 = vmatprep.subr.bf16.mxu0 %v4673
    %5413 = vmatpush1.bf16.msra.mxu0 %v4672
    %5414 = vmatprep.subr.bf16.mxu0 %v4666
    %5415 = vmatpush1.bf16.msra.mxu0 %v4665
    %5416 = vmatprep.subr.bf16.mxu0 %v4659
    %5417 = vmatpush1.bf16.msra.mxu0 %v4658
    %5418 = vmatprep.subr.bf16.mxu0 %v4652
    %5419 = vmatpush1.bf16.msra.mxu0 %v4651
    %5420 = vmatprep.subr.bf16.mxu0 %v4645
    %5421 = vmatpush1.bf16.msra.mxu0 %v4644
    %5422 = vmatprep.subr.bf16.mxu0 %v4638
    %5423 = vmatpush1.bf16.msra.mxu0 %v4637
    %5424 = vmatprep.subr.bf16.mxu0 %v4631
    %5425 = vmatpush1.bf16.msra.mxu0 %v4630
    %5426 = vmatprep.subr.bf16.mxu0 %v4736
    %5427 = vmatpush2.bf16.msra.mxu0 %v4735
    %5428 = vmatprep.subr.bf16.mxu0 %v4729
    %5429 = vmatpush2.bf16.msra.mxu0 %v4728
    %5430 = vmatprep.subr.bf16.mxu0 %v4722
    %5431 = vmatpush2.bf16.msra.mxu0 %v4721
    %5432 = vmatprep.subr.bf16.mxu0 %v4715
    %5433 = vmatpush2.bf16.msra.mxu0 %v4714
    %5434 = vmatprep.subr.bf16.mxu0 %v4708
    %5435 = vmatpush2.bf16.msra.mxu0 %v4707
    %5436 = vmatprep.subr.bf16.mxu0 %v4701
    %5437 = vmatpush2.bf16.msra.mxu0 %v4700
    %5438 = vmatprep.subr.bf16.mxu0 %v4694
    %5439 = vmatpush2.bf16.msra.mxu0 %v4693
    %5440 = vmatprep.subr.bf16.mxu0 %v4687
    %5441 = vmatpush2.bf16.msra.mxu0 %v4686
    %5442 = vmatprep.mubr.bf16.mxu0 %v3005
    %5443 = vmatmul.mubr.bf16.gmra.mxu0 %v3004
    %v5444 = vpop.f32.mrf.mxu0
    %v5445 = vadd.f32 %v5404, %v5444
    %v5446 = vpop.f32.mrf.mxu0
    %v5447 = vadd.f32 %v5406, %v5446
    %v5448 = vpop.f32.mrf.mxu0
    %v5449 = vpop.f32.mrf.mxu0
    %5450 = vdwg.mxu0
    %5451 = vmatprep.subr.bf16.mxu0 %v4792
    %5452 = vmatpush1.bf16.msra.mxu0 %v4791
    %5453 = vmatprep.subr.bf16.mxu0 %v4785
    %5454 = vmatpush1.bf16.msra.mxu0 %v4784
    %5455 = vmatprep.subr.bf16.mxu0 %v4778
    %5456 = vmatpush1.bf16.msra.mxu0 %v4777
    %5457 = vmatprep.subr.bf16.mxu0 %v4771
    %5458 = vmatpush1.bf16.msra.mxu0 %v4770
    %5459 = vmatprep.subr.bf16.mxu0 %v4764
    %5460 = vmatpush1.bf16.msra.mxu0 %v4763
    %5461 = vmatprep.subr.bf16.mxu0 %v4757
    %5462 = vmatpush1.bf16.msra.mxu0 %v4756
    %5463 = vmatprep.subr.bf16.mxu0 %v4750
    %5464 = vmatpush1.bf16.msra.mxu0 %v4749
    %5465 = vmatprep.subr.bf16.mxu0 %v4743
    %5466 = vmatpush1.bf16.msra.mxu0 %v4742
    %5467 = vmatprep.subr.bf16.mxu0 %v4848
    %5468 = vmatpush2.bf16.msra.mxu0 %v4847
    %5469 = vmatprep.subr.bf16.mxu0 %v4841
    %5470 = vmatpush2.bf16.msra.mxu0 %v4840
    %5471 = vmatprep.subr.bf16.mxu0 %v4834
    %5472 = vmatpush2.bf16.msra.mxu0 %v4833
    %5473 = vmatprep.subr.bf16.mxu0 %v4827
    %5474 = vmatpush2.bf16.msra.mxu0 %v4826
    %5475 = vmatprep.subr.bf16.mxu0 %v4820
    %5476 = vmatpush2.bf16.msra.mxu0 %v4819
    %5477 = vmatprep.subr.bf16.mxu0 %v4813
    %5478 = vmatpush2.bf16.msra.mxu0 %v4812
    %5479 = vmatprep.subr.bf16.mxu0 %v4806
    %5480 = vmatpush2.bf16.msra.mxu0 %v4805
    %5481 = vmatprep.subr.bf16.mxu0 %v4799
    %5482 = vmatpush2.bf16.msra.mxu0 %v4798
    %5483 = vmatprep.mubr.bf16.mxu0 %v3007
    %5484 = vmatmul.mubr.bf16.gmra.mxu0 %v3006
    %v5485 = vpop.f32.mrf.mxu0
    %v5486 = vadd.f32 %v5445, %v5485
    %v5487 = vpop.f32.mrf.mxu0
    %v5488 = vadd.f32 %v5447, %v5487
    %v5489 = vpop.f32.mrf.mxu0
    %v5490 = vpop.f32.mrf.mxu0
    %5491 = vdwg.mxu0
    %5492 = vmatprep.subr.bf16.mxu0 0
    %5493 = vmatpush1.bf16.msra.mxu0 0
    %5494 = vmatprep.subr.bf16.mxu0 0
    %5495 = vmatpush1.bf16.msra.mxu0 0
    %5496 = vmatprep.subr.bf16.mxu0 0
    %5497 = vmatpush1.bf16.msra.mxu0 0
    %5498 = vmatprep.subr.bf16.mxu0 0
    %5499 = vmatpush1.bf16.msra.mxu0 0
    %5500 = vmatprep.subr.bf16.mxu0 0
    %5501 = vmatpush1.bf16.msra.mxu0 0
    %5502 = vmatprep.subr.bf16.mxu0 0
    %5503 = vmatpush1.bf16.msra.mxu0 0
    %5504 = vmatprep.subr.bf16.mxu0 0
    %5505 = vmatpush1.bf16.msra.mxu0 0
    %5506 = vmatprep.subr.bf16.mxu0 %v4855
    %5507 = vmatpush1.bf16.msra.mxu0 %v4854
    %5508 = vmatprep.subr.bf16.mxu0 0
    %5509 = vmatpush2.bf16.msra.mxu0 0
    %5510 = vmatprep.subr.bf16.mxu0 0
    %5511 = vmatpush2.bf16.msra.mxu0 0
    %5512 = vmatprep.subr.bf16.mxu0 0
    %5513 = vmatpush2.bf16.msra.mxu0 0
    %5514 = vmatprep.subr.bf16.mxu0 0
    %5515 = vmatpush2.bf16.msra.mxu0 0
    %5516 = vmatprep.subr.bf16.mxu0 0
    %5517 = vmatpush2.bf16.msra.mxu0 0
    %5518 = vmatprep.subr.bf16.mxu0 0
    %5519 = vmatpush2.bf16.msra.mxu0 0
    %5520 = vmatprep.subr.bf16.mxu0 0
    %5521 = vmatpush2.bf16.msra.mxu0 0
    %5522 = vmatprep.subr.bf16.mxu0 0
    %5523 = vmatpush2.bf16.msra.mxu0 0
    %5524 = vmatprep.mubr.bf16.mxu0 0
    %5525 = vmatmul.mubr.bf16.gmra.mxu0 %v5203
    %v5526 = vpop.f32.mrf.mxu0
    %v5527 = vadd.f32 %v5486, %v5526
    %v5528 = vpop.f32.mrf.mxu0
    %v5529 = vadd.f32 %v5488, %v5528
    %v5530 = vpop.f32.mrf.mxu0
    %v5531 = vpop.f32.mrf.mxu0
    %5532 = vdwg.mxu0
    %5533 = vmatprep.subr.bf16.mxu0 %v4570
    %5534 = vmatpush1.bf16.msra.mxu0 %v4569
    %5535 = vmatprep.subr.bf16.mxu0 %v4563
    %5536 = vmatpush1.bf16.msra.mxu0 %v4562
    %5537 = vmatprep.subr.bf16.mxu0 %v4556
    %5538 = vmatpush1.bf16.msra.mxu0 %v4555
    %5539 = vmatprep.subr.bf16.mxu0 %v4549
    %5540 = vmatpush1.bf16.msra.mxu0 %v4548
    %5541 = vmatprep.subr.bf16.mxu0 %v4542
    %5542 = vmatpush1.bf16.msra.mxu0 %v4541
    %5543 = vmatprep.subr.bf16.mxu0 %v4535
    %5544 = vmatpush1.bf16.msra.mxu0 %v4534
    %5545 = vmatprep.subr.bf16.mxu0 %v4528
    %5546 = vmatpush1.bf16.msra.mxu0 %v4527
    %5547 = vmatprep.subr.bf16.mxu0 %v4521
    %5548 = vmatpush1.bf16.msra.mxu0 %v4520
    %5549 = vmatprep.subr.bf16.mxu0 %v4626
    %5550 = vmatpush2.bf16.msra.mxu0 %v4625
    %5551 = vmatprep.subr.bf16.mxu0 %v4619
    %5552 = vmatpush2.bf16.msra.mxu0 %v4618
    %5553 = vmatprep.subr.bf16.mxu0 %v4612
    %5554 = vmatpush2.bf16.msra.mxu0 %v4611
    %5555 = vmatprep.subr.bf16.mxu0 %v4605
    %5556 = vmatpush2.bf16.msra.mxu0 %v4604
    %5557 = vmatprep.subr.bf16.mxu0 %v4598
    %5558 = vmatpush2.bf16.msra.mxu0 %v4597
    %5559 = vmatprep.subr.bf16.mxu0 %v4591
    %5560 = vmatpush2.bf16.msra.mxu0 %v4590
    %5561 = vmatprep.subr.bf16.mxu0 %v4584
    %5562 = vmatpush2.bf16.msra.mxu0 %v4583
    %5563 = vmatprep.subr.bf16.mxu0 %v4577
    %5564 = vmatpush2.bf16.msra.mxu0 %v4576
    %5565 = vmatprep.mubr.bf16.mxu0 %v3003
    %5566 = vmatmul.mubr.bf16.gmra.mxu0 %v3002
    %v5567 = vpop.f32.mrf.mxu0
    %v5568 = vadd.f32 %v3422, %v5567
    %v5569 = vpop.f32.mrf.mxu0
    %v5570 = vadd.f32 %v3426, %v5569
    %v5571 = vpop.f32.mrf.mxu0
    %v5572 = vpop.f32.mrf.mxu0
    %5573 = vdwg.mxu0
    %5574 = vmatprep.subr.bf16.mxu0 %v4682
    %5575 = vmatpush1.bf16.msra.mxu0 %v4681
    %5576 = vmatprep.subr.bf16.mxu0 %v4675
    %5577 = vmatpush1.bf16.msra.mxu0 %v4674
    %5578 = vmatprep.subr.bf16.mxu0 %v4668
    %5579 = vmatpush1.bf16.msra.mxu0 %v4667
    %5580 = vmatprep.subr.bf16.mxu0 %v4661
    %5581 = vmatpush1.bf16.msra.mxu0 %v4660
    %5582 = vmatprep.subr.bf16.mxu0 %v4654
    %5583 = vmatpush1.bf16.msra.mxu0 %v4653
    %5584 = vmatprep.subr.bf16.mxu0 %v4647
    %5585 = vmatpush1.bf16.msra.mxu0 %v4646
    %5586 = vmatprep.subr.bf16.mxu0 %v4640
    %5587 = vmatpush1.bf16.msra.mxu0 %v4639
    %5588 = vmatprep.subr.bf16.mxu0 %v4633
    %5589 = vmatpush1.bf16.msra.mxu0 %v4632
    %5590 = vmatprep.subr.bf16.mxu0 %v4738
    %5591 = vmatpush2.bf16.msra.mxu0 %v4737
    %5592 = vmatprep.subr.bf16.mxu0 %v4731
    %5593 = vmatpush2.bf16.msra.mxu0 %v4730
    %5594 = vmatprep.subr.bf16.mxu0 %v4724
    %5595 = vmatpush2.bf16.msra.mxu0 %v4723
    %5596 = vmatprep.subr.bf16.mxu0 %v4717
    %5597 = vmatpush2.bf16.msra.mxu0 %v4716
    %5598 = vmatprep.subr.bf16.mxu0 %v4710
    %5599 = vmatpush2.bf16.msra.mxu0 %v4709
    %5600 = vmatprep.subr.bf16.mxu0 %v4703
    %5601 = vmatpush2.bf16.msra.mxu0 %v4702
    %5602 = vmatprep.subr.bf16.mxu0 %v4696
    %5603 = vmatpush2.bf16.msra.mxu0 %v4695
    %5604 = vmatprep.subr.bf16.mxu0 %v4689
    %5605 = vmatpush2.bf16.msra.mxu0 %v4688
    %5606 = vmatprep.mubr.bf16.mxu0 %v3005
    %5607 = vmatmul.mubr.bf16.gmra.mxu0 %v3004
    %v5608 = vpop.f32.mrf.mxu0
    %v5609 = vadd.f32 %v5568, %v5608
    %v5610 = vpop.f32.mrf.mxu0
    %v5611 = vadd.f32 %v5570, %v5610
    %v5612 = vpop.f32.mrf.mxu0
    %v5613 = vpop.f32.mrf.mxu0
    %5614 = vdwg.mxu0
    %5615 = vmatprep.subr.bf16.mxu0 %v4794
    %5616 = vmatpush1.bf16.msra.mxu0 %v4793
    %5617 = vmatprep.subr.bf16.mxu0 %v4787
    %5618 = vmatpush1.bf16.msra.mxu0 %v4786
    %5619 = vmatprep.subr.bf16.mxu0 %v4780
    %5620 = vmatpush1.bf16.msra.mxu0 %v4779
    %5621 = vmatprep.subr.bf16.mxu0 %v4773
    %5622 = vmatpush1.bf16.msra.mxu0 %v4772
    %5623 = vmatprep.subr.bf16.mxu0 %v4766
    %5624 = vmatpush1.bf16.msra.mxu0 %v4765
    %5625 = vmatprep.subr.bf16.mxu0 %v4759
    %5626 = vmatpush1.bf16.msra.mxu0 %v4758
    %5627 = vmatprep.subr.bf16.mxu0 %v4752
    %5628 = vmatpush1.bf16.msra.mxu0 %v4751
    %5629 = vmatprep.subr.bf16.mxu0 %v4745
    %5630 = vmatpush1.bf16.msra.mxu0 %v4744
    %5631 = vmatprep.subr.bf16.mxu0 %v4850
    %5632 = vmatpush2.bf16.msra.mxu0 %v4849
    %5633 = vmatprep.subr.bf16.mxu0 %v4843
    %5634 = vmatpush2.bf16.msra.mxu0 %v4842
    %5635 = vmatprep.subr.bf16.mxu0 %v4836
    %5636 = vmatpush2.bf16.msra.mxu0 %v4835
    %5637 = vmatprep.subr.bf16.mxu0 %v4829
    %5638 = vmatpush2.bf16.msra.mxu0 %v4828
    %5639 = vmatprep.subr.bf16.mxu0 %v4822
    %5640 = vmatpush2.bf16.msra.mxu0 %v4821
    %5641 = vmatprep.subr.bf16.mxu0 %v4815
    %5642 = vmatpush2.bf16.msra.mxu0 %v4814
    %5643 = vmatprep.subr.bf16.mxu0 %v4808
    %5644 = vmatpush2.bf16.msra.mxu0 %v4807
    %5645 = vmatprep.subr.bf16.mxu0 %v4801
    %5646 = vmatpush2.bf16.msra.mxu0 %v4800
    %5647 = vmatprep.mubr.bf16.mxu0 %v3007
    %5648 = vmatmul.mubr.bf16.gmra.mxu0 %v3006
    %v5649 = vpop.f32.mrf.mxu0
    %v5650 = vadd.f32 %v5609, %v5649
    %v5651 = vpop.f32.mrf.mxu0
    %v5652 = vadd.f32 %v5611, %v5651
    %v5653 = vpop.f32.mrf.mxu0
    %v5654 = vpop.f32.mrf.mxu0
    %5655 = vdwg.mxu0
    %5656 = vmatprep.subr.bf16.mxu0 0
    %5657 = vmatpush1.bf16.msra.mxu0 0
    %5658 = vmatprep.subr.bf16.mxu0 0
    %5659 = vmatpush1.bf16.msra.mxu0 0
    %5660 = vmatprep.subr.bf16.mxu0 0
    %5661 = vmatpush1.bf16.msra.mxu0 0
    %5662 = vmatprep.subr.bf16.mxu0 0
    %5663 = vmatpush1.bf16.msra.mxu0 0
    %5664 = vmatprep.subr.bf16.mxu0 0
    %5665 = vmatpush1.bf16.msra.mxu0 0
    %5666 = vmatprep.subr.bf16.mxu0 0
    %5667 = vmatpush1.bf16.msra.mxu0 0
    %5668 = vmatprep.subr.bf16.mxu0 0
    %5669 = vmatpush1.bf16.msra.mxu0 0
    %5670 = vmatprep.subr.bf16.mxu0 %v4857
    %5671 = vmatpush1.bf16.msra.mxu0 %v4856
    %5672 = vmatprep.subr.bf16.mxu0 0
    %5673 = vmatpush2.bf16.msra.mxu0 0
    %5674 = vmatprep.subr.bf16.mxu0 0
    %5675 = vmatpush2.bf16.msra.mxu0 0
    %5676 = vmatprep.subr.bf16.mxu0 0
    %5677 = vmatpush2.bf16.msra.mxu0 0
    %5678 = vmatprep.subr.bf16.mxu0 0
    %5679 = vmatpush2.bf16.msra.mxu0 0
    %5680 = vmatprep.subr.bf16.mxu0 0
    %5681 = vmatpush2.bf16.msra.mxu0 0
    %5682 = vmatprep.subr.bf16.mxu0 0
    %5683 = vmatpush2.bf16.msra.mxu0 0
    %5684 = vmatprep.subr.bf16.mxu0 0
    %5685 = vmatpush2.bf16.msra.mxu0 0
    %5686 = vmatprep.subr.bf16.mxu0 0
    %5687 = vmatpush2.bf16.msra.mxu0 0
    %5688 = vmatprep.mubr.bf16.mxu0 0
    %5689 = vmatmul.mubr.bf16.gmra.mxu0 %v5203
    %v5690 = vpop.f32.mrf.mxu0
    %v5691 = vadd.f32 %v5650, %v5690
    %v5692 = vpop.f32.mrf.mxu0
    %v5693 = vadd.f32 %v5652, %v5692
    %v5694 = vpop.f32.mrf.mxu0
    %v5695 = vpop.f32.mrf.mxu0
    %5696 = vdwg.mxu0
    %5697 = vmatprep.subr.bf16.mxu0 0
    %5698 = vmatpush1.bf16.msra.mxu0 %v4571
    %5699 = vmatprep.subr.bf16.mxu0 0
    %5700 = vmatpush1.bf16.msra.mxu0 %v4564
    %5701 = vmatprep.subr.bf16.mxu0 0
    %5702 = vmatpush1.bf16.msra.mxu0 %v4557
    %5703 = vmatprep.subr.bf16.mxu0 0
    %5704 = vmatpush1.bf16.msra.mxu0 %v4550
    %5705 = vmatprep.subr.bf16.mxu0 0
    %5706 = vmatpush1.bf16.msra.mxu0 %v4543
    %5707 = vmatprep.subr.bf16.mxu0 0
    %5708 = vmatpush1.bf16.msra.mxu0 %v4536
    %5709 = vmatprep.subr.bf16.mxu0 0
    %5710 = vmatpush1.bf16.msra.mxu0 %v4529
    %5711 = vmatprep.subr.bf16.mxu0 0
    %5712 = vmatpush1.bf16.msra.mxu0 %v4522
    %5713 = vmatprep.subr.bf16.mxu0 0
    %5714 = vmatpush2.bf16.msra.mxu0 %v4627
    %5715 = vmatprep.subr.bf16.mxu0 0
    %5716 = vmatpush2.bf16.msra.mxu0 %v4620
    %5717 = vmatprep.subr.bf16.mxu0 0
    %5718 = vmatpush2.bf16.msra.mxu0 %v4613
    %5719 = vmatprep.subr.bf16.mxu0 0
    %5720 = vmatpush2.bf16.msra.mxu0 %v4606
    %5721 = vmatprep.subr.bf16.mxu0 0
    %5722 = vmatpush2.bf16.msra.mxu0 %v4599
    %5723 = vmatprep.subr.bf16.mxu0 0
    %5724 = vmatpush2.bf16.msra.mxu0 %v4592
    %5725 = vmatprep.subr.bf16.mxu0 0
    %5726 = vmatpush2.bf16.msra.mxu0 %v4585
    %5727 = vmatprep.subr.bf16.mxu0 0
    %5728 = vmatpush2.bf16.msra.mxu0 %v4578
    %5729 = vmatprep.mubr.bf16.mxu0 %v3003
    %5730 = vmatmul.mubr.bf16.gmra.mxu0 %v3002
    %v5731 = vpop.f32.mrf.mxu0
    %v5732 = vadd.f32 %v3430, %v5731
    %v5733 = vpop.f32.mrf.mxu0
    %v5734 = vpop.f32.mrf.mxu0
    %v5735 = vpop.f32.mrf.mxu0
    %5736 = vdwg.mxu0
    %5737 = vmatprep.subr.bf16.mxu0 0
    %5738 = vmatpush1.bf16.msra.mxu0 %v4683
    %5739 = vmatprep.subr.bf16.mxu0 0
    %5740 = vmatpush1.bf16.msra.mxu0 %v4676
    %5741 = vmatprep.subr.bf16.mxu0 0
    %5742 = vmatpush1.bf16.msra.mxu0 %v4669
    %5743 = vmatprep.subr.bf16.mxu0 0
    %5744 = vmatpush1.bf16.msra.mxu0 %v4662
    %5745 = vmatprep.subr.bf16.mxu0 0
    %5746 = vmatpush1.bf16.msra.mxu0 %v4655
    %5747 = vmatprep.subr.bf16.mxu0 0
    %5748 = vmatpush1.bf16.msra.mxu0 %v4648
    %5749 = vmatprep.subr.bf16.mxu0 0
    %5750 = vmatpush1.bf16.msra.mxu0 %v4641
    %5751 = vmatprep.subr.bf16.mxu0 0
    %5752 = vmatpush1.bf16.msra.mxu0 %v4634
    %5753 = vmatprep.subr.bf16.mxu0 0
    %5754 = vmatpush2.bf16.msra.mxu0 %v4739
    %5755 = vmatprep.subr.bf16.mxu0 0
    %5756 = vmatpush2.bf16.msra.mxu0 %v4732
    %5757 = vmatprep.subr.bf16.mxu0 0
    %5758 = vmatpush2.bf16.msra.mxu0 %v4725
    %5759 = vmatprep.subr.bf16.mxu0 0
    %5760 = vmatpush2.bf16.msra.mxu0 %v4718
    %5761 = vmatprep.subr.bf16.mxu0 0
    %5762 = vmatpush2.bf16.msra.mxu0 %v4711
    %5763 = vmatprep.subr.bf16.mxu0 0
    %5764 = vmatpush2.bf16.msra.mxu0 %v4704
    %5765 = vmatprep.subr.bf16.mxu0 0
    %5766 = vmatpush2.bf16.msra.mxu0 %v4697
    %5767 = vmatprep.subr.bf16.mxu0 0
    %5768 = vmatpush2.bf16.msra.mxu0 %v4690
    %5769 = vmatprep.mubr.bf16.mxu0 %v3005
    %5770 = vmatmul.mubr.bf16.gmra.mxu0 %v3004
    %v5771 = vpop.f32.mrf.mxu0
    %v5772 = vadd.f32 %v5732, %v5771
    %v5773 = vpop.f32.mrf.mxu0
    %v5774 = vpop.f32.mrf.mxu0
    %v5775 = vpop.f32.mrf.mxu0
    %5776 = vdwg.mxu0
    %5777 = vmatprep.subr.bf16.mxu0 0
    %5778 = vmatpush1.bf16.msra.mxu0 %v4795
    %5779 = vmatprep.subr.bf16.mxu0 0
    %5780 = vmatpush1.bf16.msra.mxu0 %v4788
    %5781 = vmatprep.subr.bf16.mxu0 0
    %5782 = vmatpush1.bf16.msra.mxu0 %v4781
    %5783 = vmatprep.subr.bf16.mxu0 0
    %5784 = vmatpush1.bf16.msra.mxu0 %v4774
    %5785 = vmatprep.subr.bf16.mxu0 0
    %5786 = vmatpush1.bf16.msra.mxu0 %v4767
    %5787 = vmatprep.subr.bf16.mxu0 0
    %5788 = vmatpush1.bf16.msra.mxu0 %v4760
    %5789 = vmatprep.subr.bf16.mxu0 0
    %5790 = vmatpush1.bf16.msra.mxu0 %v4753
    %5791 = vmatprep.subr.bf16.mxu0 0
    %5792 = vmatpush1.bf16.msra.mxu0 %v4746
    %5793 = vmatprep.subr.bf16.mxu0 0
    %5794 = vmatpush2.bf16.msra.mxu0 %v4851
    %5795 = vmatprep.subr.bf16.mxu0 0
    %5796 = vmatpush2.bf16.msra.mxu0 %v4844
    %5797 = vmatprep.subr.bf16.mxu0 0
    %5798 = vmatpush2.bf16.msra.mxu0 %v4837
    %5799 = vmatprep.subr.bf16.mxu0 0
    %5800 = vmatpush2.bf16.msra.mxu0 %v4830
    %5801 = vmatprep.subr.bf16.mxu0 0
    %5802 = vmatpush2.bf16.msra.mxu0 %v4823
    %5803 = vmatprep.subr.bf16.mxu0 0
    %5804 = vmatpush2.bf16.msra.mxu0 %v4816
    %5805 = vmatprep.subr.bf16.mxu0 0
    %5806 = vmatpush2.bf16.msra.mxu0 %v4809
    %5807 = vmatprep.subr.bf16.mxu0 0
    %5808 = vmatpush2.bf16.msra.mxu0 %v4802
    %5809 = vmatprep.mubr.bf16.mxu0 %v3007
    %5810 = vmatmul.mubr.bf16.gmra.mxu0 %v3006
    %v5811 = vpop.f32.mrf.mxu0
    %v5812 = vadd.f32 %v5772, %v5811
    %v5813 = vpop.f32.mrf.mxu0
    %v5814 = vpop.f32.mrf.mxu0
    %v5815 = vpop.f32.mrf.mxu0
    %5816 = vdwg.mxu0
    %5817 = vmatprep.subr.bf16.mxu0 0
    %5818 = vmatpush1.bf16.msra.mxu0 0
    %5819 = vmatprep.subr.bf16.mxu0 0
    %5820 = vmatpush1.bf16.msra.mxu0 0
    %5821 = vmatprep.subr.bf16.mxu0 0
    %5822 = vmatpush1.bf16.msra.mxu0 0
    %5823 = vmatprep.subr.bf16.mxu0 0
    %5824 = vmatpush1.bf16.msra.mxu0 0
    %5825 = vmatprep.subr.bf16.mxu0 0
    %5826 = vmatpush1.bf16.msra.mxu0 0
    %5827 = vmatprep.subr.bf16.mxu0 0
    %5828 = vmatpush1.bf16.msra.mxu0 0
    %5829 = vmatprep.subr.bf16.mxu0 0
    %5830 = vmatpush1.bf16.msra.mxu0 0
    %5831 = vmatprep.subr.bf16.mxu0 0
    %5832 = vmatpush1.bf16.msra.mxu0 %v4858
    %5833 = vmatprep.subr.bf16.mxu0 0
    %5834 = vmatpush2.bf16.msra.mxu0 0
    %5835 = vmatprep.subr.bf16.mxu0 0
    %5836 = vmatpush2.bf16.msra.mxu0 0
    %5837 = vmatprep.subr.bf16.mxu0 0
    %5838 = vmatpush2.bf16.msra.mxu0 0
    %5839 = vmatprep.subr.bf16.mxu0 0
    %5840 = vmatpush2.bf16.msra.mxu0 0
    %5841 = vmatprep.subr.bf16.mxu0 0
    %5842 = vmatpush2.bf16.msra.mxu0 0
    %5843 = vmatprep.subr.bf16.mxu0 0
    %5844 = vmatpush2.bf16.msra.mxu0 0
    %5845 = vmatprep.subr.bf16.mxu0 0
    %5846 = vmatpush2.bf16.msra.mxu0 0
    %5847 = vmatprep.subr.bf16.mxu0 0
    %5848 = vmatpush2.bf16.msra.mxu0 0
    %5849 = vmatprep.mubr.bf16.mxu0 0
    %5850 = vmatmul.mubr.bf16.gmra.mxu0 %v5203
    %v5851 = vpop.f32.mrf.mxu0
    %v5852 = vadd.f32 %v5812, %v5851
    %v5853 = vpop.f32.mrf.mxu0
    %v5854 = vpop.f32.mrf.mxu0
    %v5855 = vpop.f32.mrf.mxu0
    %5856 = vdwg.mxu0
    %v5857 = vmax.f32 %v5363, 0.0
    %v5858 = vmax.f32 %v5365, 0.0
    %v5859 = vmax.f32 %v5527, 0.0
    %v5860 = vmax.f32 %v5529, 0.0
    %v5861 = vmax.f32 %v5691, 0.0
    %v5862 = vmax.f32 %v5693, 0.0
    %v5863 = vmax.f32 %v5852, 0.0
    %v5864 = vpack.c.bf16 %v5857, %v5857
    %v5865 = vpack.c.bf16 %v5858, %v5858
    %v5866 = vpack.c.bf16 %v5859, %v5859
    %v5867 = vpack.c.bf16 %v5860, %v5860
    %v5868 = vpack.c.bf16 %v5861, %v5861
    %v5869 = vpack.c.bf16 %v5862, %v5862
    %v5870 = vpack.c.bf16 %v5863, %v5863
    %v5871 = vld [vmem:[#allocation11] sm:$0xf]
    %v5872 = vld [vmem:[#allocation11 + $0x4] sm:$0xf]
    %v5873 = vld [vmem:[#allocation11 + $0x8] sm:$0xf]
    %v5874 = vld [vmem:[#allocation11 + $0xc] sm:$0xf]
    %v5875 = vld [vmem:[#allocation11 + $0x10] sm:$0xf]
    %v5876 = vld [vmem:[#allocation11 + $0x14] sm:$0xf]
    %v5877 = vld [vmem:[#allocation11 + $0x18] sm:$0xf]
    %v5878 = vld [vmem:[#allocation11 + $0x1c] sm:$0xf]
    %v5879 = vld [vmem:[#allocation11 + $0x20] sm:$0xf]
    %v5880 = vld [vmem:[#allocation11 + $0x24] sm:$0xf]
    %v5881 = vld [vmem:[#allocation11 + $0x28] sm:$0xf]
    %v5882 = vld [vmem:[#allocation11 + $0x2c] sm:$0xf]
    %v5883 = vld [vmem:[#allocation11 + $0x30] sm:$0xf]
    %v5884 = vld [vmem:[#allocation11 + $0x34] sm:$0xf]
    %v5885 = vld [vmem:[#allocation11 + $0x38] sm:$0xf]
    %v5886 = vld [vmem:[#allocation11 + $0x3c] sm:$0xf]
    %v5887 = vld [vmem:[#allocation11 + $0x40] sm:$0xf]
    %v5888 = vld [vmem:[#allocation11 + $0x44] sm:$0xf]
    %v5889 = vld [vmem:[#allocation11 + $0x48] sm:$0xf]
    %v5890 = vld [vmem:[#allocation11 + $0x4c] sm:$0xf]
    %v5891 = vld [vmem:[#allocation11 + $0x50] sm:$0xf]
    %v5892 = vld [vmem:[#allocation11 + $0x54] sm:$0xf]
    %v5893 = vld [vmem:[#allocation11 + $0x58] sm:$0xf]
    %v5894 = vld [vmem:[#allocation11 + $0x5c] sm:$0xf]
    %v5895 = vld [vmem:[#allocation11 + $0x60] sm:$0xf]
    %v5896 = vld [vmem:[#allocation11 + $0x64] sm:$0xf]
    %v5897 = vld [vmem:[#allocation11 + $0x68] sm:$0xf]
    %v5898 = vld [vmem:[#allocation11 + $0x6c] sm:$0xf]
    %v5899 = vld [vmem:[#allocation11 + $0x70] sm:$0xf]
    %v5900 = vld [vmem:[#allocation11 + $0x74] sm:$0xf]
    %v5901 = vld [vmem:[#allocation11 + $0x78] sm:$0xf]
    %v5902 = vld [vmem:[#allocation11 + $0x7c] sm:$0xf]
    %v5903 = vld [vmem:[#allocation11 + $0x80] sm:$0xf]
    %v5904 = vld [vmem:[#allocation11 + $0x84] sm:$0xf]
    %v5905 = vld [vmem:[#allocation11 + $0x88] sm:$0xf]
    %v5906 = vld [vmem:[#allocation11 + $0x8c] sm:$0xf]
    %v5907 = vld [vmem:[#allocation11 + $0x90] sm:$0xf]
    %v5908 = vld [vmem:[#allocation11 + $0x94] sm:$0xf]
    %v5909 = vld [vmem:[#allocation11 + $0x98] sm:$0xf]
    %v5910 = vld [vmem:[#allocation11 + $0x9c] sm:$0xf]
    %v5911 = vld [vmem:[#allocation11 + $0xa0] sm:$0xf]
    %v5912 = vld [vmem:[#allocation11 + $0xa4] sm:$0xf]
    %v5913 = vld [vmem:[#allocation11 + $0xa8] sm:$0xf]
    %v5914 = vld [vmem:[#allocation11 + $0xac] sm:$0xf]
    %v5915 = vld [vmem:[#allocation11 + $0xb0] sm:$0xf]
    %v5916 = vld [vmem:[#allocation11 + $0xb4] sm:$0xf]
    %v5917 = vld [vmem:[#allocation11 + $0xb8] sm:$0xf]
    %v5918 = vld [vmem:[#allocation11 + $0xbc] sm:$0xf]
    %v5919 = vld [vmem:[#allocation11 + $0xc0] sm:$0xf]
    %v5920 = vld [vmem:[#allocation11 + $0xc4] sm:$0xf]
    %v5921 = vld [vmem:[#allocation11 + $0xc8] sm:$0xf]
    %v5922 = vld [vmem:[#allocation11 + $0xcc] sm:$0xf]
    %v5923 = vld [vmem:[#allocation11 + $0xd0] sm:$0xf]
    %v5924 = vld [vmem:[#allocation11 + $0xd4] sm:$0xf]
    %v5925 = vld [vmem:[#allocation11 + $0xd8] sm:$0xf]
    %v5926 = vld [vmem:[#allocation11 + $0xdc] sm:$0xf]
    %v5927 = vld [vmem:[#allocation11 + $0xe0] sm:$0xf]
    %v5928 = vld [vmem:[#allocation11 + $0xe4] sm:$0xf]
    %v5929 = vld [vmem:[#allocation11 + $0xe8] sm:$0xf]
    %v5930 = vld [vmem:[#allocation11 + $0xec] sm:$0xf]
    %v5931 = vld [vmem:[#allocation11 + $0xf0] sm:$0xf]
    %v5932 = vld [vmem:[#allocation11 + $0xf4] sm:$0xf]
    %v5933 = vld [vmem:[#allocation11 + $0xf8] sm:$0xf]
    %v5934 = vld [vmem:[#allocation11 + $0xfc] sm:$0xf]
    %v5935 = vld [vmem:[#allocation11 + $0x100] sm:$0xf]
    %v5936 = vld [vmem:[#allocation11 + $0x104] sm:$0xf]
    %v5937 = vld [vmem:[#allocation11 + $0x108] sm:$0xf]
    %v5938 = vld [vmem:[#allocation11 + $0x10c] sm:$0xf]
    %v5939 = vld [vmem:[#allocation11 + $0x110] sm:$0xf]
    %v5940 = vld [vmem:[#allocation11 + $0x114] sm:$0xf]
    %v5941 = vld [vmem:[#allocation11 + $0x118] sm:$0xf]
    %v5942 = vld [vmem:[#allocation11 + $0x11c] sm:$0xf]
    %v5943 = vld [vmem:[#allocation11 + $0x120] sm:$0xf]
    %v5944 = vld [vmem:[#allocation11 + $0x124] sm:$0xf]
    %v5945 = vld [vmem:[#allocation11 + $0x128] sm:$0xf]
    %v5946 = vld [vmem:[#allocation11 + $0x12c] sm:$0xf]
    %v5947 = vld [vmem:[#allocation11 + $0x130] sm:$0xf]
    %v5948 = vld [vmem:[#allocation11 + $0x134] sm:$0xf]
    %v5949 = vld [vmem:[#allocation11 + $0x138] sm:$0xf]
    %v5950 = vld [vmem:[#allocation11 + $0x13c] sm:$0xf]
    %v5951 = vld [vmem:[#allocation11 + $0x140] sm:$0xf]
    %v5952 = vld [vmem:[#allocation11 + $0x144] sm:$0xf]
    %v5953 = vld [vmem:[#allocation11 + $0x148] sm:$0xf]
    %v5954 = vld [vmem:[#allocation11 + $0x14c] sm:$0xf]
    %v5955 = vld [vmem:[#allocation11 + $0x150] sm:$0xf]
    %v5956 = vld [vmem:[#allocation11 + $0x154] sm:$0xf]
    %v5957 = vld [vmem:[#allocation11 + $0x158] sm:$0xf]
    %v5958 = vld [vmem:[#allocation11 + $0x15c] sm:$0xf]
    %v5959 = vld [vmem:[#allocation11 + $0x160] sm:$0xf]
    %v5960 = vld [vmem:[#allocation11 + $0x164] sm:$0xf]
    %v5961 = vld [vmem:[#allocation11 + $0x168] sm:$0xf]
    %v5962 = vld [vmem:[#allocation11 + $0x16c] sm:$0xf]
    %v5963 = vld [vmem:[#allocation11 + $0x170] sm:$0xf]
    %v5964 = vld [vmem:[#allocation11 + $0x174] sm:$0xf]
    %v5965 = vld [vmem:[#allocation11 + $0x178] sm:$0xf]
    %v5966 = vld [vmem:[#allocation11 + $0x17c] sm:$0xf]
    %v5967 = vld [vmem:[#allocation11 + $0x180] sm:$0xf]
    %v5968 = vld [vmem:[#allocation11 + $0x184] sm:$0xf]
    %v5969 = vld [vmem:[#allocation13] sm:$0x1]
    %v5971 = vlaneseq
    %v5972 = vshrl.u32 %v5971, 7
    %v5973 = vsub.s32 0, %v5972
    %v5974 = vrot.slane %v5969, %v5973
    %v6074 = vunpack.c.l.b16 %v5871
    %v6075 = vunpack.c.l.b16 %v5872
    %v6076 = vunpack.c.l.b16 %v5873
    %v6077 = vunpack.c.l.b16 %v5874
    %v6078 = vunpack.c.l.b16 %v5875
    %v6079 = vunpack.c.l.b16 %v5876
    %v6080 = vunpack.c.l.b16 %v5877
    %v6081 = vunpack.c.l.b16 %v5878
    %v6082 = vunpack.c.l.b16 %v5879
    %v6083 = vunpack.c.l.b16 %v5880
    %v6084 = vunpack.c.l.b16 %v5881
    %v6085 = vunpack.c.l.b16 %v5882
    %v6086 = vunpack.c.l.b16 %v5883
    %v6087 = vunpack.c.l.b16 %v5884
    %v6088 = vunpack.c.l.b16 %v5885
    %v6089 = vunpack.c.l.b16 %v5886
    %v6090 = vunpack.c.l.b16 %v5887
    %v6091 = vunpack.c.l.b16 %v5888
    %v6092 = vunpack.c.l.b16 %v5889
    %v6093 = vunpack.c.l.b16 %v5890
    %v6094 = vunpack.c.l.b16 %v5891
    %v6095 = vunpack.c.l.b16 %v5892
    %v6096 = vunpack.c.l.b16 %v5893
    %v6097 = vunpack.c.l.b16 %v5894
    %v6098 = vunpack.c.l.b16 %v5895
    %v6099 = vunpack.c.l.b16 %v5896
    %v6100 = vunpack.c.l.b16 %v5897
    %v6101 = vunpack.c.l.b16 %v5898
    %v6102 = vunpack.c.l.b16 %v5899
    %v6103 = vunpack.c.l.b16 %v5900
    %v6104 = vunpack.c.l.b16 %v5901
    %v6105 = vunpack.c.l.b16 %v5902
    %v6106 = vunpack.c.l.b16 %v5903
    %v6107 = vunpack.c.l.b16 %v5904
    %v6108 = vunpack.c.l.b16 %v5905
    %v6109 = vunpack.c.l.b16 %v5906
    %v6110 = vunpack.c.l.b16 %v5907
    %v6111 = vunpack.c.l.b16 %v5908
    %v6112 = vunpack.c.l.b16 %v5909
    %v6113 = vunpack.c.l.b16 %v5910
    %v6114 = vunpack.c.l.b16 %v5911
    %v6115 = vunpack.c.l.b16 %v5912
    %v6116 = vunpack.c.l.b16 %v5913
    %v6117 = vunpack.c.l.b16 %v5914
    %v6118 = vunpack.c.l.b16 %v5915
    %v6119 = vunpack.c.l.b16 %v5916
    %v6120 = vunpack.c.l.b16 %v5917
    %v6121 = vunpack.c.l.b16 %v5918
    %v6122 = vunpack.c.l.b16 %v5919
    %v6123 = vunpack.c.l.b16 %v5920
    %v6124 = vunpack.c.l.b16 %v5921
    %v6125 = vunpack.c.l.b16 %v5922
    %v6126 = vunpack.c.l.b16 %v5923
    %v6127 = vunpack.c.l.b16 %v5924
    %v6128 = vunpack.c.l.b16 %v5925
    %v6129 = vunpack.c.l.b16 %v5926
    %v6130 = vunpack.c.l.b16 %v5927
    %v6131 = vunpack.c.l.b16 %v5928
    %v6132 = vunpack.c.l.b16 %v5929
    %v6133 = vunpack.c.l.b16 %v5930
    %v6134 = vunpack.c.l.b16 %v5931
    %v6135 = vunpack.c.l.b16 %v5932
    %v6136 = vunpack.c.l.b16 %v5933
    %v6137 = vunpack.c.l.b16 %v5934
    %v6138 = vunpack.c.l.b16 %v5935
    %v6139 = vunpack.c.l.b16 %v5936
    %v6140 = vunpack.c.l.b16 %v5937
    %v6141 = vunpack.c.l.b16 %v5938
    %v6142 = vunpack.c.l.b16 %v5939
    %v6143 = vunpack.c.l.b16 %v5940
    %v6144 = vunpack.c.l.b16 %v5941
    %v6145 = vunpack.c.l.b16 %v5942
    %v6146 = vunpack.c.l.b16 %v5943
    %v6147 = vunpack.c.l.b16 %v5944
    %v6148 = vunpack.c.l.b16 %v5945
    %v6149 = vunpack.c.l.b16 %v5946
    %v6150 = vunpack.c.l.b16 %v5947
    %v6151 = vunpack.c.l.b16 %v5948
    %v6152 = vunpack.c.l.b16 %v5949
    %v6153 = vunpack.c.l.b16 %v5950
    %v6154 = vunpack.c.l.b16 %v5951
    %v6155 = vunpack.c.l.b16 %v5952
    %v6156 = vunpack.c.l.b16 %v5953
    %v6157 = vunpack.c.l.b16 %v5954
    %v6158 = vunpack.c.l.b16 %v5955
    %v6159 = vunpack.c.l.b16 %v5956
    %v6160 = vunpack.c.l.b16 %v5957
    %v6161 = vunpack.c.l.b16 %v5958
    %v6162 = vunpack.c.l.b16 %v5959
    %v6163 = vunpack.c.l.b16 %v5960
    %v6164 = vunpack.c.l.b16 %v5961
    %v6165 = vunpack.c.l.b16 %v5962
    %v6166 = vunpack.c.l.b16 %v5963
    %v6167 = vunpack.c.l.b16 %v5964
    %v6168 = vunpack.c.l.b16 %v5965
    %v6169 = vunpack.c.l.b16 %v5966
    %v6170 = vunpack.c.l.b16 %v5967
    %v6171 = vunpack.c.l.b16 %v5968
    %v6172 = vpack.c.b16 %v6075, %v6074
    %v6173 = vpack.c.b16 %v6077, %v6076
    %v6174 = vpack.c.b16 %v6079, %v6078
    %v6175 = vpack.c.b16 %v6081, %v6080
    %v6176 = vpack.c.b16 %v6083, %v6082
    %v6177 = vpack.c.b16 %v6085, %v6084
    %v6178 = vpack.c.b16 %v6087, %v6086
    %v6179 = vpack.c.b16 %v6089, %v6088
    %v6180 = vpack.c.b16 %v6091, %v6090
    %v6181 = vpack.c.b16 %v6093, %v6092
    %v6182 = vpack.c.b16 %v6095, %v6094
    %v6183 = vpack.c.b16 %v6097, %v6096
    %v6184 = vpack.c.b16 %v6099, %v6098
    %v6185 = vpack.c.b16 %v6101, %v6100
    %v6186 = vpack.c.b16 %v6103, %v6102
    %v6187 = vpack.c.b16 %v6105, %v6104
    %v6188 = vpack.c.b16 %v6107, %v6106
    %v6189 = vpack.c.b16 %v6109, %v6108
    %v6190 = vpack.c.b16 %v6111, %v6110
    %v6191 = vpack.c.b16 %v6113, %v6112
    %v6192 = vpack.c.b16 %v6115, %v6114
    %v6193 = vpack.c.b16 %v6117, %v6116
    %v6194 = vpack.c.b16 %v6119, %v6118
    %v6195 = vpack.c.b16 %v6121, %v6120
    %v6196 = vpack.c.b16 %v6123, %v6122
    %v6197 = vpack.c.b16 %v6125, %v6124
    %v6198 = vpack.c.b16 %v6127, %v6126
    %v6199 = vpack.c.b16 %v6129, %v6128
    %v6200 = vpack.c.b16 %v6131, %v6130
    %v6201 = vpack.c.b16 %v6133, %v6132
    %v6202 = vpack.c.b16 %v6135, %v6134
    %v6203 = vpack.c.b16 %v6137, %v6136
    %v6204 = vpack.c.b16 %v6139, %v6138
    %v6205 = vpack.c.b16 %v6141, %v6140
    %v6206 = vpack.c.b16 %v6143, %v6142
    %v6207 = vpack.c.b16 %v6145, %v6144
    %v6208 = vpack.c.b16 %v6147, %v6146
    %v6209 = vpack.c.b16 %v6149, %v6148
    %v6210 = vpack.c.b16 %v6151, %v6150
    %v6211 = vpack.c.b16 %v6153, %v6152
    %v6212 = vpack.c.b16 %v6155, %v6154
    %v6213 = vpack.c.b16 %v6157, %v6156
    %v6214 = vpack.c.b16 %v6159, %v6158
    %v6215 = vpack.c.b16 %v6161, %v6160
    %v6216 = vpack.c.b16 %v6163, %v6162
    %v6217 = vpack.c.b16 %v6165, %v6164
    %v6218 = vpack.c.b16 %v6167, %v6166
    %v6219 = vpack.c.b16 %v6169, %v6168
    %v6220 = vpack.c.b16 %v6171, %v6170
    %v6271 = vsel %vm2339, %v5870, 0
    %6273 = vmatprep.subr.bf16.mxu0 0
    %6274 = vmatpush1.bf16.msra.mxu0 %v6179
    %6275 = vmatprep.subr.bf16.mxu0 0
    %6276 = vmatpush1.bf16.msra.mxu0 %v6178
    %6277 = vmatprep.subr.bf16.mxu0 0
    %6278 = vmatpush1.bf16.msra.mxu0 %v6177
    %6279 = vmatprep.subr.bf16.mxu0 0
    %6280 = vmatpush1.bf16.msra.mxu0 %v6176
    %6281 = vmatprep.subr.bf16.mxu0 0
    %6282 = vmatpush1.bf16.msra.mxu0 %v6175
    %6283 = vmatprep.subr.bf16.mxu0 0
    %6284 = vmatpush1.bf16.msra.mxu0 %v6174
    %6285 = vmatprep.subr.bf16.mxu0 0
    %6286 = vmatpush1.bf16.msra.mxu0 %v6173
    %6287 = vmatprep.subr.bf16.mxu0 0
    %6288 = vmatpush1.bf16.msra.mxu0 %v6172
    %6289 = vmatprep.subr.bf16.mxu0 0
    %6290 = vmatpush2.bf16.msra.mxu0 %v6187
    %6291 = vmatprep.subr.bf16.mxu0 0
    %6292 = vmatpush2.bf16.msra.mxu0 %v6186
    %6293 = vmatprep.subr.bf16.mxu0 0
    %6294 = vmatpush2.bf16.msra.mxu0 %v6185
    %6295 = vmatprep.subr.bf16.mxu0 0
    %6296 = vmatpush2.bf16.msra.mxu0 %v6184
    %6297 = vmatprep.subr.bf16.mxu0 0
    %6298 = vmatpush2.bf16.msra.mxu0 %v6183
    %6299 = vmatprep.subr.bf16.mxu0 0
    %6300 = vmatpush2.bf16.msra.mxu0 %v6182
    %6301 = vmatprep.subr.bf16.mxu0 0
    %6302 = vmatpush2.bf16.msra.mxu0 %v6181
    %6303 = vmatprep.subr.bf16.mxu0 0
    %6304 = vmatpush2.bf16.msra.mxu0 %v6180
    %6305 = vmatprep.mubr.bf16.mxu0 %v5865
    %6306 = vmatmul.mubr.bf16.gmra.mxu0 %v5864
    %v6307 = vpop.f32.mrf.mxu0
    %v6308 = vadd.f32 %v5974, %v6307
    %v6309 = vpop.f32.mrf.mxu0
    %v6310 = vpop.f32.mrf.mxu0
    %v6311 = vpop.f32.mrf.mxu0
    %6312 = vdwg.mxu0
    %6313 = vmatprep.subr.bf16.mxu0 0
    %6314 = vmatpush1.bf16.msra.mxu0 %v6195
    %6315 = vmatprep.subr.bf16.mxu0 0
    %6316 = vmatpush1.bf16.msra.mxu0 %v6194
    %6317 = vmatprep.subr.bf16.mxu0 0
    %6318 = vmatpush1.bf16.msra.mxu0 %v6193
    %6319 = vmatprep.subr.bf16.mxu0 0
    %6320 = vmatpush1.bf16.msra.mxu0 %v6192
    %6321 = vmatprep.subr.bf16.mxu0 0
    %6322 = vmatpush1.bf16.msra.mxu0 %v6191
    %6323 = vmatprep.subr.bf16.mxu0 0
    %6324 = vmatpush1.bf16.msra.mxu0 %v6190
    %6325 = vmatprep.subr.bf16.mxu0 0
    %6326 = vmatpush1.bf16.msra.mxu0 %v6189
    %6327 = vmatprep.subr.bf16.mxu0 0
    %6328 = vmatpush1.bf16.msra.mxu0 %v6188
    %6329 = vmatprep.subr.bf16.mxu0 0
    %6330 = vmatpush2.bf16.msra.mxu0 %v6203
    %6331 = vmatprep.subr.bf16.mxu0 0
    %6332 = vmatpush2.bf16.msra.mxu0 %v6202
    %6333 = vmatprep.subr.bf16.mxu0 0
    %6334 = vmatpush2.bf16.msra.mxu0 %v6201
    %6335 = vmatprep.subr.bf16.mxu0 0
    %6336 = vmatpush2.bf16.msra.mxu0 %v6200
    %6337 = vmatprep.subr.bf16.mxu0 0
    %6338 = vmatpush2.bf16.msra.mxu0 %v6199
    %6339 = vmatprep.subr.bf16.mxu0 0
    %6340 = vmatpush2.bf16.msra.mxu0 %v6198
    %6341 = vmatprep.subr.bf16.mxu0 0
    %6342 = vmatpush2.bf16.msra.mxu0 %v6197
    %6343 = vmatprep.subr.bf16.mxu0 0
    %6344 = vmatpush2.bf16.msra.mxu0 %v6196
    %6345 = vmatprep.mubr.bf16.mxu0 %v5867
    %6346 = vmatmul.mubr.bf16.gmra.mxu0 %v5866
    %v6347 = vpop.f32.mrf.mxu0
    %v6348 = vadd.f32 %v6308, %v6347
    %v6349 = vpop.f32.mrf.mxu0
    %v6350 = vpop.f32.mrf.mxu0
    %v6351 = vpop.f32.mrf.mxu0
    %6352 = vdwg.mxu0
    %6353 = vmatprep.subr.bf16.mxu0 0
    %6354 = vmatpush1.bf16.msra.mxu0 %v6211
    %6355 = vmatprep.subr.bf16.mxu0 0
    %6356 = vmatpush1.bf16.msra.mxu0 %v6210
    %6357 = vmatprep.subr.bf16.mxu0 0
    %6358 = vmatpush1.bf16.msra.mxu0 %v6209
    %6359 = vmatprep.subr.bf16.mxu0 0
    %6360 = vmatpush1.bf16.msra.mxu0 %v6208
    %6361 = vmatprep.subr.bf16.mxu0 0
    %6362 = vmatpush1.bf16.msra.mxu0 %v6207
    %6363 = vmatprep.subr.bf16.mxu0 0
    %6364 = vmatpush1.bf16.msra.mxu0 %v6206
    %6365 = vmatprep.subr.bf16.mxu0 0
    %6366 = vmatpush1.bf16.msra.mxu0 %v6205
    %6367 = vmatprep.subr.bf16.mxu0 0
    %6368 = vmatpush1.bf16.msra.mxu0 %v6204
    %6369 = vmatprep.subr.bf16.mxu0 0
    %6370 = vmatpush2.bf16.msra.mxu0 %v6219
    %6371 = vmatprep.subr.bf16.mxu0 0
    %6372 = vmatpush2.bf16.msra.mxu0 %v6218
    %6373 = vmatprep.subr.bf16.mxu0 0
    %6374 = vmatpush2.bf16.msra.mxu0 %v6217
    %6375 = vmatprep.subr.bf16.mxu0 0
    %6376 = vmatpush2.bf16.msra.mxu0 %v6216
    %6377 = vmatprep.subr.bf16.mxu0 0
    %6378 = vmatpush2.bf16.msra.mxu0 %v6215
    %6379 = vmatprep.subr.bf16.mxu0 0
    %6380 = vmatpush2.bf16.msra.mxu0 %v6214
    %6381 = vmatprep.subr.bf16.mxu0 0
    %6382 = vmatpush2.bf16.msra.mxu0 %v6213
    %6383 = vmatprep.subr.bf16.mxu0 0
    %6384 = vmatpush2.bf16.msra.mxu0 %v6212
    %6385 = vmatprep.mubr.bf16.mxu0 %v5869
    %6386 = vmatmul.mubr.bf16.gmra.mxu0 %v5868
    %v6387 = vpop.f32.mrf.mxu0
    %v6388 = vadd.f32 %v6348, %v6387
    %v6389 = vpop.f32.mrf.mxu0
    %v6390 = vpop.f32.mrf.mxu0
    %v6391 = vpop.f32.mrf.mxu0
    %6392 = vdwg.mxu0
    %6393 = vmatprep.subr.bf16.mxu0 0
    %6394 = vmatpush1.bf16.msra.mxu0 0
    %6395 = vmatprep.subr.bf16.mxu0 0
    %6396 = vmatpush1.bf16.msra.mxu0 0
    %6397 = vmatprep.subr.bf16.mxu0 0
    %6398 = vmatpush1.bf16.msra.mxu0 0
    %6399 = vmatprep.subr.bf16.mxu0 0
    %6400 = vmatpush1.bf16.msra.mxu0 0
    %6401 = vmatprep.subr.bf16.mxu0 0
    %6402 = vmatpush1.bf16.msra.mxu0 0
    %6403 = vmatprep.subr.bf16.mxu0 0
    %6404 = vmatpush1.bf16.msra.mxu0 0
    %6405 = vmatprep.subr.bf16.mxu0 0
    %6406 = vmatpush1.bf16.msra.mxu0 0
    %6407 = vmatprep.subr.bf16.mxu0 0
    %6408 = vmatpush1.bf16.msra.mxu0 %v6220
    %6409 = vmatprep.subr.bf16.mxu0 0
    %6410 = vmatpush2.bf16.msra.mxu0 0
    %6411 = vmatprep.subr.bf16.mxu0 0
    %6412 = vmatpush2.bf16.msra.mxu0 0
    %6413 = vmatprep.subr.bf16.mxu0 0
    %6414 = vmatpush2.bf16.msra.mxu0 0
    %6415 = vmatprep.subr.bf16.mxu0 0
    %6416 = vmatpush2.bf16.msra.mxu0 0
    %6417 = vmatprep.subr.bf16.mxu0 0
    %6418 = vmatpush2.bf16.msra.mxu0 0
    %6419 = vmatprep.subr.bf16.mxu0 0
    %6420 = vmatpush2.bf16.msra.mxu0 0
    %6421 = vmatprep.subr.bf16.mxu0 0
    %6422 = vmatpush2.bf16.msra.mxu0 0
    %6423 = vmatprep.subr.bf16.mxu0 0
    %6424 = vmatpush2.bf16.msra.mxu0 0
    %6425 = vmatprep.mubr.bf16.mxu0 0
    %6426 = vmatmul.mubr.bf16.gmra.mxu0 %v6271
    %v6427 = vpop.f32.mrf.mxu0
    %v6428 = vadd.f32 %v6388, %v6427
    %v6429 = vpop.f32.mrf.mxu0
    %v6430 = vpop.f32.mrf.mxu0
    %v6431 = vpop.f32.mrf.mxu0
    %6432 = vdwg.mxu0
    %v6433 = vmul.f32 %v6428, %v6428
    %6434 = vadd.xlane.f32.xlu0 %v6433
    %v6435 = vpop.xlane.xlu0 %6434
    %v6436 = vmax.f32 %v6435, 1e-24
    %v6437 = vrsqrt.pop %v6436
    %v6438 = vmul.f32 %v6437, 25.0
    %v6439 = vmul.f32 %v6428, %v6438
    %v6440 = vpack.c.bf16 %v6439, %v6439
    %v6441 = vld [vmem:[#allocation14] sm:$0xf]
    %v6442 = vld [vmem:[#allocation14 + $0x4] sm:$0xf]
    %v6443 = vld [vmem:[#allocation14 + $0x8] sm:$0xf]
    %v6444 = vld [vmem:[#allocation14 + $0xc] sm:$0xf]
    %v6445 = vld [vmem:[#allocation14 + $0x10] sm:$0xf]
    %v6446 = vld [vmem:[#allocation14 + $0x14] sm:$0xf]
    %v6447 = vld [vmem:[#allocation14 + $0x18] sm:$0xf]
    %v6448 = vld [vmem:[#allocation14 + $0x1c] sm:$0xf]
    %v6449 = vld [vmem:[#allocation14 + $0x20] sm:$0xf]
    %v6450 = vld [vmem:[#allocation14 + $0x24] sm:$0xf]
    %v6451 = vld [vmem:[#allocation14 + $0x28] sm:$0xf]
    %v6452 = vld [vmem:[#allocation14 + $0x2c] sm:$0xf]
    %v6453 = vld [vmem:[#allocation14 + $0x30] sm:$0xf]
    %v6454 = vld [vmem:[#allocation14 + $0x34] sm:$0xf]
    %v6455 = vld [vmem:[#allocation14 + $0x38] sm:$0xf]
    %v6456 = vld [vmem:[#allocation14 + $0x3c] sm:$0xf]
    %v6473 = vunpack.c.l.b16 %v6441
    %v6474 = vunpack.c.l.b16 %v6442
    %v6475 = vunpack.c.l.b16 %v6443
    %v6476 = vunpack.c.l.b16 %v6444
    %v6477 = vunpack.c.l.b16 %v6445
    %v6478 = vunpack.c.l.b16 %v6446
    %v6479 = vunpack.c.l.b16 %v6447
    %v6480 = vunpack.c.l.b16 %v6448
    %v6481 = vunpack.c.l.b16 %v6449
    %v6482 = vunpack.c.l.b16 %v6450
    %v6483 = vunpack.c.l.b16 %v6451
    %v6484 = vunpack.c.l.b16 %v6452
    %v6485 = vunpack.c.l.b16 %v6453
    %v6486 = vunpack.c.l.b16 %v6454
    %v6487 = vunpack.c.l.b16 %v6455
    %v6488 = vunpack.c.l.b16 %v6456
    %v6489 = vpack.c.b16 %v6474, %v6473
    %v6490 = vpack.c.b16 %v6476, %v6475
    %v6491 = vpack.c.b16 %v6478, %v6477
    %v6492 = vpack.c.b16 %v6480, %v6479
    %v6493 = vpack.c.b16 %v6482, %v6481
    %v6494 = vpack.c.b16 %v6484, %v6483
    %v6495 = vpack.c.b16 %v6486, %v6485
    %v6496 = vpack.c.b16 %v6488, %v6487
    %6505 = vmatprep.subr.bf16.mxu0 0
    %6506 = vmatpush1.bf16.msra.mxu0 %v6496
    %6507 = vmatprep.subr.bf16.mxu0 0
    %6508 = vmatpush1.bf16.msra.mxu0 %v6495
    %6509 = vmatprep.subr.bf16.mxu0 0
    %6510 = vmatpush1.bf16.msra.mxu0 %v6494
    %6511 = vmatprep.subr.bf16.mxu0 0
    %6512 = vmatpush1.bf16.msra.mxu0 %v6493
    %6513 = vmatprep.subr.bf16.mxu0 0
    %6514 = vmatpush1.bf16.msra.mxu0 %v6492
    %6515 = vmatprep.subr.bf16.mxu0 0
    %6516 = vmatpush1.bf16.msra.mxu0 %v6491
    %6517 = vmatprep.subr.bf16.mxu0 0
    %6518 = vmatpush1.bf16.msra.mxu0 %v6490
    %6519 = vmatprep.subr.bf16.mxu0 0
    %6520 = vmatpush1.bf16.msra.mxu0 %v6489
    %6521 = vmatprep.subr.bf16.mxu0 0
    %6522 = vmatpush2.bf16.msra.mxu0 0
    %6523 = vmatprep.subr.bf16.mxu0 0
    %6524 = vmatpush2.bf16.msra.mxu0 0
    %6525 = vmatprep.subr.bf16.mxu0 0
    %6526 = vmatpush2.bf16.msra.mxu0 0
    %6527 = vmatprep.subr.bf16.mxu0 0
    %6528 = vmatpush2.bf16.msra.mxu0 0
    %6529 = vmatprep.subr.bf16.mxu0 0
    %6530 = vmatpush2.bf16.msra.mxu0 0
    %6531 = vmatprep.subr.bf16.mxu0 0
    %6532 = vmatpush2.bf16.msra.mxu0 0
    %6533 = vmatprep.subr.bf16.mxu0 0
    %6534 = vmatpush2.bf16.msra.mxu0 0
    %6535 = vmatprep.subr.bf16.mxu0 0
    %6536 = vmatpush2.bf16.msra.mxu0 0
    %6537 = vmatprep.mubr.bf16.mxu0 0
    %6538 = vmatmul.mubr.bf16.gmra.mxu0 %v6440
    %v6539 = vpop.f32.mrf.mxu0
    %v6540 = vadd.f32 0.0, %v6539
    %v6541 = vpop.f32.mrf.mxu0
    %v6542 = vpop.f32.mrf.mxu0
    %v6543 = vpop.f32.mrf.mxu0
    %6544 = vdwg.mxu0
    %6545 = vst [vmem:[#allocation16] sm:$0xff] %v6540
    // Predicated region
    $region66: #{tpu_custom_call.1} parent=1 // pred_check
      _
    $region67: #{tpu_custom_call.1} parent=1 // pred_check_branch
      %6547 = sbr.rel (0) target = $region69
    $region68: #{tpu_custom_call.1} parent=1 // pred_region
      %s6549 = ssub.s32 128, 128
      %6550 = vsyncadd [#allocation4], %s6549
      %s6552 = sshll.u32 [#allocation16], 4
      %s6553 = int_to_ptr.vmem [resolvable:$true] %s6552
      %6555 = dma.vmem_to_hbm [thread:$0]  %s6553, 128, %s8, [#allocation4]
    $region69: #{tpu_custom_call.1} parent=1 // pred_fallthru
      _
    // Predicated region
    $region70: #{tpu_custom_call.1} parent=1 // pred_check
      _
    $region71: #{tpu_custom_call.1} parent=1 // pred_check_branch
      %6557 = sbr.rel (0) target = $region73
    $region72: #{tpu_custom_call.1} parent=1 // pred_region
      %6558 = dma.done [#allocation4], 128
    $region73: #{tpu_custom_call.1} parent=1 // pred_fallthru
      _
    %6559 = vsyncpa [#allocation3], 1
    %6560 = vsyncpa [#allocation6], 1
    %6561 = vsyncpa [#allocation9], 1
    %6562 = vsyncpa [#allocation12], 1
    %6563 = vsyncpa [#allocation15], 1
    %6564 = vsyncpa [#allocation4], 1

</llo_original>
